<compile_context>
chip_gen: v7x
topology: tpu7x:2x2x1
jax: 0.10.0
libtpu: 0.0.40
codegen_flags: <defaults>
</compile_context>

<pallas_src>
import functools

import jax
import jax.numpy as jnp
from jax import lax
from jax.experimental import pallas as pl
from jax.experimental.pallas import tpu as pltpu

_NEG_BIG = -1e20  # matches torch masked_fill value


def _layernorm(x, gamma, beta, eps=1e-5):
    # PyTorch nn.LayerNorm over the last dim (biased variance, eps=1e-5), f32 math.
    mu = jnp.mean(x, axis=-1, keepdims=True)
    var = jnp.mean((x - mu) ** 2, axis=-1, keepdims=True)
    return (x - mu) * lax.rsqrt(var + eps) * gamma + beta


def _transformer_block_kernel(*refs, head_count, head_dim, q_tile, kv_tile, causal):
    f32 = jnp.float32
    bf16 = jnp.bfloat16
    H, D = head_count, head_dim

    if causal:
        (q_ref, kh_ref, vh_ref,
         wq_ref, wo_ref, bo_ref, g1_ref, be1_ref, g2_ref, be2_ref,
         w1_ref, b1_ref, w2_ref, b2_ref,
         out_ref,
         qh_scr, m_scr, l_scr, acc_scr) = refs
        bias_ref = None
    else:
        (q_ref, kh_ref, vh_ref, bias_ref,
         wq_ref, wo_ref, bo_ref, g1_ref, be1_ref, g2_ref, be2_ref,
         w1_ref, b1_ref, w2_ref, b2_ref,
         out_ref,
         qh_scr, m_scr, l_scr, acc_scr) = refs

    qi = pl.program_id(1)
    ki = pl.program_id(2)
    n_kv = pl.num_programs(2)

    # ---- per-(batch, q-tile) init: softmax state + the (scaled) Q projection -------
    @pl.when(ki == 0)
    def _init():
        m_scr[...] = jnp.full_like(m_scr, -jnp.inf)
        l_scr[...] = jnp.zeros_like(l_scr)
        acc_scr[...] = jnp.zeros_like(acc_scr)
        # Shared-per-head Q projection as one lane-dense matmul against the
        # block-diagonal (E, E) bf16 weight; 1/sqrt(E) is folded into the weight.
        qh_scr[...] = jnp.dot(q_ref[0].astype(bf16), wq_ref[...],
                              preferred_element_type=f32).astype(bf16)

    # ---- one flash step over this (TQ, TK) block ------------------------------------
    def _attention_update():
        kh = kh_ref[0]          # (TK, E) bf16, projected in the wrapper
        vh = vh_ref[0]          # (TK, E) bf16, projected in the wrapper
        qh = qh_scr[...]        # (TQ, E) bf16, projected + scaled

        if causal:
            row = qi * q_tile + lax.broadcasted_iota(jnp.int32, (q_tile, kv_tile), 0)
            col = ki * kv_tile + lax.broadcasted_iota(jnp.int32, (q_tile, kv_tile), 1)
            bias = jnp.where(col > row, f32(_NEG_BIG), f32(0.0))
        else:
            bias = bias_ref[0].astype(f32)   # (TQ, TK) additive mask bias

        # Static unroll over heads; per-head temporaries are bounded to (TQ, TK).
        # (For very large H, a head grid axis with lane-dense (TQ, D) blocks would
        #  bound live ranges even further.)
        for h in range(H):
            lo = h * D
            qh_h = qh[:, lo:lo + D]
            kh_h = kh[:, lo:lo + D]
            vh_h = vh[:, lo:lo + D]

            # (TQ, TK): contract on the last dim of both operands (A @ B^T form).
            s = lax.dot_general(qh_h, kh_h,
                                dimension_numbers=(((1,), (1,)), ((), ())),
                                preferred_element_type=f32)
            s = s + bias

            m_prev = m_scr[h]                                   # (TQ, 1)
            m_new = jnp.maximum(m_prev, jnp.max(s, axis=-1, keepdims=True))
            alpha = jnp.exp(m_prev - m_new)                     # (TQ, 1)
            p = jnp.exp(s - m_new)                              # (TQ, TK) f32

            l_scr[h] = alpha * l_scr[h] + jnp.sum(p, axis=-1, keepdims=True)
            acc_scr[:, lo:lo + D] = alpha * acc_scr[:, lo:lo + D] + jnp.dot(
                p.astype(bf16), vh_h, preferred_element_type=f32)
            m_scr[h] = m_new

    if causal:
        # Skip key blocks that lie entirely above the diagonal.
        pl.when(ki * kv_tile <= qi * q_tile + (q_tile - 1))(_attention_update)
    else:
        _attention_update()

    # ---- epilogue on the last kv step: normalize, Wo, Add&Norm, FFN, Add&Norm -------
    @pl.when(ki == n_kv - 1)
    def _finalize():
        # Normalize the (TQ, D) PV result per head (cheaper than scaling (TQ, S) p).
        for h in range(H):
            lo = h * D
            acc_scr[:, lo:lo + D] = acc_scr[:, lo:lo + D] * pl.reciprocal(
                l_scr[h], approx=True)

        att = acc_scr[...].astype(bf16)                      # lane-dense (TQ, E) slab
        att_out = jnp.dot(att, wo_ref[...],
                          preferred_element_type=f32) + bo_ref[...]

        q = q_ref[0]                                         # (TQ, E) f32 residual
        x = _layernorm(att_out + q, g1_ref[...], be1_ref[...])

        h1 = jnp.dot(x.astype(bf16), w1_ref[...],
                     preferred_element_type=f32) + b1_ref[...]
        h1 = jnp.maximum(h1, 0.0)
        ff = jnp.dot(h1.astype(bf16), w2_ref[...],
                     preferred_element_type=f32) + b2_ref[...]

        out_ref[0] = _layernorm(ff + x, g2_ref[...], be2_ref[...]).astype(out_ref.dtype)


def _pick_tile(total, candidates):
    for c in candidates:
        if total % c == 0:
            return c
    return total


def transformer_block(key, value, query, mask, params, *, head_count,
                      causal=False, q_tile=None, kv_tile=None,
                      vmem_limit_bytes=None, single_buffer_weights=True):
    N, S, E = query.shape
    H = head_count
    D = E // H
    F = params["w1"].shape[1]
    f32 = jnp.float32
    bf16 = jnp.bfloat16

    # Tile selection: 256/128-wide q tiles, up to 512-wide kv tiles; full S fallback.
    if q_tile is None:
        q_tile = _pick_tile(S, (256, 128))
        if N == 1 and S == q_tile and q_tile % 256 == 0:
            q_tile //= 2            # keep both v7x TensorCores busy when N == 1
    if kv_tile is None:
        kv_tile = _pick_tile(S, (512, 256, 128))
    assert S % q_tile == 0 and S % kv_tile == 0
    n_qt = S // q_tile
    n_kv = S // kv_tile

    # Per-generation VMEM budget: ~3/4 of physical VMEM (96 MiB v5e/v6e, 48 MiB v7x).
    if vmem_limit_bytes is None:
        try:
            cap = pltpu.get_tpu_info().vmem_capacity_bytes
        except Exception:
            cap = 128 * 1024 * 1024
        vmem_limit_bytes = int(min(cap * 3 // 4, 100 * 1024 * 1024))

    # Block-diagonal bf16 Q weight with the 1/sqrt(embed_size) scale folded in.
    scale = 1.0 / (E ** 0.5)
    wq_bd = jnp.kron(jnp.eye(H, dtype=f32),
                     params["wq"].astype(f32) * f32(scale)).astype(bf16)

    # K/V projections depend only on the batch index -> do them ONCE here (f32 math,
    # bf16 result) instead of redundantly re-doing them per q-tile inside the kernel.
    def project(x, w):
        xh = x.reshape(N, S, H, D)
        return jnp.einsum("nshd,de->nshe", xh, w).reshape(N, S, E).astype(bf16)

    kh = project(key, params["wk"])
    vh = project(value, params["wv"])

    wo = params["wo"].astype(bf16)
    w1 = params["w1"].astype(bf16)
    w2 = params["w2"].astype(bf16)

    q_spec = pl.BlockSpec((1, q_tile, E), lambda b, t, s: (b, t, 0))
    kv_spec = pl.BlockSpec((1, kv_tile, E), lambda b, t, s: (b, s, 0))
    out_spec = pl.BlockSpec((1, q_tile, E), lambda b, t, s: (b, t, 0))

    inputs = [query, kh, vh]
    in_specs = [q_spec, kv_spec, kv_spec]

    if not causal:
        # General-mask path: additive bias (-1e20 where masked), DMA'd per (TQ, TK) block.
        bias = jnp.where(mask == 0, f32(_NEG_BIG), f32(0.0)).astype(bf16)
        inputs.append(bias)
        in_specs.append(pl.BlockSpec((1, q_tile, kv_tile), lambda b, t, s: (b, t, s)))

    weight_args = [wq_bd, wo, params["bo"], params["g1"], params["be1"],
                   params["g2"], params["be2"], w1, params["b1"], w2, params["b2"]]
    weight_shapes = [(E, E), (E, E), (1, E), (1, E), (1, E), (1, E), (1, E),
                     (E, F), (1, F), (F, E), (1, E)]
    inputs += weight_args

    kernel = functools.partial(
        _transformer_block_kernel,
        head_count=H, head_dim=D, q_tile=q_tile, kv_tile=kv_tile, causal=causal)

    scratch_shapes = [
        pltpu.VMEM((q_tile, E), bf16),       # projected + scaled Q slab
        pltpu.VMEM((H, q_tile, 1), f32),     # running max per head
        pltpu.VMEM((H, q_tile, 1), f32),     # running denominator per head
        pltpu.VMEM((q_tile, E), f32),        # un-normalized PV accumulator
    ]

    # Advisory cost estimate for the XLA scheduler.
    flops = int(N * (4 * S * E * E + 4 * S * S * E + 4 * S * E * F))
    transcendentals = int(N * (H * S * S + H * S * n_kv + H * S + 2 * S))
    kv_reads = n_qt if n_kv > 1 else 1
    bytes_accessed = int(
        N * S * E * 4                       # q (f32)
        + 2 * kv_reads * N * S * E * 2      # projected K/V (bf16)
        + (0 if causal else N * S * S * 2)  # mask bias (bf16)
        + N * S * E * 4                     # output (f32)
        + (2 * E * E + 2 * E * F) * 2       # bf16 weights
        + (6 * E + F) * 4)                  # f32 biases / LN params

    def build(single_buf):
        def const_spec(shape):
            # Grid-invariant blocks: single-buffer them (double-buffering is pure waste).
            if single_buf:
                return pl.BlockSpec(shape, lambda b, t, s: (0, 0),
                                    pipeline_mode=pl.Buffered(buffer_count=1))
            return pl.BlockSpec(shape, lambda b, t, s: (0, 0))

        w_specs = [const_spec(shp) for shp in weight_shapes]
        return pl.pallas_call(
            kernel,
            out_shape=jax.ShapeDtypeStruct((N, S, E), f32),
            grid_spec=pltpu.PrefetchScalarGridSpec(
                num_scalar_prefetch=0,
                grid=(N, n_qt, n_kv),
                in_specs=in_specs + w_specs,
                out_specs=out_spec,
                scratch_shapes=scratch_shapes),
            compiler_params=pltpu.CompilerParams(
                dimension_semantics=("parallel", "parallel", "arbitrary"),
                vmem_limit_bytes=vmem_limit_bytes),
            cost_estimate=pl.CostEstimate(
                flops=flops, transcendentals=transcendentals,
                bytes_accessed=bytes_accessed),
        )

    if single_buffer_weights:
        try:
            return jax.block_until_ready(build(True)(*inputs))
        except Exception:
            # Fallback for JAX builds without pipeline_mode support on this path:
            # identical kernel, default double-buffered weights.
            pass
    return build(False)(*inputs)


def transformer_block_ref(key, value, query, mask, params, *, head_count):
    """Pure-JAX f32 reference mirroring the PyTorch forward (eval mode)."""
    N, S, E = query.shape
    D = E // head_count

    def split(x):
        return x.reshape(N, S, head_count, D)

    kh = jnp.einsum("nkhd,de->nkhe", split(key), params["wk"])
    vh = jnp.einsum("nkhd,de->nkhe", split(value), params["wv"])
    qh = jnp.einsum("nqhd,de->nqhe", split(query), params["wq"])

    energy = jnp.einsum("nqhd,nkhd->nhqk", qh, kh)
    energy = jnp.where(mask[:, None, :, :] == 0, -1e20, energy)
    p = jax.nn.softmax(energy / (E ** 0.5), axis=3)
    att = jnp.einsum("nhqk,nkhd->nqhd", p, vh).reshape(N, S, E)
    att = att @ params["wo"] + params["bo"]

    x = _layernorm(att + query, params["g1"], params["be1"])
    ff = jnp.maximum(x @ params["w1"] + params["b1"], 0.0) @ params["w2"] + params["b2"]
    return _layernorm(ff + x, params["g2"], params["be2"])


if __name__ == "__main__":
    # Small, module-consistent shapes.
    N, S, E, H, FEXP = 2, 8, 32, 4, 4
    D = E // H
    F = FEXP * E

    root = jax.random.PRNGKey(0)
    keys = jax.random.split(root, 12)

    def init(k, shape, fan_in):
        return jax.random.normal(k, shape, jnp.float32) / jnp.sqrt(jnp.float32(fan_in))

    params = {
        "wk": init(keys[0], (D, D), D),
        "wv": init(keys[1], (D, D), D),
        "wq": init(keys[2], (D, D), D),
        "wo": init(keys[3], (E, E), E),
        "bo": init(keys[4], (1, E), E),
        "g1": jnp.ones((1, E), jnp.float32),
        "be1": jnp.zeros((1, E), jnp.float32),
        "g2": jnp.ones((1, E), jnp.float32),
        "be2": jnp.zeros((1, E), jnp.float32),
        "w1": init(keys[5], (E, F), E),
        "b1": init(keys[6], (1, F), E),
        "w2": init(keys[7], (F, E), F),
        "b2": init(keys[8], (1, E), F),
    }

    key_in = jax.random.normal(keys[9], (N, S, E), jnp.float32)
    value_in = jax.random.normal(keys[10], (N, S, E), jnp.float32)
    query_in = jax.random.normal(keys[11], (N, S, E), jnp.float32)
    # causal mask (broadcast over heads), 1 = keep, 0 = masked
    mask = jnp.broadcast_to(jnp.tril(jnp.ones((S, S), jnp.int32)), (N, S, S))

    ref = transformer_block_ref(key_in, value_in, query_in, mask, params, head_count=H)

    # Path 1: structured mask -> bias generated in-kernel from iota (no bias DMA).
    out_causal = transformer_block(key_in, value_in, query_in, mask, params,
                                   head_count=H, causal=True)
    out_causal = jax.block_until_ready(out_causal)
    assert out_causal.shape == (N, S, E)
    assert jnp.allclose(out_causal, ref, atol=5e-2, rtol=5e-2), "causal path mismatch"

    # Path 2: arbitrary mask -> additive bias DMA'd per (TQ, TK) block.
    out_masked = transformer_block(key_in, value_in, query_in, mask, params,
                                   head_count=H, causal=False)
    out_masked = jax.block_until_ready(out_masked)
    assert jnp.allclose(out_masked, ref, atol=5e-2, rtol=5e-2), "masked path mismatch"

    print("KERNEL_OK")
</pallas_src>

<mosaic_0001>
module attributes {stable_mosaic.version = 11 : i64} {
  func.func @_transformer_block_kernel(%arg0: i32, %arg1: i32, %arg2: i32, %arg3: memref<1x8x32xf32, #tpu.memory_space<vmem>>, %arg4: memref<1x8x32xbf16, #tpu.memory_space<vmem>>, %arg5: memref<1x8x32xbf16, #tpu.memory_space<vmem>>, %arg6: memref<32x32xbf16, #tpu.memory_space<vmem>>, %arg7: memref<32x32xbf16, #tpu.memory_space<vmem>>, %arg8: memref<1x32xf32, #tpu.memory_space<vmem>>, %arg9: memref<1x32xf32, #tpu.memory_space<vmem>>, %arg10: memref<1x32xf32, #tpu.memory_space<vmem>>, %arg11: memref<1x32xf32, #tpu.memory_space<vmem>>, %arg12: memref<1x32xf32, #tpu.memory_space<vmem>>, %arg13: memref<32x128xbf16, #tpu.memory_space<vmem>>, %arg14: memref<1x128xf32, #tpu.memory_space<vmem>>, %arg15: memref<128x32xbf16, #tpu.memory_space<vmem>>, %arg16: memref<1x32xf32, #tpu.memory_space<vmem>>, %arg17: memref<1x8x32xf32, #tpu.memory_space<vmem>>, %arg18: memref<8x32xbf16, #tpu.memory_space<vmem>>, %arg19: memref<4x8x1xf32, #tpu.memory_space<vmem>>, %arg20: memref<4x8x1xf32, #tpu.memory_space<vmem>>, %arg21: memref<8x32xf32, #tpu.memory_space<vmem>>) attributes {dimension_semantics = [#tpu.dimension_semantics<parallel>, #tpu.dimension_semantics<parallel>, #tpu.dimension_semantics<arbitrary>], iteration_bounds = array<i64: 2, 1, 1>, scalar_prefetch = 0 : i64, scratch_operands = 4 : i64, tpu.core_type = #tpu.core_type<tc>, window_params = [{transform_indices = @transform_0, window_bounds = array<i64: 1, 8, 32>}, {transform_indices = @transform_1, window_bounds = array<i64: 1, 8, 32>}, {transform_indices = @transform_2, window_bounds = array<i64: 1, 8, 32>}, {pipeline_mode = #tpu.pipeline_mode<synchronous>, transform_indices = @transform_3, window_bounds = array<i64: 32, 32>}, {pipeline_mode = #tpu.pipeline_mode<synchronous>, transform_indices = @transform_4, window_bounds = array<i64: 32, 32>}, {pipeline_mode = #tpu.pipeline_mode<synchronous>, transform_indices = @transform_5, window_bounds = array<i64: 1, 32>}, {pipeline_mode = #tpu.pipeline_mode<synchronous>, transform_indices = @transform_6, window_bounds = array<i64: 1, 32>}, {pipeline_mode = #tpu.pipeline_mode<synchronous>, transform_indices = @transform_7, window_bounds = array<i64: 1, 32>}, {pipeline_mode = #tpu.pipeline_mode<synchronous>, transform_indices = @transform_8, window_bounds = array<i64: 1, 32>}, {pipeline_mode = #tpu.pipeline_mode<synchronous>, transform_indices = @transform_9, window_bounds = array<i64: 1, 32>}, {pipeline_mode = #tpu.pipeline_mode<synchronous>, transform_indices = @transform_10, window_bounds = array<i64: 32, 128>}, {pipeline_mode = #tpu.pipeline_mode<synchronous>, transform_indices = @transform_11, window_bounds = array<i64: 1, 128>}, {pipeline_mode = #tpu.pipeline_mode<synchronous>, transform_indices = @transform_12, window_bounds = array<i64: 128, 32>}, {pipeline_mode = #tpu.pipeline_mode<synchronous>, transform_indices = @transform_13, window_bounds = array<i64: 1, 32>}, {transform_indices = @transform_14, window_bounds = array<i64: 1, 8, 32>}]} {
    %c0_i32 = arith.constant 0 : i32
    %0 = arith.cmpi eq, %arg2, %c0_i32 : i32
    %1 = arith.extui %0 : i1 to i32
    %c0_i32_0 = arith.constant 0 : i32
    %2 = arith.cmpi ne, %1, %c0_i32_0 : i32
    scf.if %2 {
      %cst = arith.constant 0xFF800000 : f32
      %12 = vector.broadcast %cst : f32 to vector<4x8x1xf32>
      %c0 = arith.constant 0 : index
      %c0_5 = arith.constant 0 : index
      %c0_6 = arith.constant 0 : index
      %13 = vector.load %arg19[%c0, %c0_5, %c0_6] : memref<4x8x1xf32, #tpu.memory_space<vmem>>, vector<4x8x1xf32>
      tpu.vector_store %arg19[%c0, %c0_5, %c0_6], %12 {strides = array<i32>} : memref<4x8x1xf32, #tpu.memory_space<vmem>>, vector<4x8x1xf32>,
      %cst_7 = arith.constant 0.000000e+00 : f32
      %14 = vector.broadcast %cst_7 : f32 to vector<4x8x1xf32>
      %c0_8 = arith.constant 0 : index
      %c0_9 = arith.constant 0 : index
      %c0_10 = arith.constant 0 : index
      %15 = vector.load %arg20[%c0_8, %c0_9, %c0_10] : memref<4x8x1xf32, #tpu.memory_space<vmem>>, vector<4x8x1xf32>
      tpu.vector_store %arg20[%c0_8, %c0_9, %c0_10], %14 {strides = array<i32>} : memref<4x8x1xf32, #tpu.memory_space<vmem>>, vector<4x8x1xf32>,
      %cst_11 = arith.constant 0.000000e+00 : f32
      %16 = vector.broadcast %cst_11 : f32 to vector<8x32xf32>
      %c0_12 = arith.constant 0 : index
      %c0_13 = arith.constant 0 : index
      %17 = vector.load %arg21[%c0_12, %c0_13] : memref<8x32xf32, #tpu.memory_space<vmem>>, vector<8x32xf32>
      tpu.vector_store %arg21[%c0_12, %c0_13], %16 {strides = array<i32>} : memref<8x32xf32, #tpu.memory_space<vmem>>, vector<8x32xf32>,
      %c0_14 = arith.constant 0 : index
      %c0_15 = arith.constant 0 : index
      %c0_16 = arith.constant 0 : index
      %18 = vector.load %arg3[%c0_14, %c0_15, %c0_16] : memref<1x8x32xf32, #tpu.memory_space<vmem>>, vector<1x8x32xf32>
      %19 = vector.shape_cast %18 : vector<1x8x32xf32> to vector<8x32xf32>
      %20 = arith.truncf %19 : vector<8x32xf32> to vector<8x32xbf16>
      %c0_17 = arith.constant 0 : index
      %c0_18 = arith.constant 0 : index
      %21 = vector.load %arg6[%c0_17, %c0_18] : memref<32x32xbf16, #tpu.memory_space<vmem>>, vector<32x32xbf16>
      %cst_19 = arith.constant dense<0.000000e+00> : vector<8x32xf32>
      %22 = tpu.matmul %20, %21, %cst_19 {dimension_numbers = #tpu.dot_dimension_numbers<[1], [0], [0], [1], [0, 0, 1, 1], [], []>} : vector<8x32xbf16>, vector<32x32xbf16>, vector<8x32xf32> -> vector<8x32xf32>
      %23 = arith.truncf %22 : vector<8x32xf32> to vector<8x32xbf16>
      %c0_20 = arith.constant 0 : index
      %c0_21 = arith.constant 0 : index
      %24 = vector.load %arg18[%c0_20, %c0_21] : memref<8x32xbf16, #tpu.memory_space<vmem>>, vector<8x32xbf16>
      tpu.vector_store %arg18[%c0_20, %c0_21], %23 {strides = array<i32>} : memref<8x32xbf16, #tpu.memory_space<vmem>>, vector<8x32xbf16>,
    } else {
    }
    %c8_i32 = arith.constant 8 : i32
    %3 = arith.muli %arg2, %c8_i32 : i32
    %c8_i32_1 = arith.constant 8 : i32
    %4 = arith.muli %arg1, %c8_i32_1 : i32
    %c7_i32 = arith.constant 7 : i32
    %5 = arith.addi %4, %c7_i32 : i32
    %6 = arith.cmpi sle, %3, %5 : i32
    %7 = arith.extui %6 : i1 to i32
    %c0_i32_2 = arith.constant 0 : i32
    %8 = arith.cmpi ne, %7, %c0_i32_2 : i32
    scf.if %8 {
      %c0 = arith.constant 0 : index
      %c0_5 = arith.constant 0 : index
      %c0_6 = arith.constant 0 : index
      %12 = vector.load %arg4[%c0, %c0_5, %c0_6] : memref<1x8x32xbf16, #tpu.memory_space<vmem>>, vector<1x8x32xbf16>
      %13 = vector.shape_cast %12 : vector<1x8x32xbf16> to vector<8x32xbf16>
      %c0_7 = arith.constant 0 : index
      %c0_8 = arith.constant 0 : index
      %c0_9 = arith.constant 0 : index
      %14 = vector.load %arg5[%c0_7, %c0_8, %c0_9] : memref<1x8x32xbf16, #tpu.memory_space<vmem>>, vector<1x8x32xbf16>
      %15 = vector.shape_cast %14 : vector<1x8x32xbf16> to vector<8x32xbf16>
      %c0_10 = arith.constant 0 : index
      %c0_11 = arith.constant 0 : index
      %16 = vector.load %arg18[%c0_10, %c0_11] : memref<8x32xbf16, #tpu.memory_space<vmem>>, vector<8x32xbf16>
      %c8_i32_12 = arith.constant 8 : i32
      %17 = arith.muli %arg1, %c8_i32_12 : i32
      %18 = tpu.iota {dimensions = array<i32: 0>} : vector<8x8xi32>
      %19 = vector.broadcast %17 : i32 to vector<8x8xi32>
      %20 = arith.addi %19, %18 : vector<8x8xi32>
      %c8_i32_13 = arith.constant 8 : i32
      %21 = arith.muli %arg2, %c8_i32_13 : i32
      %22 = tpu.iota {dimensions = array<i32: 1>} : vector<8x8xi32>
      %23 = vector.broadcast %21 : i32 to vector<8x8xi32>
      %24 = arith.addi %23, %22 : vector<8x8xi32>
      %25 = arith.cmpi sgt, %24, %20 : vector<8x8xi32>
      %cst = arith.constant -1.000000e+20 : f32
      %cst_14 = arith.constant 0.000000e+00 : f32
      %26 = vector.broadcast %cst : f32 to vector<8x8xf32>
      %27 = vector.broadcast %cst_14 : f32 to vector<8x8xf32>
      %28 = arith.select %25, %26, %27 : vector<8x8xi1>, vector<8x8xf32>
      %29 = vector.extract_strided_slice %16 {offsets = [0, 0], sizes = [8, 8], strides = [1, 1]} : vector<8x32xbf16> to vector<8x8xbf16>
      %30 = vector.extract_strided_slice %13 {offsets = [0, 0], sizes = [8, 8], strides = [1, 1]} : vector<8x32xbf16> to vector<8x8xbf16>
      %31 = vector.extract_strided_slice %15 {offsets = [0, 0], sizes = [8, 8], strides = [1, 1]} : vector<8x32xbf16> to vector<8x8xbf16>
      %cst_15 = arith.constant dense<0.000000e+00> : vector<8x8xf32>
      %32 = tpu.matmul %29, %30, %cst_15 {dimension_numbers = #tpu.dot_dimension_numbers<[1], [1], [0], [0], [0, 0, 1, 0], [], []>} : vector<8x8xbf16>, vector<8x8xbf16>, vector<8x8xf32> -> vector<8x8xf32>
      %33 = arith.addf %32, %28 : vector<8x8xf32>
      %c0_16 = arith.constant 0 : index
      %c0_17 = arith.constant 0 : index
      %c0_18 = arith.constant 0 : index
      %34 = vector.load %arg19[%c0_16, %c0_17, %c0_18] : memref<4x8x1xf32, #tpu.memory_space<vmem>>, vector<1x8x1xf32>
      %35 = vector.shape_cast %34 : vector<1x8x1xf32> to vector<8x1xf32>
      %cst_19 = arith.constant dense<0xFF800000> : vector<8xf32>
      %36 = vector.multi_reduction <maximumf>, %33, %cst_19 [1] : vector<8x8xf32> to vector<8xf32>
      %37 = vector.shape_cast %36 : vector<8xf32> to vector<8x1xf32>
      %38 = arith.maximumf %35, %37 : vector<8x1xf32>
      %39 = arith.subf %35, %38 : vector<8x1xf32>
      %40 = math.exp %39 : vector<8x1xf32>
      %41 = vector.broadcast %38 : vector<8x1xf32> to vector<8x8xf32>
      %42 = arith.subf %33, %41 : vector<8x8xf32>
      %43 = math.exp %42 : vector<8x8xf32>
      %c0_20 = arith.constant 0 : index
      %c0_21 = arith.constant 0 : index
      %c0_22 = arith.constant 0 : index
      %44 = vector.load %arg20[%c0_20, %c0_21, %c0_22] : memref<4x8x1xf32, #tpu.memory_space<vmem>>, vector<1x8x1xf32>
      %45 = vector.shape_cast %44 : vector<1x8x1xf32> to vector<8x1xf32>
      %46 = arith.mulf %40, %45 : vector<8x1xf32>
      %cst_23 = arith.constant dense<0.000000e+00> : vector<8xf32>
      %47 = vector.multi_reduction <add>, %43, %cst_23 [1] : vector<8x8xf32> to vector<8xf32>
      %48 = vector.shape_cast %47 : vector<8xf32> to vector<8x1xf32>
      %49 = arith.addf %46, %48 : vector<8x1xf32>
      %c0_24 = arith.constant 0 : index
      %c0_25 = arith.constant 0 : index
      %c0_26 = arith.constant 0 : index
      %50 = vector.load %arg20[%c0_24, %c0_25, %c0_26] : memref<4x8x1xf32, #tpu.memory_space<vmem>>, vector<1x8x1xf32>
      %51 = vector.shape_cast %50 : vector<1x8x1xf32> to vector<8x1xf32>
      %52 = vector.shape_cast %49 : vector<8x1xf32> to vector<1x8x1xf32>
      tpu.vector_store %arg20[%c0_24, %c0_25, %c0_26], %52 {strides = array<i32>} : memref<4x8x1xf32, #tpu.memory_space<vmem>>, vector<1x8x1xf32>,
      %c0_27 = arith.constant 0 : index
      %c0_28 = arith.constant 0 : index
      %53 = vector.load %arg21[%c0_27, %c0_28] : memref<8x32xf32, #tpu.memory_space<vmem>>, vector<8x8xf32>
      %54 = vector.broadcast %40 : vector<8x1xf32> to vector<8x8xf32>
      %55 = arith.mulf %54, %53 : vector<8x8xf32>
      %56 = arith.truncf %43 : vector<8x8xf32> to vector<8x8xbf16>
      %cst_29 = arith.constant dense<0.000000e+00> : vector<8x8xf32>
      %57 = tpu.matmul %56, %31, %cst_29 {dimension_numbers = #tpu.dot_dimension_numbers<[1], [0], [0], [1], [0, 0, 1, 1], [], []>} : vector<8x8xbf16>, vector<8x8xbf16>, vector<8x8xf32> -> vector<8x8xf32>
      %58 = arith.addf %55, %57 : vector<8x8xf32>
      %c0_30 = arith.constant 0 : index
      %c0_31 = arith.constant 0 : index
      %59 = vector.load %arg21[%c0_30, %c0_31] : memref<8x32xf32, #tpu.memory_space<vmem>>, vector<8x8xf32>
      tpu.vector_store %arg21[%c0_30, %c0_31], %58 {strides = array<i32>} : memref<8x32xf32, #tpu.memory_space<vmem>>, vector<8x8xf32>,
      %c0_32 = arith.constant 0 : index
      %c0_33 = arith.constant 0 : index
      %c0_34 = arith.constant 0 : index
      %60 = vector.load %arg19[%c0_32, %c0_33, %c0_34] : memref<4x8x1xf32, #tpu.memory_space<vmem>>, vector<1x8x1xf32>
      %61 = vector.shape_cast %60 : vector<1x8x1xf32> to vector<8x1xf32>
      %62 = vector.shape_cast %38 : vector<8x1xf32> to vector<1x8x1xf32>
      tpu.vector_store %arg19[%c0_32, %c0_33, %c0_34], %62 {strides = array<i32>} : memref<4x8x1xf32, #tpu.memory_space<vmem>>, vector<1x8x1xf32>,
      %63 = vector.extract_strided_slice %16 {offsets = [0, 8], sizes = [8, 8], strides = [1, 1]} : vector<8x32xbf16> to vector<8x8xbf16>
      %64 = vector.extract_strided_slice %13 {offsets = [0, 8], sizes = [8, 8], strides = [1, 1]} : vector<8x32xbf16> to vector<8x8xbf16>
      %65 = vector.extract_strided_slice %15 {offsets = [0, 8], sizes = [8, 8], strides = [1, 1]} : vector<8x32xbf16> to vector<8x8xbf16>
      %cst_35 = arith.constant dense<0.000000e+00> : vector<8x8xf32>
      %66 = tpu.matmul %63, %64, %cst_35 {dimension_numbers = #tpu.dot_dimension_numbers<[1], [1], [0], [0], [0, 0, 1, 0], [], []>} : vector<8x8xbf16>, vector<8x8xbf16>, vector<8x8xf32> -> vector<8x8xf32>
      %67 = arith.addf %66, %28 : vector<8x8xf32>
      %c1 = arith.constant 1 : index
      %c0_36 = arith.constant 0 : index
      %c0_37 = arith.constant 0 : index
      %68 = vector.load %arg19[%c1, %c0_36, %c0_37] : memref<4x8x1xf32, #tpu.memory_space<vmem>>, vector<1x8x1xf32>
      %69 = vector.shape_cast %68 : vector<1x8x1xf32> to vector<8x1xf32>
      %cst_38 = arith.constant dense<0xFF800000> : vector<8xf32>
      %70 = vector.multi_reduction <maximumf>, %67, %cst_38 [1] : vector<8x8xf32> to vector<8xf32>
      %71 = vector.shape_cast %70 : vector<8xf32> to vector<8x1xf32>
      %72 = arith.maximumf %69, %71 : vector<8x1xf32>
      %73 = arith.subf %69, %72 : vector<8x1xf32>
      %74 = math.exp %73 : vector<8x1xf32>
      %75 = vector.broadcast %72 : vector<8x1xf32> to vector<8x8xf32>
      %76 = arith.subf %67, %75 : vector<8x8xf32>
      %77 = math.exp %76 : vector<8x8xf32>
      %c1_39 = arith.constant 1 : index
      %c0_40 = arith.constant 0 : index
      %c0_41 = arith.constant 0 : index
      %78 = vector.load %arg20[%c1_39, %c0_40, %c0_41] : memref<4x8x1xf32, #tpu.memory_space<vmem>>, vector<1x8x1xf32>
      %79 = vector.shape_cast %78 : vector<1x8x1xf32> to vector<8x1xf32>
      %80 = arith.mulf %74, %79 : vector<8x1xf32>
      %cst_42 = arith.constant dense<0.000000e+00> : vector<8xf32>
      %81 = vector.multi_reduction <add>, %77, %cst_42 [1] : vector<8x8xf32> to vector<8xf32>
      %82 = vector.shape_cast %81 : vector<8xf32> to vector<8x1xf32>
      %83 = arith.addf %80, %82 : vector<8x1xf32>
      %c1_43 = arith.constant 1 : index
      %c0_44 = arith.constant 0 : index
      %c0_45 = arith.constant 0 : index
      %84 = vector.load %arg20[%c1_43, %c0_44, %c0_45] : memref<4x8x1xf32, #tpu.memory_space<vmem>>, vector<1x8x1xf32>
      %85 = vector.shape_cast %84 : vector<1x8x1xf32> to vector<8x1xf32>
      %86 = vector.shape_cast %83 : vector<8x1xf32> to vector<1x8x1xf32>
      tpu.vector_store %arg20[%c1_43, %c0_44, %c0_45], %86 {strides = array<i32>} : memref<4x8x1xf32, #tpu.memory_space<vmem>>, vector<1x8x1xf32>,
      %c0_46 = arith.constant 0 : index
      %c8 = arith.constant 8 : index
      %87 = vector.load %arg21[%c0_46, %c8] : memref<8x32xf32, #tpu.memory_space<vmem>>, vector<8x8xf32>
      %88 = vector.broadcast %74 : vector<8x1xf32> to vector<8x8xf32>
      %89 = arith.mulf %88, %87 : vector<8x8xf32>
      %90 = arith.truncf %77 : vector<8x8xf32> to vector<8x8xbf16>
      %cst_47 = arith.constant dense<0.000000e+00> : vector<8x8xf32>
      %91 = tpu.matmul %90, %65, %cst_47 {dimension_numbers = #tpu.dot_dimension_numbers<[1], [0], [0], [1], [0, 0, 1, 1], [], []>} : vector<8x8xbf16>, vector<8x8xbf16>, vector<8x8xf32> -> vector<8x8xf32>
      %92 = arith.addf %89, %91 : vector<8x8xf32>
      %c0_48 = arith.constant 0 : index
      %c8_49 = arith.constant 8 : index
      %93 = vector.load %arg21[%c0_48, %c8_49] : memref<8x32xf32, #tpu.memory_space<vmem>>, vector<8x8xf32>
      tpu.vector_store %arg21[%c0_48, %c8_49], %92 {strides = array<i32>} : memref<8x32xf32, #tpu.memory_space<vmem>>, vector<8x8xf32>,
      %c1_50 = arith.constant 1 : index
      %c0_51 = arith.constant 0 : index
      %c0_52 = arith.constant 0 : index
      %94 = vector.load %arg19[%c1_50, %c0_51, %c0_52] : memref<4x8x1xf32, #tpu.memory_space<vmem>>, vector<1x8x1xf32>
      %95 = vector.shape_cast %94 : vector<1x8x1xf32> to vector<8x1xf32>
      %96 = vector.shape_cast %72 : vector<8x1xf32> to vector<1x8x1xf32>
      tpu.vector_store %arg19[%c1_50, %c0_51, %c0_52], %96 {strides = array<i32>} : memref<4x8x1xf32, #tpu.memory_space<vmem>>, vector<1x8x1xf32>,
      %97 = vector.extract_strided_slice %16 {offsets = [0, 16], sizes = [8, 8], strides = [1, 1]} : vector<8x32xbf16> to vector<8x8xbf16>
      %98 = vector.extract_strided_slice %13 {offsets = [0, 16], sizes = [8, 8], strides = [1, 1]} : vector<8x32xbf16> to vector<8x8xbf16>
      %99 = vector.extract_strided_slice %15 {offsets = [0, 16], sizes = [8, 8], strides = [1, 1]} : vector<8x32xbf16> to vector<8x8xbf16>
      %cst_53 = arith.constant dense<0.000000e+00> : vector<8x8xf32>
      %100 = tpu.matmul %97, %98, %cst_53 {dimension_numbers = #tpu.dot_dimension_numbers<[1], [1], [0], [0], [0, 0, 1, 0], [], []>} : vector<8x8xbf16>, vector<8x8xbf16>, vector<8x8xf32> -> vector<8x8xf32>
      %101 = arith.addf %100, %28 : vector<8x8xf32>
      %c2 = arith.constant 2 : index
      %c0_54 = arith.constant 0 : index
      %c0_55 = arith.constant 0 : index
      %102 = vector.load %arg19[%c2, %c0_54, %c0_55] : memref<4x8x1xf32, #tpu.memory_space<vmem>>, vector<1x8x1xf32>
      %103 = vector.shape_cast %102 : vector<1x8x1xf32> to vector<8x1xf32>
      %cst_56 = arith.constant dense<0xFF800000> : vector<8xf32>
      %104 = vector.multi_reduction <maximumf>, %101, %cst_56 [1] : vector<8x8xf32> to vector<8xf32>
      %105 = vector.shape_cast %104 : vector<8xf32> to vector<8x1xf32>
      %106 = arith.maximumf %103, %105 : vector<8x1xf32>
      %107 = arith.subf %103, %106 : vector<8x1xf32>
      %108 = math.exp %107 : vector<8x1xf32>
      %109 = vector.broadcast %106 : vector<8x1xf32> to vector<8x8xf32>
      %110 = arith.subf %101, %109 : vector<8x8xf32>
      %111 = math.exp %110 : vector<8x8xf32>
      %c2_57 = arith.constant 2 : index
      %c0_58 = arith.constant 0 : index
      %c0_59 = arith.constant 0 : index
      %112 = vector.load %arg20[%c2_57, %c0_58, %c0_59] : memref<4x8x1xf32, #tpu.memory_space<vmem>>, vector<1x8x1xf32>
      %113 = vector.shape_cast %112 : vector<1x8x1xf32> to vector<8x1xf32>
      %114 = arith.mulf %108, %113 : vector<8x1xf32>
      %cst_60 = arith.constant dense<0.000000e+00> : vector<8xf32>
      %115 = vector.multi_reduction <add>, %111, %cst_60 [1] : vector<8x8xf32> to vector<8xf32>
      %116 = vector.shape_cast %115 : vector<8xf32> to vector<8x1xf32>
      %117 = arith.addf %114, %116 : vector<8x1xf32>
      %c2_61 = arith.constant 2 : index
      %c0_62 = arith.constant 0 : index
      %c0_63 = arith.constant 0 : index
      %118 = vector.load %arg20[%c2_61, %c0_62, %c0_63] : memref<4x8x1xf32, #tpu.memory_space<vmem>>, vector<1x8x1xf32>
      %119 = vector.shape_cast %118 : vector<1x8x1xf32> to vector<8x1xf32>
      %120 = vector.shape_cast %117 : vector<8x1xf32> to vector<1x8x1xf32>
      tpu.vector_store %arg20[%c2_61, %c0_62, %c0_63], %120 {strides = array<i32>} : memref<4x8x1xf32, #tpu.memory_space<vmem>>, vector<1x8x1xf32>,
      %c0_64 = arith.constant 0 : index
      %c16 = arith.constant 16 : index
      %121 = vector.load %arg21[%c0_64, %c16] : memref<8x32xf32, #tpu.memory_space<vmem>>, vector<8x8xf32>
      %122 = vector.broadcast %108 : vector<8x1xf32> to vector<8x8xf32>
      %123 = arith.mulf %122, %121 : vector<8x8xf32>
      %124 = arith.truncf %111 : vector<8x8xf32> to vector<8x8xbf16>
      %cst_65 = arith.constant dense<0.000000e+00> : vector<8x8xf32>
      %125 = tpu.matmul %124, %99, %cst_65 {dimension_numbers = #tpu.dot_dimension_numbers<[1], [0], [0], [1], [0, 0, 1, 1], [], []>} : vector<8x8xbf16>, vector<8x8xbf16>, vector<8x8xf32> -> vector<8x8xf32>
      %126 = arith.addf %123, %125 : vector<8x8xf32>
      %c0_66 = arith.constant 0 : index
      %c16_67 = arith.constant 16 : index
      %127 = vector.load %arg21[%c0_66, %c16_67] : memref<8x32xf32, #tpu.memory_space<vmem>>, vector<8x8xf32>
      tpu.vector_store %arg21[%c0_66, %c16_67], %126 {strides = array<i32>} : memref<8x32xf32, #tpu.memory_space<vmem>>, vector<8x8xf32>,
      %c2_68 = arith.constant 2 : index
      %c0_69 = arith.constant 0 : index
      %c0_70 = arith.constant 0 : index
      %128 = vector.load %arg19[%c2_68, %c0_69, %c0_70] : memref<4x8x1xf32, #tpu.memory_space<vmem>>, vector<1x8x1xf32>
      %129 = vector.shape_cast %128 : vector<1x8x1xf32> to vector<8x1xf32>
      %130 = vector.shape_cast %106 : vector<8x1xf32> to vector<1x8x1xf32>
      tpu.vector_store %arg19[%c2_68, %c0_69, %c0_70], %130 {strides = array<i32>} : memref<4x8x1xf32, #tpu.memory_space<vmem>>, vector<1x8x1xf32>,
      %131 = vector.extract_strided_slice %16 {offsets = [0, 24], sizes = [8, 8], strides = [1, 1]} : vector<8x32xbf16> to vector<8x8xbf16>
      %132 = vector.extract_strided_slice %13 {offsets = [0, 24], sizes = [8, 8], strides = [1, 1]} : vector<8x32xbf16> to vector<8x8xbf16>
      %133 = vector.extract_strided_slice %15 {offsets = [0, 24], sizes = [8, 8], strides = [1, 1]} : vector<8x32xbf16> to vector<8x8xbf16>
      %cst_71 = arith.constant dense<0.000000e+00> : vector<8x8xf32>
      %134 = tpu.matmul %131, %132, %cst_71 {dimension_numbers = #tpu.dot_dimension_numbers<[1], [1], [0], [0], [0, 0, 1, 0], [], []>} : vector<8x8xbf16>, vector<8x8xbf16>, vector<8x8xf32> -> vector<8x8xf32>
      %135 = arith.addf %134, %28 : vector<8x8xf32>
      %c3 = arith.constant 3 : index
      %c0_72 = arith.constant 0 : index
      %c0_73 = arith.constant 0 : index
      %136 = vector.load %arg19[%c3, %c0_72, %c0_73] : memref<4x8x1xf32, #tpu.memory_space<vmem>>, vector<1x8x1xf32>
      %137 = vector.shape_cast %136 : vector<1x8x1xf32> to vector<8x1xf32>
      %cst_74 = arith.constant dense<0xFF800000> : vector<8xf32>
      %138 = vector.multi_reduction <maximumf>, %135, %cst_74 [1] : vector<8x8xf32> to vector<8xf32>
      %139 = vector.shape_cast %138 : vector<8xf32> to vector<8x1xf32>
      %140 = arith.maximumf %137, %139 : vector<8x1xf32>
      %141 = arith.subf %137, %140 : vector<8x1xf32>
      %142 = math.exp %141 : vector<8x1xf32>
      %143 = vector.broadcast %140 : vector<8x1xf32> to vector<8x8xf32>
      %144 = arith.subf %135, %143 : vector<8x8xf32>
      %145 = math.exp %144 : vector<8x8xf32>
      %c3_75 = arith.constant 3 : index
      %c0_76 = arith.constant 0 : index
      %c0_77 = arith.constant 0 : index
      %146 = vector.load %arg20[%c3_75, %c0_76, %c0_77] : memref<4x8x1xf32, #tpu.memory_space<vmem>>, vector<1x8x1xf32>
      %147 = vector.shape_cast %146 : vector<1x8x1xf32> to vector<8x1xf32>
      %148 = arith.mulf %142, %147 : vector<8x1xf32>
      %cst_78 = arith.constant dense<0.000000e+00> : vector<8xf32>
      %149 = vector.multi_reduction <add>, %145, %cst_78 [1] : vector<8x8xf32> to vector<8xf32>
      %150 = vector.shape_cast %149 : vector<8xf32> to vector<8x1xf32>
      %151 = arith.addf %148, %150 : vector<8x1xf32>
      %c3_79 = arith.constant 3 : index
      %c0_80 = arith.constant 0 : index
      %c0_81 = arith.constant 0 : index
      %152 = vector.load %arg20[%c3_79, %c0_80, %c0_81] : memref<4x8x1xf32, #tpu.memory_space<vmem>>, vector<1x8x1xf32>
      %153 = vector.shape_cast %152 : vector<1x8x1xf32> to vector<8x1xf32>
      %154 = vector.shape_cast %151 : vector<8x1xf32> to vector<1x8x1xf32>
      tpu.vector_store %arg20[%c3_79, %c0_80, %c0_81], %154 {strides = array<i32>} : memref<4x8x1xf32, #tpu.memory_space<vmem>>, vector<1x8x1xf32>,
      %c0_82 = arith.constant 0 : index
      %c24 = arith.constant 24 : index
      %155 = vector.load %arg21[%c0_82, %c24] : memref<8x32xf32, #tpu.memory_space<vmem>>, vector<8x8xf32>
      %156 = vector.broadcast %142 : vector<8x1xf32> to vector<8x8xf32>
      %157 = arith.mulf %156, %155 : vector<8x8xf32>
      %158 = arith.truncf %145 : vector<8x8xf32> to vector<8x8xbf16>
      %cst_83 = arith.constant dense<0.000000e+00> : vector<8x8xf32>
      %159 = tpu.matmul %158, %133, %cst_83 {dimension_numbers = #tpu.dot_dimension_numbers<[1], [0], [0], [1], [0, 0, 1, 1], [], []>} : vector<8x8xbf16>, vector<8x8xbf16>, vector<8x8xf32> -> vector<8x8xf32>
      %160 = arith.addf %157, %159 : vector<8x8xf32>
      %c0_84 = arith.constant 0 : index
      %c24_85 = arith.constant 24 : index
      %161 = vector.load %arg21[%c0_84, %c24_85] : memref<8x32xf32, #tpu.memory_space<vmem>>, vector<8x8xf32>
      tpu.vector_store %arg21[%c0_84, %c24_85], %160 {strides = array<i32>} : memref<8x32xf32, #tpu.memory_space<vmem>>, vector<8x8xf32>,
      %c3_86 = arith.constant 3 : index
      %c0_87 = arith.constant 0 : index
      %c0_88 = arith.constant 0 : index
      %162 = vector.load %arg19[%c3_86, %c0_87, %c0_88] : memref<4x8x1xf32, #tpu.memory_space<vmem>>, vector<1x8x1xf32>
      %163 = vector.shape_cast %162 : vector<1x8x1xf32> to vector<8x1xf32>
      %164 = vector.shape_cast %140 : vector<8x1xf32> to vector<1x8x1xf32>
      tpu.vector_store %arg19[%c3_86, %c0_87, %c0_88], %164 {strides = array<i32>} : memref<4x8x1xf32, #tpu.memory_space<vmem>>, vector<1x8x1xf32>,
    } else {
    }
    %c0_i32_3 = arith.constant 0 : i32
    %9 = arith.cmpi eq, %arg2, %c0_i32_3 : i32
    %10 = arith.extui %9 : i1 to i32
    %c0_i32_4 = arith.constant 0 : i32
    %11 = arith.cmpi ne, %10, %c0_i32_4 : i32
    scf.if %11 {
      %c0 = arith.constant 0 : index
      %c0_5 = arith.constant 0 : index
      %12 = vector.load %arg21[%c0, %c0_5] : memref<8x32xf32, #tpu.memory_space<vmem>>, vector<8x8xf32>
      %c0_6 = arith.constant 0 : index
      %c0_7 = arith.constant 0 : index
      %c0_8 = arith.constant 0 : index
      %13 = vector.load %arg20[%c0_6, %c0_7, %c0_8] : memref<4x8x1xf32, #tpu.memory_space<vmem>>, vector<1x8x1xf32>
      %14 = vector.shape_cast %13 : vector<1x8x1xf32> to vector<8x1xf32>
      %15 = tpu.reciprocal %14 {approx = true} : vector<8x1xf32> -> vector<8x1xf32>
      %16 = vector.broadcast %15 : vector<8x1xf32> to vector<8x8xf32>
      %17 = arith.mulf %12, %16 : vector<8x8xf32>
      %c0_9 = arith.constant 0 : index
      %c0_10 = arith.constant 0 : index
      %18 = vector.load %arg21[%c0_9, %c0_10] : memref<8x32xf32, #tpu.memory_space<vmem>>, vector<8x8xf32>
      tpu.vector_store %arg21[%c0_9, %c0_10], %17 {strides = array<i32>} : memref<8x32xf32, #tpu.memory_space<vmem>>, vector<8x8xf32>,
      %c0_11 = arith.constant 0 : index
      %c8 = arith.constant 8 : index
      %19 = vector.load %arg21[%c0_11, %c8] : memref<8x32xf32, #tpu.memory_space<vmem>>, vector<8x8xf32>
      %c1 = arith.constant 1 : index
      %c0_12 = arith.constant 0 : index
      %c0_13 = arith.constant 0 : index
      %20 = vector.load %arg20[%c1, %c0_12, %c0_13] : memref<4x8x1xf32, #tpu.memory_space<vmem>>, vector<1x8x1xf32>
      %21 = vector.shape_cast %20 : vector<1x8x1xf32> to vector<8x1xf32>
      %22 = tpu.reciprocal %21 {approx = true} : vector<8x1xf32> -> vector<8x1xf32>
      %23 = vector.broadcast %22 : vector<8x1xf32> to vector<8x8xf32>
      %24 = arith.mulf %19, %23 : vector<8x8xf32>
      %c0_14 = arith.constant 0 : index
      %c8_15 = arith.constant 8 : index
      %25 = vector.load %arg21[%c0_14, %c8_15] : memref<8x32xf32, #tpu.memory_space<vmem>>, vector<8x8xf32>
      tpu.vector_store %arg21[%c0_14, %c8_15], %24 {strides = array<i32>} : memref<8x32xf32, #tpu.memory_space<vmem>>, vector<8x8xf32>,
      %c0_16 = arith.constant 0 : index
      %c16 = arith.constant 16 : index
      %26 = vector.load %arg21[%c0_16, %c16] : memref<8x32xf32, #tpu.memory_space<vmem>>, vector<8x8xf32>
      %c2 = arith.constant 2 : index
      %c0_17 = arith.constant 0 : index
      %c0_18 = arith.constant 0 : index
      %27 = vector.load %arg20[%c2, %c0_17, %c0_18] : memref<4x8x1xf32, #tpu.memory_space<vmem>>, vector<1x8x1xf32>
      %28 = vector.shape_cast %27 : vector<1x8x1xf32> to vector<8x1xf32>
      %29 = tpu.reciprocal %28 {approx = true} : vector<8x1xf32> -> vector<8x1xf32>
      %30 = vector.broadcast %29 : vector<8x1xf32> to vector<8x8xf32>
      %31 = arith.mulf %26, %30 : vector<8x8xf32>
      %c0_19 = arith.constant 0 : index
      %c16_20 = arith.constant 16 : index
      %32 = vector.load %arg21[%c0_19, %c16_20] : memref<8x32xf32, #tpu.memory_space<vmem>>, vector<8x8xf32>
      tpu.vector_store %arg21[%c0_19, %c16_20], %31 {strides = array<i32>} : memref<8x32xf32, #tpu.memory_space<vmem>>, vector<8x8xf32>,
      %c0_21 = arith.constant 0 : index
      %c24 = arith.constant 24 : index
      %33 = vector.load %arg21[%c0_21, %c24] : memref<8x32xf32, #tpu.memory_space<vmem>>, vector<8x8xf32>
      %c3 = arith.constant 3 : index
      %c0_22 = arith.constant 0 : index
      %c0_23 = arith.constant 0 : index
      %34 = vector.load %arg20[%c3, %c0_22, %c0_23] : memref<4x8x1xf32, #tpu.memory_space<vmem>>, vector<1x8x1xf32>
      %35 = vector.shape_cast %34 : vector<1x8x1xf32> to vector<8x1xf32>
      %36 = tpu.reciprocal %35 {approx = true} : vector<8x1xf32> -> vector<8x1xf32>
      %37 = vector.broadcast %36 : vector<8x1xf32> to vector<8x8xf32>
      %38 = arith.mulf %33, %37 : vector<8x8xf32>
      %c0_24 = arith.constant 0 : index
      %c24_25 = arith.constant 24 : index
      %39 = vector.load %arg21[%c0_24, %c24_25] : memref<8x32xf32, #tpu.memory_space<vmem>>, vector<8x8xf32>
      tpu.vector_store %arg21[%c0_24, %c24_25], %38 {strides = array<i32>} : memref<8x32xf32, #tpu.memory_space<vmem>>, vector<8x8xf32>,
      %c0_26 = arith.constant 0 : index
      %c0_27 = arith.constant 0 : index
      %40 = vector.load %arg21[%c0_26, %c0_27] : memref<8x32xf32, #tpu.memory_space<vmem>>, vector<8x32xf32>
      %41 = arith.truncf %40 : vector<8x32xf32> to vector<8x32xbf16>
      %c0_28 = arith.constant 0 : index
      %c0_29 = arith.constant 0 : index
      %42 = vector.load %arg7[%c0_28, %c0_29] : memref<32x32xbf16, #tpu.memory_space<vmem>>, vector<32x32xbf16>
      %cst = arith.constant dense<0.000000e+00> : vector<8x32xf32>
      %43 = tpu.matmul %41, %42, %cst {dimension_numbers = #tpu.dot_dimension_numbers<[1], [0], [0], [1], [0, 0, 1, 1], [], []>} : vector<8x32xbf16>, vector<32x32xbf16>, vector<8x32xf32> -> vector<8x32xf32>
      %c0_30 = arith.constant 0 : index
      %c0_31 = arith.constant 0 : index
      %44 = vector.load %arg8[%c0_30, %c0_31] : memref<1x32xf32, #tpu.memory_space<vmem>>, vector<1x32xf32>
      %45 = vector.broadcast %44 : vector<1x32xf32> to vector<8x32xf32>
      %46 = arith.addf %43, %45 : vector<8x32xf32>
      %c0_32 = arith.constant 0 : index
      %c0_33 = arith.constant 0 : index
      %c0_34 = arith.constant 0 : index
      %47 = vector.load %arg3[%c0_32, %c0_33, %c0_34] : memref<1x8x32xf32, #tpu.memory_space<vmem>>, vector<1x8x32xf32>
      %48 = vector.shape_cast %47 : vector<1x8x32xf32> to vector<8x32xf32>
      %49 = arith.addf %46, %48 : vector<8x32xf32>
      %c0_35 = arith.constant 0 : index
      %c0_36 = arith.constant 0 : index
      %50 = vector.load %arg9[%c0_35, %c0_36] : memref<1x32xf32, #tpu.memory_space<vmem>>, vector<1x32xf32>
      %c0_37 = arith.constant 0 : index
      %c0_38 = arith.constant 0 : index
      %51 = vector.load %arg10[%c0_37, %c0_38] : memref<1x32xf32, #tpu.memory_space<vmem>>, vector<1x32xf32>
      %cst_39 = arith.constant dense<0.000000e+00> : vector<8xf32>
      %52 = vector.multi_reduction <add>, %49, %cst_39 [1] : vector<8x32xf32> to vector<8xf32>
      %53 = vector.shape_cast %52 : vector<8xf32> to vector<8x1xf32>
      %cst_40 = arith.constant 3.200000e+01 : f32
      %54 = vector.broadcast %cst_40 : f32 to vector<8x1xf32>
      %55 = arith.divf %53, %54 : vector<8x1xf32>
      %56 = vector.broadcast %55 : vector<8x1xf32> to vector<8x32xf32>
      %57 = arith.subf %49, %56 : vector<8x32xf32>
      %58 = arith.mulf %57, %57 : vector<8x32xf32>
      %cst_41 = arith.constant dense<0.000000e+00> : vector<8xf32>
      %59 = vector.multi_reduction <add>, %58, %cst_41 [1] : vector<8x32xf32> to vector<8xf32>
      %60 = vector.shape_cast %59 : vector<8xf32> to vector<8x1xf32>
      %cst_42 = arith.constant 3.200000e+01 : f32
      %61 = vector.broadcast %cst_42 : f32 to vector<8x1xf32>
      %62 = arith.divf %60, %61 : vector<8x1xf32>
      %63 = vector.broadcast %55 : vector<8x1xf32> to vector<8x32xf32>
      %64 = arith.subf %49, %63 : vector<8x32xf32>
      %cst_43 = arith.constant 9.99999974E-6 : f32
      %65 = vector.broadcast %cst_43 : f32 to vector<8x1xf32>
      %66 = arith.addf %62, %65 : vector<8x1xf32>
      %67 = math.rsqrt %66 : vector<8x1xf32>
      %68 = vector.broadcast %67 : vector<8x1xf32> to vector<8x32xf32>
      %69 = arith.mulf %64, %68 : vector<8x32xf32>
      %70 = vector.broadcast %50 : vector<1x32xf32> to vector<8x32xf32>
      %71 = arith.mulf %69, %70 : vector<8x32xf32>
      %72 = vector.broadcast %51 : vector<1x32xf32> to vector<8x32xf32>
      %73 = arith.addf %71, %72 : vector<8x32xf32>
      %74 = arith.truncf %73 : vector<8x32xf32> to vector<8x32xbf16>
      %c0_44 = arith.constant 0 : index
      %c0_45 = arith.constant 0 : index
      %75 = vector.load %arg13[%c0_44, %c0_45] : memref<32x128xbf16, #tpu.memory_space<vmem>>, vector<32x128xbf16>
      %cst_46 = arith.constant dense<0.000000e+00> : vector<8x128xf32>
      %76 = tpu.matmul %74, %75, %cst_46 {dimension_numbers = #tpu.dot_dimension_numbers<[1], [0], [0], [1], [0, 0, 1, 1], [], []>} : vector<8x32xbf16>, vector<32x128xbf16>, vector<8x128xf32> -> vector<8x128xf32>
      %c0_47 = arith.constant 0 : index
      %c0_48 = arith.constant 0 : index
      %77 = vector.load %arg14[%c0_47, %c0_48] : memref<1x128xf32, #tpu.memory_space<vmem>>, vector<1x128xf32>
      %78 = vector.broadcast %77 : vector<1x128xf32> to vector<8x128xf32>
      %79 = arith.addf %76, %78 : vector<8x128xf32>
      %cst_49 = arith.constant 0.000000e+00 : f32
      %80 = vector.broadcast %cst_49 : f32 to vector<8x128xf32>
      %81 = arith.maximumf %79, %80 : vector<8x128xf32>
      %82 = arith.truncf %81 : vector<8x128xf32> to vector<8x128xbf16>
      %c0_50 = arith.constant 0 : index
      %c0_51 = arith.constant 0 : index
      %83 = vector.load %arg15[%c0_50, %c0_51] : memref<128x32xbf16, #tpu.memory_space<vmem>>, vector<128x32xbf16>
      %cst_52 = arith.constant dense<0.000000e+00> : vector<8x32xf32>
      %84 = tpu.matmul %82, %83, %cst_52 {dimension_numbers = #tpu.dot_dimension_numbers<[1], [0], [0], [1], [0, 0, 1, 1], [], []>} : vector<8x128xbf16>, vector<128x32xbf16>, vector<8x32xf32> -> vector<8x32xf32>
      %c0_53 = arith.constant 0 : index
      %c0_54 = arith.constant 0 : index
      %85 = vector.load %arg16[%c0_53, %c0_54] : memref<1x32xf32, #tpu.memory_space<vmem>>, vector<1x32xf32>
      %86 = vector.broadcast %85 : vector<1x32xf32> to vector<8x32xf32>
      %87 = arith.addf %84, %86 : vector<8x32xf32>
      %88 = arith.addf %87, %73 : vector<8x32xf32>
      %c0_55 = arith.constant 0 : index
      %c0_56 = arith.constant 0 : index
      %89 = vector.load %arg11[%c0_55, %c0_56] : memref<1x32xf32, #tpu.memory_space<vmem>>, vector<1x32xf32>
      %c0_57 = arith.constant 0 : index
      %c0_58 = arith.constant 0 : index
      %90 = vector.load %arg12[%c0_57, %c0_58] : memref<1x32xf32, #tpu.memory_space<vmem>>, vector<1x32xf32>
      %cst_59 = arith.constant dense<0.000000e+00> : vector<8xf32>
      %91 = vector.multi_reduction <add>, %88, %cst_59 [1] : vector<8x32xf32> to vector<8xf32>
      %92 = vector.shape_cast %91 : vector<8xf32> to vector<8x1xf32>
      %cst_60 = arith.constant 3.200000e+01 : f32
      %93 = vector.broadcast %cst_60 : f32 to vector<8x1xf32>
      %94 = arith.divf %92, %93 : vector<8x1xf32>
      %95 = vector.broadcast %94 : vector<8x1xf32> to vector<8x32xf32>
      %96 = arith.subf %88, %95 : vector<8x32xf32>
      %97 = arith.mulf %96, %96 : vector<8x32xf32>
      %cst_61 = arith.constant dense<0.000000e+00> : vector<8xf32>
      %98 = vector.multi_reduction <add>, %97, %cst_61 [1] : vector<8x32xf32> to vector<8xf32>
      %99 = vector.shape_cast %98 : vector<8xf32> to vector<8x1xf32>
      %cst_62 = arith.constant 3.200000e+01 : f32
      %100 = vector.broadcast %cst_62 : f32 to vector<8x1xf32>
      %101 = arith.divf %99, %100 : vector<8x1xf32>
      %102 = vector.broadcast %94 : vector<8x1xf32> to vector<8x32xf32>
      %103 = arith.subf %88, %102 : vector<8x32xf32>
      %cst_63 = arith.constant 9.99999974E-6 : f32
      %104 = vector.broadcast %cst_63 : f32 to vector<8x1xf32>
      %105 = arith.addf %101, %104 : vector<8x1xf32>
      %106 = math.rsqrt %105 : vector<8x1xf32>
      %107 = vector.broadcast %106 : vector<8x1xf32> to vector<8x32xf32>
      %108 = arith.mulf %103, %107 : vector<8x32xf32>
      %109 = vector.broadcast %89 : vector<1x32xf32> to vector<8x32xf32>
      %110 = arith.mulf %108, %109 : vector<8x32xf32>
      %111 = vector.broadcast %90 : vector<1x32xf32> to vector<8x32xf32>
      %112 = arith.addf %110, %111 : vector<8x32xf32>
      %c0_64 = arith.constant 0 : index
      %c0_65 = arith.constant 0 : index
      %c0_66 = arith.constant 0 : index
      %113 = vector.load %arg17[%c0_64, %c0_65, %c0_66] : memref<1x8x32xf32, #tpu.memory_space<vmem>>, vector<1x8x32xf32>
      %114 = vector.shape_cast %113 : vector<1x8x32xf32> to vector<8x32xf32>
      %115 = vector.shape_cast %112 : vector<8x32xf32> to vector<1x8x32xf32>
      tpu.vector_store %arg17[%c0_64, %c0_65, %c0_66], %115 {strides = array<i32>} : memref<1x8x32xf32, #tpu.memory_space<vmem>>, vector<1x8x32xf32>,
    } else {
    }
    return
  }
  func.func @transform_0(%arg0: i32, %arg1: i32, %arg2: i32) -> (i32, i32, i32) {
    %c0_i32 = arith.constant 0 : i32
    %c0_i32_0 = arith.constant 0 : i32
    return %arg0, %arg1, %c0_i32 : i32, i32, i32
  }
  func.func @transform_1(%arg0: i32, %arg1: i32, %arg2: i32) -> (i32, i32, i32) {
    %c0_i32 = arith.constant 0 : i32
    %c0_i32_0 = arith.constant 0 : i32
    return %arg0, %arg2, %c0_i32 : i32, i32, i32
  }
  func.func @transform_2(%arg0: i32, %arg1: i32, %arg2: i32) -> (i32, i32, i32) {
    %c0_i32 = arith.constant 0 : i32
    %c0_i32_0 = arith.constant 0 : i32
    return %arg0, %arg2, %c0_i32 : i32, i32, i32
  }
  func.func @transform_3(%arg0: i32, %arg1: i32, %arg2: i32) -> (i32, i32) {
    %c0_i32 = arith.constant 0 : i32
    %c0_i32_0 = arith.constant 0 : i32
    %c0_i32_1 = arith.constant 0 : i32
    return %c0_i32, %c0_i32_0 : i32, i32
  }
  func.func @transform_4(%arg0: i32, %arg1: i32, %arg2: i32) -> (i32, i32) {
    %c0_i32 = arith.constant 0 : i32
    %c0_i32_0 = arith.constant 0 : i32
    %c0_i32_1 = arith.constant 0 : i32
    return %c0_i32, %c0_i32_0 : i32, i32
  }
  func.func @transform_5(%arg0: i32, %arg1: i32, %arg2: i32) -> (i32, i32) {
    %c0_i32 = arith.constant 0 : i32
    %c0_i32_0 = arith.constant 0 : i32
    %c0_i32_1 = arith.constant 0 : i32
    return %c0_i32, %c0_i32_0 : i32, i32
  }
  func.func @transform_6(%arg0: i32, %arg1: i32, %arg2: i32) -> (i32, i32) {
    %c0_i32 = arith.constant 0 : i32
    %c0_i32_0 = arith.constant 0 : i32
    %c0_i32_1 = arith.constant 0 : i32
    return %c0_i32, %c0_i32_0 : i32, i32
  }
  func.func @transform_7(%arg0: i32, %arg1: i32, %arg2: i32) -> (i32, i32) {
    %c0_i32 = arith.constant 0 : i32
    %c0_i32_0 = arith.constant 0 : i32
    %c0_i32_1 = arith.constant 0 : i32
    return %c0_i32, %c0_i32_0 : i32, i32
  }
  func.func @transform_8(%arg0: i32, %arg1: i32, %arg2: i32) -> (i32, i32) {
    %c0_i32 = arith.constant 0 : i32
    %c0_i32_0 = arith.constant 0 : i32
    %c0_i32_1 = arith.constant 0 : i32
    return %c0_i32, %c0_i32_0 : i32, i32
  }
  func.func @transform_9(%arg0: i32, %arg1: i32, %arg2: i32) -> (i32, i32) {
    %c0_i32 = arith.constant 0 : i32
    %c0_i32_0 = arith.constant 0 : i32
    %c0_i32_1 = arith.constant 0 : i32
    return %c0_i32, %c0_i32_0 : i32, i32
  }
  func.func @transform_10(%arg0: i32, %arg1: i32, %arg2: i32) -> (i32, i32) {
    %c0_i32 = arith.constant 0 : i32
    %c0_i32_0 = arith.constant 0 : i32
    %c0_i32_1 = arith.constant 0 : i32
    return %c0_i32, %c0_i32_0 : i32, i32
  }
  func.func @transform_11(%arg0: i32, %arg1: i32, %arg2: i32) -> (i32, i32) {
    %c0_i32 = arith.constant 0 : i32
    %c0_i32_0 = arith.constant 0 : i32
    %c0_i32_1 = arith.constant 0 : i32
    return %c0_i32, %c0_i32_0 : i32, i32
  }
  func.func @transform_12(%arg0: i32, %arg1: i32, %arg2: i32) -> (i32, i32) {
    %c0_i32 = arith.constant 0 : i32
    %c0_i32_0 = arith.constant 0 : i32
    %c0_i32_1 = arith.constant 0 : i32
    return %c0_i32, %c0_i32_0 : i32, i32
  }
  func.func @transform_13(%arg0: i32, %arg1: i32, %arg2: i32) -> (i32, i32) {
    %c0_i32 = arith.constant 0 : i32
    %c0_i32_0 = arith.constant 0 : i32
    %c0_i32_1 = arith.constant 0 : i32
    return %c0_i32, %c0_i32_0 : i32, i32
  }
  func.func @transform_14(%arg0: i32, %arg1: i32, %arg2: i32) -> (i32, i32, i32) {
    %c0_i32 = arith.constant 0 : i32
    %c0_i32_0 = arith.constant 0 : i32
    return %arg0, %arg1, %c0_i32 : i32, i32, i32
  }
}

module attributes {stable_mosaic.version = 11 : i64} {
  func.func @_transformer_block_kernel(%arg0: i32, %arg1: i32, %arg2: i32, %arg3: memref<1x8x32xf32, #tpu.memory_space<vmem>>, %arg4: memref<1x8x32xbf16, #tpu.memory_space<vmem>>, %arg5: memref<1x8x32xbf16, #tpu.memory_space<vmem>>, %arg6: memref<32x32xbf16, #tpu.memory_space<vmem>>, %arg7: memref<32x32xbf16, #tpu.memory_space<vmem>>, %arg8: memref<1x32xf32, #tpu.memory_space<vmem>>, %arg9: memref<1x32xf32, #tpu.memory_space<vmem>>, %arg10: memref<1x32xf32, #tpu.memory_space<vmem>>, %arg11: memref<1x32xf32, #tpu.memory_space<vmem>>, %arg12: memref<1x32xf32, #tpu.memory_space<vmem>>, %arg13: memref<32x128xbf16, #tpu.memory_space<vmem>>, %arg14: memref<1x128xf32, #tpu.memory_space<vmem>>, %arg15: memref<128x32xbf16, #tpu.memory_space<vmem>>, %arg16: memref<1x32xf32, #tpu.memory_space<vmem>>, %arg17: memref<1x8x32xf32, #tpu.memory_space<vmem>>, %arg18: memref<8x32xbf16, #tpu.memory_space<vmem>>, %arg19: memref<4x8x1xf32, #tpu.memory_space<vmem>>, %arg20: memref<4x8x1xf32, #tpu.memory_space<vmem>>, %arg21: memref<8x32xf32, #tpu.memory_space<vmem>>) attributes {dimension_semantics = [#tpu.dimension_semantics<parallel>, #tpu.dimension_semantics<parallel>, #tpu.dimension_semantics<arbitrary>], iteration_bounds = array<i64: 2, 1, 1>, scalar_prefetch = 0 : i64, scratch_operands = 4 : i64, tpu.core_type = #tpu.core_type<tc>, window_params = [{transform_indices = @transform_0, window_bounds = array<i64: 1, 8, 32>}, {transform_indices = @transform_1, window_bounds = array<i64: 1, 8, 32>}, {transform_indices = @transform_2, window_bounds = array<i64: 1, 8, 32>}, {pipeline_mode = #tpu.pipeline_mode<synchronous>, transform_indices = @transform_3, window_bounds = array<i64: 32, 32>}, {pipeline_mode = #tpu.pipeline_mode<synchronous>, transform_indices = @transform_4, window_bounds = array<i64: 32, 32>}, {pipeline_mode = #tpu.pipeline_mode<synchronous>, transform_indices = @transform_5, window_bounds = array<i64: 1, 32>}, {pipeline_mode = #tpu.pipeline_mode<synchronous>, transform_indices = @transform_6, window_bounds = array<i64: 1, 32>}, {pipeline_mode = #tpu.pipeline_mode<synchronous>, transform_indices = @transform_7, window_bounds = array<i64: 1, 32>}, {pipeline_mode = #tpu.pipeline_mode<synchronous>, transform_indices = @transform_8, window_bounds = array<i64: 1, 32>}, {pipeline_mode = #tpu.pipeline_mode<synchronous>, transform_indices = @transform_9, window_bounds = array<i64: 1, 32>}, {pipeline_mode = #tpu.pipeline_mode<synchronous>, transform_indices = @transform_10, window_bounds = array<i64: 32, 128>}, {pipeline_mode = #tpu.pipeline_mode<synchronous>, transform_indices = @transform_11, window_bounds = array<i64: 1, 128>}, {pipeline_mode = #tpu.pipeline_mode<synchronous>, transform_indices = @transform_12, window_bounds = array<i64: 128, 32>}, {pipeline_mode = #tpu.pipeline_mode<synchronous>, transform_indices = @transform_13, window_bounds = array<i64: 1, 32>}, {transform_indices = @transform_14, window_bounds = array<i64: 1, 8, 32>}]} {
    %c0_i32 = arith.constant 0 : i32
    %0 = arith.cmpi eq, %arg2, %c0_i32 : i32
    %1 = arith.extui %0 : i1 to i32
    %c0_i32_0 = arith.constant 0 : i32
    %2 = arith.cmpi ne, %1, %c0_i32_0 : i32
    scf.if %2 {
      %cst = arith.constant 0xFF800000 : f32
      %12 = vector.broadcast %cst : f32 to vector<4x8x1xf32>
      %c0 = arith.constant 0 : index
      %c0_5 = arith.constant 0 : index
      %c0_6 = arith.constant 0 : index
      %13 = vector.load %arg19[%c0, %c0_5, %c0_6] : memref<4x8x1xf32, #tpu.memory_space<vmem>>, vector<4x8x1xf32>
      tpu.vector_store %arg19[%c0, %c0_5, %c0_6], %12 {strides = array<i32>} : memref<4x8x1xf32, #tpu.memory_space<vmem>>, vector<4x8x1xf32>,
      %cst_7 = arith.constant 0.000000e+00 : f32
      %14 = vector.broadcast %cst_7 : f32 to vector<4x8x1xf32>
      %c0_8 = arith.constant 0 : index
      %c0_9 = arith.constant 0 : index
      %c0_10 = arith.constant 0 : index
      %15 = vector.load %arg20[%c0_8, %c0_9, %c0_10] : memref<4x8x1xf32, #tpu.memory_space<vmem>>, vector<4x8x1xf32>
      tpu.vector_store %arg20[%c0_8, %c0_9, %c0_10], %14 {strides = array<i32>} : memref<4x8x1xf32, #tpu.memory_space<vmem>>, vector<4x8x1xf32>,
      %cst_11 = arith.constant 0.000000e+00 : f32
      %16 = vector.broadcast %cst_11 : f32 to vector<8x32xf32>
      %c0_12 = arith.constant 0 : index
      %c0_13 = arith.constant 0 : index
      %17 = vector.load %arg21[%c0_12, %c0_13] : memref<8x32xf32, #tpu.memory_space<vmem>>, vector<8x32xf32>
      tpu.vector_store %arg21[%c0_12, %c0_13], %16 {strides = array<i32>} : memref<8x32xf32, #tpu.memory_space<vmem>>, vector<8x32xf32>,
      %c0_14 = arith.constant 0 : index
      %c0_15 = arith.constant 0 : index
      %c0_16 = arith.constant 0 : index
      %18 = vector.load %arg3[%c0_14, %c0_15, %c0_16] : memref<1x8x32xf32, #tpu.memory_space<vmem>>, vector<1x8x32xf32>
      %19 = vector.shape_cast %18 : vector<1x8x32xf32> to vector<8x32xf32>
      %20 = arith.truncf %19 : vector<8x32xf32> to vector<8x32xbf16>
      %c0_17 = arith.constant 0 : index
      %c0_18 = arith.constant 0 : index
      %21 = vector.load %arg6[%c0_17, %c0_18] : memref<32x32xbf16, #tpu.memory_space<vmem>>, vector<32x32xbf16>
      %cst_19 = arith.constant dense<0.000000e+00> : vector<8x32xf32>
      %22 = tpu.matmul %20, %21, %cst_19 {dimension_numbers = #tpu.dot_dimension_numbers<[1], [0], [0], [1], [0, 0, 1, 1], [], []>} : vector<8x32xbf16>, vector<32x32xbf16>, vector<8x32xf32> -> vector<8x32xf32>
      %23 = arith.truncf %22 : vector<8x32xf32> to vector<8x32xbf16>
      %c0_20 = arith.constant 0 : index
      %c0_21 = arith.constant 0 : index
      %24 = vector.load %arg18[%c0_20, %c0_21] : memref<8x32xbf16, #tpu.memory_space<vmem>>, vector<8x32xbf16>
      tpu.vector_store %arg18[%c0_20, %c0_21], %23 {strides = array<i32>} : memref<8x32xbf16, #tpu.memory_space<vmem>>, vector<8x32xbf16>,
    } else {
    }
    %c8_i32 = arith.constant 8 : i32
    %3 = arith.muli %arg2, %c8_i32 : i32
    %c8_i32_1 = arith.constant 8 : i32
    %4 = arith.muli %arg1, %c8_i32_1 : i32
    %c7_i32 = arith.constant 7 : i32
    %5 = arith.addi %4, %c7_i32 : i32
    %6 = arith.cmpi sle, %3, %5 : i32
    %7 = arith.extui %6 : i1 to i32
    %c0_i32_2 = arith.constant 0 : i32
    %8 = arith.cmpi ne, %7, %c0_i32_2 : i32
    scf.if %8 {
      %c0 = arith.constant 0 : index
      %c0_5 = arith.constant 0 : index
      %c0_6 = arith.constant 0 : index
      %12 = vector.load %arg4[%c0, %c0_5, %c0_6] : memref<1x8x32xbf16, #tpu.memory_space<vmem>>, vector<1x8x32xbf16>
      %13 = vector.shape_cast %12 : vector<1x8x32xbf16> to vector<8x32xbf16>
      %c0_7 = arith.constant 0 : index
      %c0_8 = arith.constant 0 : index
      %c0_9 = arith.constant 0 : index
      %14 = vector.load %arg5[%c0_7, %c0_8, %c0_9] : memref<1x8x32xbf16, #tpu.memory_space<vmem>>, vector<1x8x32xbf16>
      %15 = vector.shape_cast %14 : vector<1x8x32xbf16> to vector<8x32xbf16>
      %c0_10 = arith.constant 0 : index
      %c0_11 = arith.constant 0 : index
      %16 = vector.load %arg18[%c0_10, %c0_11] : memref<8x32xbf16, #tpu.memory_space<vmem>>, vector<8x32xbf16>
      %c8_i32_12 = arith.constant 8 : i32
      %17 = arith.muli %arg1, %c8_i32_12 : i32
      %18 = tpu.iota {dimensions = array<i32: 0>} : vector<8x8xi32>
      %19 = vector.broadcast %17 : i32 to vector<8x8xi32>
      %20 = arith.addi %19, %18 : vector<8x8xi32>
      %c8_i32_13 = arith.constant 8 : i32
      %21 = arith.muli %arg2, %c8_i32_13 : i32
      %22 = tpu.iota {dimensions = array<i32: 1>} : vector<8x8xi32>
      %23 = vector.broadcast %21 : i32 to vector<8x8xi32>
      %24 = arith.addi %23, %22 : vector<8x8xi32>
      %25 = arith.cmpi sgt, %24, %20 : vector<8x8xi32>
      %cst = arith.constant -1.000000e+20 : f32
      %cst_14 = arith.constant 0.000000e+00 : f32
      %26 = vector.broadcast %cst : f32 to vector<8x8xf32>
      %27 = vector.broadcast %cst_14 : f32 to vector<8x8xf32>
      %28 = arith.select %25, %26, %27 : vector<8x8xi1>, vector<8x8xf32>
      %29 = vector.extract_strided_slice %16 {offsets = [0, 0], sizes = [8, 8], strides = [1, 1]} : vector<8x32xbf16> to vector<8x8xbf16>
      %30 = vector.extract_strided_slice %13 {offsets = [0, 0], sizes = [8, 8], strides = [1, 1]} : vector<8x32xbf16> to vector<8x8xbf16>
      %31 = vector.extract_strided_slice %15 {offsets = [0, 0], sizes = [8, 8], strides = [1, 1]} : vector<8x32xbf16> to vector<8x8xbf16>
      %cst_15 = arith.constant dense<0.000000e+00> : vector<8x8xf32>
      %32 = tpu.matmul %29, %30, %cst_15 {dimension_numbers = #tpu.dot_dimension_numbers<[1], [1], [0], [0], [0, 0, 1, 0], [], []>} : vector<8x8xbf16>, vector<8x8xbf16>, vector<8x8xf32> -> vector<8x8xf32>
      %33 = arith.addf %32, %28 : vector<8x8xf32>
      %c0_16 = arith.constant 0 : index
      %c0_17 = arith.constant 0 : index
      %c0_18 = arith.constant 0 : index
      %34 = vector.load %arg19[%c0_16, %c0_17, %c0_18] : memref<4x8x1xf32, #tpu.memory_space<vmem>>, vector<1x8x1xf32>
      %35 = vector.shape_cast %34 : vector<1x8x1xf32> to vector<8x1xf32>
      %cst_19 = arith.constant dense<0xFF800000> : vector<8xf32>
      %36 = vector.multi_reduction <maximumf>, %33, %cst_19 [1] : vector<8x8xf32> to vector<8xf32>
      %37 = vector.shape_cast %36 : vector<8xf32> to vector<8x1xf32>
      %38 = arith.maximumf %35, %37 : vector<8x1xf32>
      %39 = arith.subf %35, %38 : vector<8x1xf32>
      %40 = math.exp %39 : vector<8x1xf32>
      %41 = vector.broadcast %38 : vector<8x1xf32> to vector<8x8xf32>
      %42 = arith.subf %33, %41 : vector<8x8xf32>
      %43 = math.exp %42 : vector<8x8xf32>
      %c0_20 = arith.constant 0 : index
      %c0_21 = arith.constant 0 : index
      %c0_22 = arith.constant 0 : index
      %44 = vector.load %arg20[%c0_20, %c0_21, %c0_22] : memref<4x8x1xf32, #tpu.memory_space<vmem>>, vector<1x8x1xf32>
      %45 = vector.shape_cast %44 : vector<1x8x1xf32> to vector<8x1xf32>
      %46 = arith.mulf %40, %45 : vector<8x1xf32>
      %cst_23 = arith.constant dense<0.000000e+00> : vector<8xf32>
      %47 = vector.multi_reduction <add>, %43, %cst_23 [1] : vector<8x8xf32> to vector<8xf32>
      %48 = vector.shape_cast %47 : vector<8xf32> to vector<8x1xf32>
      %49 = arith.addf %46, %48 : vector<8x1xf32>
      %c0_24 = arith.constant 0 : index
      %c0_25 = arith.constant 0 : index
      %c0_26 = arith.constant 0 : index
      %50 = vector.load %arg20[%c0_24, %c0_25, %c0_26] : memref<4x8x1xf32, #tpu.memory_space<vmem>>, vector<1x8x1xf32>
      %51 = vector.shape_cast %50 : vector<1x8x1xf32> to vector<8x1xf32>
      %52 = vector.shape_cast %49 : vector<8x1xf32> to vector<1x8x1xf32>
      tpu.vector_store %arg20[%c0_24, %c0_25, %c0_26], %52 {strides = array<i32>} : memref<4x8x1xf32, #tpu.memory_space<vmem>>, vector<1x8x1xf32>,
      %c0_27 = arith.constant 0 : index
      %c0_28 = arith.constant 0 : index
      %53 = vector.load %arg21[%c0_27, %c0_28] : memref<8x32xf32, #tpu.memory_space<vmem>>, vector<8x8xf32>
      %54 = vector.broadcast %40 : vector<8x1xf32> to vector<8x8xf32>
      %55 = arith.mulf %54, %53 : vector<8x8xf32>
      %56 = arith.truncf %43 : vector<8x8xf32> to vector<8x8xbf16>
      %cst_29 = arith.constant dense<0.000000e+00> : vector<8x8xf32>
      %57 = tpu.matmul %56, %31, %cst_29 {dimension_numbers = #tpu.dot_dimension_numbers<[1], [0], [0], [1], [0, 0, 1, 1], [], []>} : vector<8x8xbf16>, vector<8x8xbf16>, vector<8x8xf32> -> vector<8x8xf32>
      %58 = arith.addf %55, %57 : vector<8x8xf32>
      %c0_30 = arith.constant 0 : index
      %c0_31 = arith.constant 0 : index
      %59 = vector.load %arg21[%c0_30, %c0_31] : memref<8x32xf32, #tpu.memory_space<vmem>>, vector<8x8xf32>
      tpu.vector_store %arg21[%c0_30, %c0_31], %58 {strides = array<i32>} : memref<8x32xf32, #tpu.memory_space<vmem>>, vector<8x8xf32>,
      %c0_32 = arith.constant 0 : index
      %c0_33 = arith.constant 0 : index
      %c0_34 = arith.constant 0 : index
      %60 = vector.load %arg19[%c0_32, %c0_33, %c0_34] : memref<4x8x1xf32, #tpu.memory_space<vmem>>, vector<1x8x1xf32>
      %61 = vector.shape_cast %60 : vector<1x8x1xf32> to vector<8x1xf32>
      %62 = vector.shape_cast %38 : vector<8x1xf32> to vector<1x8x1xf32>
      tpu.vector_store %arg19[%c0_32, %c0_33, %c0_34], %62 {strides = array<i32>} : memref<4x8x1xf32, #tpu.memory_space<vmem>>, vector<1x8x1xf32>,
      %63 = vector.extract_strided_slice %16 {offsets = [0, 8], sizes = [8, 8], strides = [1, 1]} : vector<8x32xbf16> to vector<8x8xbf16>
      %64 = vector.extract_strided_slice %13 {offsets = [0, 8], sizes = [8, 8], strides = [1, 1]} : vector<8x32xbf16> to vector<8x8xbf16>
      %65 = vector.extract_strided_slice %15 {offsets = [0, 8], sizes = [8, 8], strides = [1, 1]} : vector<8x32xbf16> to vector<8x8xbf16>
      %cst_35 = arith.constant dense<0.000000e+00> : vector<8x8xf32>
      %66 = tpu.matmul %63, %64, %cst_35 {dimension_numbers = #tpu.dot_dimension_numbers<[1], [1], [0], [0], [0, 0, 1, 0], [], []>} : vector<8x8xbf16>, vector<8x8xbf16>, vector<8x8xf32> -> vector<8x8xf32>
      %67 = arith.addf %66, %28 : vector<8x8xf32>
      %c1 = arith.constant 1 : index
      %c0_36 = arith.constant 0 : index
      %c0_37 = arith.constant 0 : index
      %68 = vector.load %arg19[%c1, %c0_36, %c0_37] : memref<4x8x1xf32, #tpu.memory_space<vmem>>, vector<1x8x1xf32>
      %69 = vector.shape_cast %68 : vector<1x8x1xf32> to vector<8x1xf32>
      %cst_38 = arith.constant dense<0xFF800000> : vector<8xf32>
      %70 = vector.multi_reduction <maximumf>, %67, %cst_38 [1] : vector<8x8xf32> to vector<8xf32>
      %71 = vector.shape_cast %70 : vector<8xf32> to vector<8x1xf32>
      %72 = arith.maximumf %69, %71 : vector<8x1xf32>
      %73 = arith.subf %69, %72 : vector<8x1xf32>
      %74 = math.exp %73 : vector<8x1xf32>
      %75 = vector.broadcast %72 : vector<8x1xf32> to vector<8x8xf32>
      %76 = arith.subf %67, %75 : vector<8x8xf32>
      %77 = math.exp %76 : vector<8x8xf32>
      %c1_39 = arith.constant 1 : index
      %c0_40 = arith.constant 0 : index
      %c0_41 = arith.constant 0 : index
      %78 = vector.load %arg20[%c1_39, %c0_40, %c0_41] : memref<4x8x1xf32, #tpu.memory_space<vmem>>, vector<1x8x1xf32>
      %79 = vector.shape_cast %78 : vector<1x8x1xf32> to vector<8x1xf32>
      %80 = arith.mulf %74, %79 : vector<8x1xf32>
      %cst_42 = arith.constant dense<0.000000e+00> : vector<8xf32>
      %81 = vector.multi_reduction <add>, %77, %cst_42 [1] : vector<8x8xf32> to vector<8xf32>
      %82 = vector.shape_cast %81 : vector<8xf32> to vector<8x1xf32>
      %83 = arith.addf %80, %82 : vector<8x1xf32>
      %c1_43 = arith.constant 1 : index
      %c0_44 = arith.constant 0 : index
      %c0_45 = arith.constant 0 : index
      %84 = vector.load %arg20[%c1_43, %c0_44, %c0_45] : memref<4x8x1xf32, #tpu.memory_space<vmem>>, vector<1x8x1xf32>
      %85 = vector.shape_cast %84 : vector<1x8x1xf32> to vector<8x1xf32>
      %86 = vector.shape_cast %83 : vector<8x1xf32> to vector<1x8x1xf32>
      tpu.vector_store %arg20[%c1_43, %c0_44, %c0_45], %86 {strides = array<i32>} : memref<4x8x1xf32, #tpu.memory_space<vmem>>, vector<1x8x1xf32>,
      %c0_46 = arith.constant 0 : index
      %c8 = arith.constant 8 : index
      %87 = vector.load %arg21[%c0_46, %c8] : memref<8x32xf32, #tpu.memory_space<vmem>>, vector<8x8xf32>
      %88 = vector.broadcast %74 : vector<8x1xf32> to vector<8x8xf32>
      %89 = arith.mulf %88, %87 : vector<8x8xf32>
      %90 = arith.truncf %77 : vector<8x8xf32> to vector<8x8xbf16>
      %cst_47 = arith.constant dense<0.000000e+00> : vector<8x8xf32>
      %91 = tpu.matmul %90, %65, %cst_47 {dimension_numbers = #tpu.dot_dimension_numbers<[1], [0], [0], [1], [0, 0, 1, 1], [], []>} : vector<8x8xbf16>, vector<8x8xbf16>, vector<8x8xf32> -> vector<8x8xf32>
      %92 = arith.addf %89, %91 : vector<8x8xf32>
      %c0_48 = arith.constant 0 : index
      %c8_49 = arith.constant 8 : index
      %93 = vector.load %arg21[%c0_48, %c8_49] : memref<8x32xf32, #tpu.memory_space<vmem>>, vector<8x8xf32>
      tpu.vector_store %arg21[%c0_48, %c8_49], %92 {strides = array<i32>} : memref<8x32xf32, #tpu.memory_space<vmem>>, vector<8x8xf32>,
      %c1_50 = arith.constant 1 : index
      %c0_51 = arith.constant 0 : index
      %c0_52 = arith.constant 0 : index
      %94 = vector.load %arg19[%c1_50, %c0_51, %c0_52] : memref<4x8x1xf32, #tpu.memory_space<vmem>>, vector<1x8x1xf32>
      %95 = vector.shape_cast %94 : vector<1x8x1xf32> to vector<8x1xf32>
      %96 = vector.shape_cast %72 : vector<8x1xf32> to vector<1x8x1xf32>
      tpu.vector_store %arg19[%c1_50, %c0_51, %c0_52], %96 {strides = array<i32>} : memref<4x8x1xf32, #tpu.memory_space<vmem>>, vector<1x8x1xf32>,
      %97 = vector.extract_strided_slice %16 {offsets = [0, 16], sizes = [8, 8], strides = [1, 1]} : vector<8x32xbf16> to vector<8x8xbf16>
      %98 = vector.extract_strided_slice %13 {offsets = [0, 16], sizes = [8, 8], strides = [1, 1]} : vector<8x32xbf16> to vector<8x8xbf16>
      %99 = vector.extract_strided_slice %15 {offsets = [0, 16], sizes = [8, 8], strides = [1, 1]} : vector<8x32xbf16> to vector<8x8xbf16>
      %cst_53 = arith.constant dense<0.000000e+00> : vector<8x8xf32>
      %100 = tpu.matmul %97, %98, %cst_53 {dimension_numbers = #tpu.dot_dimension_numbers<[1], [1], [0], [0], [0, 0, 1, 0], [], []>} : vector<8x8xbf16>, vector<8x8xbf16>, vector<8x8xf32> -> vector<8x8xf32>
      %101 = arith.addf %100, %28 : vector<8x8xf32>
      %c2 = arith.constant 2 : index
      %c0_54 = arith.constant 0 : index
      %c0_55 = arith.constant 0 : index
      %102 = vector.load %arg19[%c2, %c0_54, %c0_55] : memref<4x8x1xf32, #tpu.memory_space<vmem>>, vector<1x8x1xf32>
      %103 = vector.shape_cast %102 : vector<1x8x1xf32> to vector<8x1xf32>
      %cst_56 = arith.constant dense<0xFF800000> : vector<8xf32>
      %104 = vector.multi_reduction <maximumf>, %101, %cst_56 [1] : vector<8x8xf32> to vector<8xf32>
      %105 = vector.shape_cast %104 : vector<8xf32> to vector<8x1xf32>
      %106 = arith.maximumf %103, %105 : vector<8x1xf32>
      %107 = arith.subf %103, %106 : vector<8x1xf32>
      %108 = math.exp %107 : vector<8x1xf32>
      %109 = vector.broadcast %106 : vector<8x1xf32> to vector<8x8xf32>
      %110 = arith.subf %101, %109 : vector<8x8xf32>
      %111 = math.exp %110 : vector<8x8xf32>
      %c2_57 = arith.constant 2 : index
      %c0_58 = arith.constant 0 : index
      %c0_59 = arith.constant 0 : index
      %112 = vector.load %arg20[%c2_57, %c0_58, %c0_59] : memref<4x8x1xf32, #tpu.memory_space<vmem>>, vector<1x8x1xf32>
      %113 = vector.shape_cast %112 : vector<1x8x1xf32> to vector<8x1xf32>
      %114 = arith.mulf %108, %113 : vector<8x1xf32>
      %cst_60 = arith.constant dense<0.000000e+00> : vector<8xf32>
      %115 = vector.multi_reduction <add>, %111, %cst_60 [1] : vector<8x8xf32> to vector<8xf32>
      %116 = vector.shape_cast %115 : vector<8xf32> to vector<8x1xf32>
      %117 = arith.addf %114, %116 : vector<8x1xf32>
      %c2_61 = arith.constant 2 : index
      %c0_62 = arith.constant 0 : index
      %c0_63 = arith.constant 0 : index
      %118 = vector.load %arg20[%c2_61, %c0_62, %c0_63] : memref<4x8x1xf32, #tpu.memory_space<vmem>>, vector<1x8x1xf32>
      %119 = vector.shape_cast %118 : vector<1x8x1xf32> to vector<8x1xf32>
      %120 = vector.shape_cast %117 : vector<8x1xf32> to vector<1x8x1xf32>
      tpu.vector_store %arg20[%c2_61, %c0_62, %c0_63], %120 {strides = array<i32>} : memref<4x8x1xf32, #tpu.memory_space<vmem>>, vector<1x8x1xf32>,
      %c0_64 = arith.constant 0 : index
      %c16 = arith.constant 16 : index
      %121 = vector.load %arg21[%c0_64, %c16] : memref<8x32xf32, #tpu.memory_space<vmem>>, vector<8x8xf32>
      %122 = vector.broadcast %108 : vector<8x1xf32> to vector<8x8xf32>
      %123 = arith.mulf %122, %121 : vector<8x8xf32>
      %124 = arith.truncf %111 : vector<8x8xf32> to vector<8x8xbf16>
      %cst_65 = arith.constant dense<0.000000e+00> : vector<8x8xf32>
      %125 = tpu.matmul %124, %99, %cst_65 {dimension_numbers = #tpu.dot_dimension_numbers<[1], [0], [0], [1], [0, 0, 1, 1], [], []>} : vector<8x8xbf16>, vector<8x8xbf16>, vector<8x8xf32> -> vector<8x8xf32>
      %126 = arith.addf %123, %125 : vector<8x8xf32>
      %c0_66 = arith.constant 0 : index
      %c16_67 = arith.constant 16 : index
      %127 = vector.load %arg21[%c0_66, %c16_67] : memref<8x32xf32, #tpu.memory_space<vmem>>, vector<8x8xf32>
      tpu.vector_store %arg21[%c0_66, %c16_67], %126 {strides = array<i32>} : memref<8x32xf32, #tpu.memory_space<vmem>>, vector<8x8xf32>,
      %c2_68 = arith.constant 2 : index
      %c0_69 = arith.constant 0 : index
      %c0_70 = arith.constant 0 : index
      %128 = vector.load %arg19[%c2_68, %c0_69, %c0_70] : memref<4x8x1xf32, #tpu.memory_space<vmem>>, vector<1x8x1xf32>
      %129 = vector.shape_cast %128 : vector<1x8x1xf32> to vector<8x1xf32>
      %130 = vector.shape_cast %106 : vector<8x1xf32> to vector<1x8x1xf32>
      tpu.vector_store %arg19[%c2_68, %c0_69, %c0_70], %130 {strides = array<i32>} : memref<4x8x1xf32, #tpu.memory_space<vmem>>, vector<1x8x1xf32>,
      %131 = vector.extract_strided_slice %16 {offsets = [0, 24], sizes = [8, 8], strides = [1, 1]} : vector<8x32xbf16> to vector<8x8xbf16>
      %132 = vector.extract_strided_slice %13 {offsets = [0, 24], sizes = [8, 8], strides = [1, 1]} : vector<8x32xbf16> to vector<8x8xbf16>
      %133 = vector.extract_strided_slice %15 {offsets = [0, 24], sizes = [8, 8], strides = [1, 1]} : vector<8x32xbf16> to vector<8x8xbf16>
      %cst_71 = arith.constant dense<0.000000e+00> : vector<8x8xf32>
      %134 = tpu.matmul %131, %132, %cst_71 {dimension_numbers = #tpu.dot_dimension_numbers<[1], [1], [0], [0], [0, 0, 1, 0], [], []>} : vector<8x8xbf16>, vector<8x8xbf16>, vector<8x8xf32> -> vector<8x8xf32>
      %135 = arith.addf %134, %28 : vector<8x8xf32>
      %c3 = arith.constant 3 : index
      %c0_72 = arith.constant 0 : index
      %c0_73 = arith.constant 0 : index
      %136 = vector.load %arg19[%c3, %c0_72, %c0_73] : memref<4x8x1xf32, #tpu.memory_space<vmem>>, vector<1x8x1xf32>
      %137 = vector.shape_cast %136 : vector<1x8x1xf32> to vector<8x1xf32>
      %cst_74 = arith.constant dense<0xFF800000> : vector<8xf32>
      %138 = vector.multi_reduction <maximumf>, %135, %cst_74 [1] : vector<8x8xf32> to vector<8xf32>
      %139 = vector.shape_cast %138 : vector<8xf32> to vector<8x1xf32>
      %140 = arith.maximumf %137, %139 : vector<8x1xf32>
      %141 = arith.subf %137, %140 : vector<8x1xf32>
      %142 = math.exp %141 : vector<8x1xf32>
      %143 = vector.broadcast %140 : vector<8x1xf32> to vector<8x8xf32>
      %144 = arith.subf %135, %143 : vector<8x8xf32>
      %145 = math.exp %144 : vector<8x8xf32>
      %c3_75 = arith.constant 3 : index
      %c0_76 = arith.constant 0 : index
      %c0_77 = arith.constant 0 : index
      %146 = vector.load %arg20[%c3_75, %c0_76, %c0_77] : memref<4x8x1xf32, #tpu.memory_space<vmem>>, vector<1x8x1xf32>
      %147 = vector.shape_cast %146 : vector<1x8x1xf32> to vector<8x1xf32>
      %148 = arith.mulf %142, %147 : vector<8x1xf32>
      %cst_78 = arith.constant dense<0.000000e+00> : vector<8xf32>
      %149 = vector.multi_reduction <add>, %145, %cst_78 [1] : vector<8x8xf32> to vector<8xf32>
      %150 = vector.shape_cast %149 : vector<8xf32> to vector<8x1xf32>
      %151 = arith.addf %148, %150 : vector<8x1xf32>
      %c3_79 = arith.constant 3 : index
      %c0_80 = arith.constant 0 : index
      %c0_81 = arith.constant 0 : index
      %152 = vector.load %arg20[%c3_79, %c0_80, %c0_81] : memref<4x8x1xf32, #tpu.memory_space<vmem>>, vector<1x8x1xf32>
      %153 = vector.shape_cast %152 : vector<1x8x1xf32> to vector<8x1xf32>
      %154 = vector.shape_cast %151 : vector<8x1xf32> to vector<1x8x1xf32>
      tpu.vector_store %arg20[%c3_79, %c0_80, %c0_81], %154 {strides = array<i32>} : memref<4x8x1xf32, #tpu.memory_space<vmem>>, vector<1x8x1xf32>,
      %c0_82 = arith.constant 0 : index
      %c24 = arith.constant 24 : index
      %155 = vector.load %arg21[%c0_82, %c24] : memref<8x32xf32, #tpu.memory_space<vmem>>, vector<8x8xf32>
      %156 = vector.broadcast %142 : vector<8x1xf32> to vector<8x8xf32>
      %157 = arith.mulf %156, %155 : vector<8x8xf32>
      %158 = arith.truncf %145 : vector<8x8xf32> to vector<8x8xbf16>
      %cst_83 = arith.constant dense<0.000000e+00> : vector<8x8xf32>
      %159 = tpu.matmul %158, %133, %cst_83 {dimension_numbers = #tpu.dot_dimension_numbers<[1], [0], [0], [1], [0, 0, 1, 1], [], []>} : vector<8x8xbf16>, vector<8x8xbf16>, vector<8x8xf32> -> vector<8x8xf32>
      %160 = arith.addf %157, %159 : vector<8x8xf32>
      %c0_84 = arith.constant 0 : index
      %c24_85 = arith.constant 24 : index
      %161 = vector.load %arg21[%c0_84, %c24_85] : memref<8x32xf32, #tpu.memory_space<vmem>>, vector<8x8xf32>
      tpu.vector_store %arg21[%c0_84, %c24_85], %160 {strides = array<i32>} : memref<8x32xf32, #tpu.memory_space<vmem>>, vector<8x8xf32>,
      %c3_86 = arith.constant 3 : index
      %c0_87 = arith.constant 0 : index
      %c0_88 = arith.constant 0 : index
      %162 = vector.load %arg19[%c3_86, %c0_87, %c0_88] : memref<4x8x1xf32, #tpu.memory_space<vmem>>, vector<1x8x1xf32>
      %163 = vector.shape_cast %162 : vector<1x8x1xf32> to vector<8x1xf32>
      %164 = vector.shape_cast %140 : vector<8x1xf32> to vector<1x8x1xf32>
      tpu.vector_store %arg19[%c3_86, %c0_87, %c0_88], %164 {strides = array<i32>} : memref<4x8x1xf32, #tpu.memory_space<vmem>>, vector<1x8x1xf32>,
    } else {
    }
    %c0_i32_3 = arith.constant 0 : i32
    %9 = arith.cmpi eq, %arg2, %c0_i32_3 : i32
    %10 = arith.extui %9 : i1 to i32
    %c0_i32_4 = arith.constant 0 : i32
    %11 = arith.cmpi ne, %10, %c0_i32_4 : i32
    scf.if %11 {
      %c0 = arith.constant 0 : index
      %c0_5 = arith.constant 0 : index
      %12 = vector.load %arg21[%c0, %c0_5] : memref<8x32xf32, #tpu.memory_space<vmem>>, vector<8x8xf32>
      %c0_6 = arith.constant 0 : index
      %c0_7 = arith.constant 0 : index
      %c0_8 = arith.constant 0 : index
      %13 = vector.load %arg20[%c0_6, %c0_7, %c0_8] : memref<4x8x1xf32, #tpu.memory_space<vmem>>, vector<1x8x1xf32>
      %14 = vector.shape_cast %13 : vector<1x8x1xf32> to vector<8x1xf32>
      %15 = tpu.reciprocal %14 {approx = true} : vector<8x1xf32> -> vector<8x1xf32>
      %16 = vector.broadcast %15 : vector<8x1xf32> to vector<8x8xf32>
      %17 = arith.mulf %12, %16 : vector<8x8xf32>
      %c0_9 = arith.constant 0 : index
      %c0_10 = arith.constant 0 : index
      %18 = vector.load %arg21[%c0_9, %c0_10] : memref<8x32xf32, #tpu.memory_space<vmem>>, vector<8x8xf32>
      tpu.vector_store %arg21[%c0_9, %c0_10], %17 {strides = array<i32>} : memref<8x32xf32, #tpu.memory_space<vmem>>, vector<8x8xf32>,
      %c0_11 = arith.constant 0 : index
      %c8 = arith.constant 8 : index
      %19 = vector.load %arg21[%c0_11, %c8] : memref<8x32xf32, #tpu.memory_space<vmem>>, vector<8x8xf32>
      %c1 = arith.constant 1 : index
      %c0_12 = arith.constant 0 : index
      %c0_13 = arith.constant 0 : index
      %20 = vector.load %arg20[%c1, %c0_12, %c0_13] : memref<4x8x1xf32, #tpu.memory_space<vmem>>, vector<1x8x1xf32>
      %21 = vector.shape_cast %20 : vector<1x8x1xf32> to vector<8x1xf32>
      %22 = tpu.reciprocal %21 {approx = true} : vector<8x1xf32> -> vector<8x1xf32>
      %23 = vector.broadcast %22 : vector<8x1xf32> to vector<8x8xf32>
      %24 = arith.mulf %19, %23 : vector<8x8xf32>
      %c0_14 = arith.constant 0 : index
      %c8_15 = arith.constant 8 : index
      %25 = vector.load %arg21[%c0_14, %c8_15] : memref<8x32xf32, #tpu.memory_space<vmem>>, vector<8x8xf32>
      tpu.vector_store %arg21[%c0_14, %c8_15], %24 {strides = array<i32>} : memref<8x32xf32, #tpu.memory_space<vmem>>, vector<8x8xf32>,
      %c0_16 = arith.constant 0 : index
      %c16 = arith.constant 16 : index
      %26 = vector.load %arg21[%c0_16, %c16] : memref<8x32xf32, #tpu.memory_space<vmem>>, vector<8x8xf32>
      %c2 = arith.constant 2 : index
      %c0_17 = arith.constant 0 : index
      %c0_18 = arith.constant 0 : index
      %27 = vector.load %arg20[%c2, %c0_17, %c0_18] : memref<4x8x1xf32, #tpu.memory_space<vmem>>, vector<1x8x1xf32>
      %28 = vector.shape_cast %27 : vector<1x8x1xf32> to vector<8x1xf32>
      %29 = tpu.reciprocal %28 {approx = true} : vector<8x1xf32> -> vector<8x1xf32>
      %30 = vector.broadcast %29 : vector<8x1xf32> to vector<8x8xf32>
      %31 = arith.mulf %26, %30 : vector<8x8xf32>
      %c0_19 = arith.constant 0 : index
      %c16_20 = arith.constant 16 : index
      %32 = vector.load %arg21[%c0_19, %c16_20] : memref<8x32xf32, #tpu.memory_space<vmem>>, vector<8x8xf32>
      tpu.vector_store %arg21[%c0_19, %c16_20], %31 {strides = array<i32>} : memref<8x32xf32, #tpu.memory_space<vmem>>, vector<8x8xf32>,
      %c0_21 = arith.constant 0 : index
      %c24 = arith.constant 24 : index
      %33 = vector.load %arg21[%c0_21, %c24] : memref<8x32xf32, #tpu.memory_space<vmem>>, vector<8x8xf32>
      %c3 = arith.constant 3 : index
      %c0_22 = arith.constant 0 : index
      %c0_23 = arith.constant 0 : index
      %34 = vector.load %arg20[%c3, %c0_22, %c0_23] : memref<4x8x1xf32, #tpu.memory_space<vmem>>, vector<1x8x1xf32>
      %35 = vector.shape_cast %34 : vector<1x8x1xf32> to vector<8x1xf32>
      %36 = tpu.reciprocal %35 {approx = true} : vector<8x1xf32> -> vector<8x1xf32>
      %37 = vector.broadcast %36 : vector<8x1xf32> to vector<8x8xf32>
      %38 = arith.mulf %33, %37 : vector<8x8xf32>
      %c0_24 = arith.constant 0 : index
      %c24_25 = arith.constant 24 : index
      %39 = vector.load %arg21[%c0_24, %c24_25] : memref<8x32xf32, #tpu.memory_space<vmem>>, vector<8x8xf32>
      tpu.vector_store %arg21[%c0_24, %c24_25], %38 {strides = array<i32>} : memref<8x32xf32, #tpu.memory_space<vmem>>, vector<8x8xf32>,
      %c0_26 = arith.constant 0 : index
      %c0_27 = arith.constant 0 : index
      %40 = vector.load %arg21[%c0_26, %c0_27] : memref<8x32xf32, #tpu.memory_space<vmem>>, vector<8x32xf32>
      %41 = arith.truncf %40 : vector<8x32xf32> to vector<8x32xbf16>
      %c0_28 = arith.constant 0 : index
      %c0_29 = arith.constant 0 : index
      %42 = vector.load %arg7[%c0_28, %c0_29] : memref<32x32xbf16, #tpu.memory_space<vmem>>, vector<32x32xbf16>
      %cst = arith.constant dense<0.000000e+00> : vector<8x32xf32>
      %43 = tpu.matmul %41, %42, %cst {dimension_numbers = #tpu.dot_dimension_numbers<[1], [0], [0], [1], [0, 0, 1, 1], [], []>} : vector<8x32xbf16>, vector<32x32xbf16>, vector<8x32xf32> -> vector<8x32xf32>
      %c0_30 = arith.constant 0 : index
      %c0_31 = arith.constant 0 : index
      %44 = vector.load %arg8[%c0_30, %c0_31] : memref<1x32xf32, #tpu.memory_space<vmem>>, vector<1x32xf32>
      %45 = vector.broadcast %44 : vector<1x32xf32> to vector<8x32xf32>
      %46 = arith.addf %43, %45 : vector<8x32xf32>
      %c0_32 = arith.constant 0 : index
      %c0_33 = arith.constant 0 : index
      %c0_34 = arith.constant 0 : index
      %47 = vector.load %arg3[%c0_32, %c0_33, %c0_34] : memref<1x8x32xf32, #tpu.memory_space<vmem>>, vector<1x8x32xf32>
      %48 = vector.shape_cast %47 : vector<1x8x32xf32> to vector<8x32xf32>
      %49 = arith.addf %46, %48 : vector<8x32xf32>
      %c0_35 = arith.constant 0 : index
      %c0_36 = arith.constant 0 : index
      %50 = vector.load %arg9[%c0_35, %c0_36] : memref<1x32xf32, #tpu.memory_space<vmem>>, vector<1x32xf32>
      %c0_37 = arith.constant 0 : index
      %c0_38 = arith.constant 0 : index
      %51 = vector.load %arg10[%c0_37, %c0_38] : memref<1x32xf32, #tpu.memory_space<vmem>>, vector<1x32xf32>
      %cst_39 = arith.constant dense<0.000000e+00> : vector<8xf32>
      %52 = vector.multi_reduction <add>, %49, %cst_39 [1] : vector<8x32xf32> to vector<8xf32>
      %53 = vector.shape_cast %52 : vector<8xf32> to vector<8x1xf32>
      %cst_40 = arith.constant 3.200000e+01 : f32
      %54 = vector.broadcast %cst_40 : f32 to vector<8x1xf32>
      %55 = arith.divf %53, %54 : vector<8x1xf32>
      %56 = vector.broadcast %55 : vector<8x1xf32> to vector<8x32xf32>
      %57 = arith.subf %49, %56 : vector<8x32xf32>
      %58 = arith.mulf %57, %57 : vector<8x32xf32>
      %cst_41 = arith.constant dense<0.000000e+00> : vector<8xf32>
      %59 = vector.multi_reduction <add>, %58, %cst_41 [1] : vector<8x32xf32> to vector<8xf32>
      %60 = vector.shape_cast %59 : vector<8xf32> to vector<8x1xf32>
      %cst_42 = arith.constant 3.200000e+01 : f32
      %61 = vector.broadcast %cst_42 : f32 to vector<8x1xf32>
      %62 = arith.divf %60, %61 : vector<8x1xf32>
      %63 = vector.broadcast %55 : vector<8x1xf32> to vector<8x32xf32>
      %64 = arith.subf %49, %63 : vector<8x32xf32>
      %cst_43 = arith.constant 9.99999974E-6 : f32
      %65 = vector.broadcast %cst_43 : f32 to vector<8x1xf32>
      %66 = arith.addf %62, %65 : vector<8x1xf32>
      %67 = math.rsqrt %66 : vector<8x1xf32>
      %68 = vector.broadcast %67 : vector<8x1xf32> to vector<8x32xf32>
      %69 = arith.mulf %64, %68 : vector<8x32xf32>
      %70 = vector.broadcast %50 : vector<1x32xf32> to vector<8x32xf32>
      %71 = arith.mulf %69, %70 : vector<8x32xf32>
      %72 = vector.broadcast %51 : vector<1x32xf32> to vector<8x32xf32>
      %73 = arith.addf %71, %72 : vector<8x32xf32>
      %74 = arith.truncf %73 : vector<8x32xf32> to vector<8x32xbf16>
      %c0_44 = arith.constant 0 : index
      %c0_45 = arith.constant 0 : index
      %75 = vector.load %arg13[%c0_44, %c0_45] : memref<32x128xbf16, #tpu.memory_space<vmem>>, vector<32x128xbf16>
      %cst_46 = arith.constant dense<0.000000e+00> : vector<8x128xf32>
      %76 = tpu.matmul %74, %75, %cst_46 {dimension_numbers = #tpu.dot_dimension_numbers<[1], [0], [0], [1], [0, 0, 1, 1], [], []>} : vector<8x32xbf16>, vector<32x128xbf16>, vector<8x128xf32> -> vector<8x128xf32>
      %c0_47 = arith.constant 0 : index
      %c0_48 = arith.constant 0 : index
      %77 = vector.load %arg14[%c0_47, %c0_48] : memref<1x128xf32, #tpu.memory_space<vmem>>, vector<1x128xf32>
      %78 = vector.broadcast %77 : vector<1x128xf32> to vector<8x128xf32>
      %79 = arith.addf %76, %78 : vector<8x128xf32>
      %cst_49 = arith.constant 0.000000e+00 : f32
      %80 = vector.broadcast %cst_49 : f32 to vector<8x128xf32>
      %81 = arith.maximumf %79, %80 : vector<8x128xf32>
      %82 = arith.truncf %81 : vector<8x128xf32> to vector<8x128xbf16>
      %c0_50 = arith.constant 0 : index
      %c0_51 = arith.constant 0 : index
      %83 = vector.load %arg15[%c0_50, %c0_51] : memref<128x32xbf16, #tpu.memory_space<vmem>>, vector<128x32xbf16>
      %cst_52 = arith.constant dense<0.000000e+00> : vector<8x32xf32>
      %84 = tpu.matmul %82, %83, %cst_52 {dimension_numbers = #tpu.dot_dimension_numbers<[1], [0], [0], [1], [0, 0, 1, 1], [], []>} : vector<8x128xbf16>, vector<128x32xbf16>, vector<8x32xf32> -> vector<8x32xf32>
      %c0_53 = arith.constant 0 : index
      %c0_54 = arith.constant 0 : index
      %85 = vector.load %arg16[%c0_53, %c0_54] : memref<1x32xf32, #tpu.memory_space<vmem>>, vector<1x32xf32>
      %86 = vector.broadcast %85 : vector<1x32xf32> to vector<8x32xf32>
      %87 = arith.addf %84, %86 : vector<8x32xf32>
      %88 = arith.addf %87, %73 : vector<8x32xf32>
      %c0_55 = arith.constant 0 : index
      %c0_56 = arith.constant 0 : index
      %89 = vector.load %arg11[%c0_55, %c0_56] : memref<1x32xf32, #tpu.memory_space<vmem>>, vector<1x32xf32>
      %c0_57 = arith.constant 0 : index
      %c0_58 = arith.constant 0 : index
      %90 = vector.load %arg12[%c0_57, %c0_58] : memref<1x32xf32, #tpu.memory_space<vmem>>, vector<1x32xf32>
      %cst_59 = arith.constant dense<0.000000e+00> : vector<8xf32>
      %91 = vector.multi_reduction <add>, %88, %cst_59 [1] : vector<8x32xf32> to vector<8xf32>
      %92 = vector.shape_cast %91 : vector<8xf32> to vector<8x1xf32>
      %cst_60 = arith.constant 3.200000e+01 : f32
      %93 = vector.broadcast %cst_60 : f32 to vector<8x1xf32>
      %94 = arith.divf %92, %93 : vector<8x1xf32>
      %95 = vector.broadcast %94 : vector<8x1xf32> to vector<8x32xf32>
      %96 = arith.subf %88, %95 : vector<8x32xf32>
      %97 = arith.mulf %96, %96 : vector<8x32xf32>
      %cst_61 = arith.constant dense<0.000000e+00> : vector<8xf32>
      %98 = vector.multi_reduction <add>, %97, %cst_61 [1] : vector<8x32xf32> to vector<8xf32>
      %99 = vector.shape_cast %98 : vector<8xf32> to vector<8x1xf32>
      %cst_62 = arith.constant 3.200000e+01 : f32
      %100 = vector.broadcast %cst_62 : f32 to vector<8x1xf32>
      %101 = arith.divf %99, %100 : vector<8x1xf32>
      %102 = vector.broadcast %94 : vector<8x1xf32> to vector<8x32xf32>
      %103 = arith.subf %88, %102 : vector<8x32xf32>
      %cst_63 = arith.constant 9.99999974E-6 : f32
      %104 = vector.broadcast %cst_63 : f32 to vector<8x1xf32>
      %105 = arith.addf %101, %104 : vector<8x1xf32>
      %106 = math.rsqrt %105 : vector<8x1xf32>
      %107 = vector.broadcast %106 : vector<8x1xf32> to vector<8x32xf32>
      %108 = arith.mulf %103, %107 : vector<8x32xf32>
      %109 = vector.broadcast %89 : vector<1x32xf32> to vector<8x32xf32>
      %110 = arith.mulf %108, %109 : vector<8x32xf32>
      %111 = vector.broadcast %90 : vector<1x32xf32> to vector<8x32xf32>
      %112 = arith.addf %110, %111 : vector<8x32xf32>
      %c0_64 = arith.constant 0 : index
      %c0_65 = arith.constant 0 : index
      %c0_66 = arith.constant 0 : index
      %113 = vector.load %arg17[%c0_64, %c0_65, %c0_66] : memref<1x8x32xf32, #tpu.memory_space<vmem>>, vector<1x8x32xf32>
      %114 = vector.shape_cast %113 : vector<1x8x32xf32> to vector<8x32xf32>
      %115 = vector.shape_cast %112 : vector<8x32xf32> to vector<1x8x32xf32>
      tpu.vector_store %arg17[%c0_64, %c0_65, %c0_66], %115 {strides = array<i32>} : memref<1x8x32xf32, #tpu.memory_space<vmem>>, vector<1x8x32xf32>,
    } else {
    }
    return
  }
  func.func @transform_0(%arg0: i32, %arg1: i32, %arg2: i32) -> (i32, i32, i32) {
    %c0_i32 = arith.constant 0 : i32
    %c0_i32_0 = arith.constant 0 : i32
    return %arg0, %arg1, %c0_i32 : i32, i32, i32
  }
  func.func @transform_1(%arg0: i32, %arg1: i32, %arg2: i32) -> (i32, i32, i32) {
    %c0_i32 = arith.constant 0 : i32
    %c0_i32_0 = arith.constant 0 : i32
    return %arg0, %arg2, %c0_i32 : i32, i32, i32
  }
  func.func @transform_2(%arg0: i32, %arg1: i32, %arg2: i32) -> (i32, i32, i32) {
    %c0_i32 = arith.constant 0 : i32
    %c0_i32_0 = arith.constant 0 : i32
    return %arg0, %arg2, %c0_i32 : i32, i32, i32
  }
  func.func @transform_3(%arg0: i32, %arg1: i32, %arg2: i32) -> (i32, i32) {
    %c0_i32 = arith.constant 0 : i32
    %c0_i32_0 = arith.constant 0 : i32
    %c0_i32_1 = arith.constant 0 : i32
    return %c0_i32, %c0_i32_0 : i32, i32
  }
  func.func @transform_4(%arg0: i32, %arg1: i32, %arg2: i32) -> (i32, i32) {
    %c0_i32 = arith.constant 0 : i32
    %c0_i32_0 = arith.constant 0 : i32
    %c0_i32_1 = arith.constant 0 : i32
    return %c0_i32, %c0_i32_0 : i32, i32
  }
  func.func @transform_5(%arg0: i32, %arg1: i32, %arg2: i32) -> (i32, i32) {
    %c0_i32 = arith.constant 0 : i32
    %c0_i32_0 = arith.constant 0 : i32
    %c0_i32_1 = arith.constant 0 : i32
    return %c0_i32, %c0_i32_0 : i32, i32
  }
  func.func @transform_6(%arg0: i32, %arg1: i32, %arg2: i32) -> (i32, i32) {
    %c0_i32 = arith.constant 0 : i32
    %c0_i32_0 = arith.constant 0 : i32
    %c0_i32_1 = arith.constant 0 : i32
    return %c0_i32, %c0_i32_0 : i32, i32
  }
  func.func @transform_7(%arg0: i32, %arg1: i32, %arg2: i32) -> (i32, i32) {
    %c0_i32 = arith.constant 0 : i32
    %c0_i32_0 = arith.constant 0 : i32
    %c0_i32_1 = arith.constant 0 : i32
    return %c0_i32, %c0_i32_0 : i32, i32
  }
  func.func @transform_8(%arg0: i32, %arg1: i32, %arg2: i32) -> (i32, i32) {
    %c0_i32 = arith.constant 0 : i32
    %c0_i32_0 = arith.constant 0 : i32
    %c0_i32_1 = arith.constant 0 : i32
    return %c0_i32, %c0_i32_0 : i32, i32
  }
  func.func @transform_9(%arg0: i32, %arg1: i32, %arg2: i32) -> (i32, i32) {
    %c0_i32 = arith.constant 0 : i32
    %c0_i32_0 = arith.constant 0 : i32
    %c0_i32_1 = arith.constant 0 : i32
    return %c0_i32, %c0_i32_0 : i32, i32
  }
  func.func @transform_10(%arg0: i32, %arg1: i32, %arg2: i32) -> (i32, i32) {
    %c0_i32 = arith.constant 0 : i32
    %c0_i32_0 = arith.constant 0 : i32
    %c0_i32_1 = arith.constant 0 : i32
    return %c0_i32, %c0_i32_0 : i32, i32
  }
  func.func @transform_11(%arg0: i32, %arg1: i32, %arg2: i32) -> (i32, i32) {
    %c0_i32 = arith.constant 0 : i32
    %c0_i32_0 = arith.constant 0 : i32
    %c0_i32_1 = arith.constant 0 : i32
    return %c0_i32, %c0_i32_0 : i32, i32
  }
  func.func @transform_12(%arg0: i32, %arg1: i32, %arg2: i32) -> (i32, i32) {
    %c0_i32 = arith.constant 0 : i32
    %c0_i32_0 = arith.constant 0 : i32
    %c0_i32_1 = arith.constant 0 : i32
    return %c0_i32, %c0_i32_0 : i32, i32
  }
  func.func @transform_13(%arg0: i32, %arg1: i32, %arg2: i32) -> (i32, i32) {
    %c0_i32 = arith.constant 0 : i32
    %c0_i32_0 = arith.constant 0 : i32
    %c0_i32_1 = arith.constant 0 : i32
    return %c0_i32, %c0_i32_0 : i32, i32
  }
  func.func @transform_14(%arg0: i32, %arg1: i32, %arg2: i32) -> (i32, i32, i32) {
    %c0_i32 = arith.constant 0 : i32
    %c0_i32_0 = arith.constant 0 : i32
    return %arg0, %arg1, %c0_i32 : i32, i32, i32
  }
}

</mosaic_0001>

<llo_original>
// kernel: tpu_custom_call.1
$region0: #{tpu_custom_call.1}
  #allocation0 [shape = 'u32[]', space=smem, size = 0x4, offset = 0x4, fixed_abs, tag = 'smem constant byte address 0x4 - core index']
  #allocation1 [shape = 'u32[144,128]{1,0:T(1,128)}', space=vmem, size = 0x12000, scoped, tag = 'internal scratch']
  #allocation2 [shape = 'bf16[8,32]{1,0:T(8,128)(2,1)}', space=vmem, size = 0x800, scoped, tag = 'scratch operand']
  #allocation3 [shape = 'f32[4,8,1]{2,1,0:T(8,128)}', space=vmem, size = 0x4000, scoped, tag = 'scratch operand']
  #allocation4 [shape = 'f32[4,8,1]{2,1,0:T(8,128)}', space=vmem, size = 0x4000, scoped, tag = 'scratch operand']
  #allocation5 [shape = 'f32[8,32]{1,0:T(8,128)}', space=vmem, size = 0x1000, scoped, tag = 'scratch operand']
  %s0 = inlined_call_operand.hbm [shape: f32[2,8,32], index: 0, kind: input, shape index: {}]
  %s1 = inlined_call_operand.hbm [shape: bf16[2,8,32], index: 1, kind: input, shape index: {}]
  %s2 = inlined_call_operand.hbm [shape: bf16[2,8,32], index: 2, kind: input, shape index: {}]
  %s3 = inlined_call_operand.hbm [shape: bf16[32,32], index: 3, kind: input, shape index: {}]
  %s4 = inlined_call_operand.hbm [shape: bf16[32,32], index: 4, kind: input, shape index: {}]
  %s5 = inlined_call_operand.hbm [shape: f32[1,32], index: 5, kind: input, shape index: {}]
  %s6 = inlined_call_operand.hbm [shape: f32[1,32], index: 6, kind: input, shape index: {}]
  %s7 = inlined_call_operand.hbm [shape: f32[1,32], index: 7, kind: input, shape index: {}]
  %s8 = inlined_call_operand.hbm [shape: f32[1,32], index: 8, kind: input, shape index: {}]
  %s9 = inlined_call_operand.hbm [shape: f32[1,32], index: 9, kind: input, shape index: {}]
  %s10 = inlined_call_operand.hbm [shape: bf16[32,128], index: 10, kind: input, shape index: {}]
  %s11 = inlined_call_operand.hbm [shape: f32[1,128], index: 11, kind: input, shape index: {}]
  %s12 = inlined_call_operand.hbm [shape: bf16[128,32], index: 12, kind: input, shape index: {}]
  %s13 = inlined_call_operand.hbm [shape: f32[1,32], index: 13, kind: input, shape index: {}]
  %s14 = inlined_call_operand.hbm [shape: f32[2,8,32], index: 14, kind: output, shape index: {}]
  %s15 = sld [smem:[#allocation0]]
  $region157: #{tpu_custom_call.1} parent=0
    _
  %s17 = ssub.s32 1, %s15
  %s18 = scalar_select 0, %s17, %s15
  $region1: #{tpu_custom_call.1} parent=0
    #allocation6 [shape = 'u8[8192]{0}', space=vmem, size = 0x2000, scoped, tag = 'input window, operand 0']
    #allocation7 [shape = 's32[2]{0}', space=sflag, size = 0x8, scoped, tag = 'scoped memory for tpu_custom_call.1']
    #allocation8 [shape = 's32[2]{0}', space=sflag, size = 0x8, scoped, tag = 'scoped memory for tpu_custom_call.1']
    #allocation9 [shape = 'u8[4096]{0}', space=vmem, size = 0x1000, scoped, tag = 'input window, operand 1']
    #allocation10 [shape = 's32[2]{0}', space=sflag, size = 0x8, scoped, tag = 'scoped memory for tpu_custom_call.1']
    #allocation11 [shape = 'u8[4096]{0}', space=vmem, size = 0x1000, scoped, tag = 'input window, operand 2']
    #allocation12 [shape = 'u8[8192]{0}', space=vmem, size = 0x2000, scoped, tag = 'input window, operand 3, single buffered']
    #allocation13 [shape = 's32[1]{0}', space=sflag, size = 0x4, scoped, tag = 'scoped memory for tpu_custom_call.1']
    #allocation14 [shape = 'u8[8192]{0}', space=vmem, size = 0x2000, scoped, tag = 'input window, operand 4, single buffered']
    #allocation15 [shape = 'u8[512]{0}', space=vmem, size = 0x400, scoped, tag = 'input window, operand 5, single buffered']
    #allocation16 [shape = 's32[1]{0}', space=sflag, size = 0x4, scoped, tag = 'scoped memory for tpu_custom_call.1']
    #allocation17 [shape = 'u8[512]{0}', space=vmem, size = 0x400, scoped, tag = 'input window, operand 6, single buffered']
    #allocation18 [shape = 'u8[512]{0}', space=vmem, size = 0x400, scoped, tag = 'input window, operand 7, single buffered']
    #allocation19 [shape = 's32[1]{0}', space=sflag, size = 0x4, scoped, tag = 'scoped memory for tpu_custom_call.1']
    #allocation20 [shape = 'u8[512]{0}', space=vmem, size = 0x400, scoped, tag = 'input window, operand 8, single buffered']
    #allocation21 [shape = 'u8[512]{0}', space=vmem, size = 0x400, scoped, tag = 'input window, operand 9, single buffered']
    #allocation22 [shape = 's32[1]{0}', space=sflag, size = 0x4, scoped, tag = 'scoped memory for tpu_custom_call.1']
    #allocation23 [shape = 'u8[8192]{0}', space=vmem, size = 0x2000, scoped, tag = 'input window, operand 10, single buffered']
    #allocation24 [shape = 'u8[512]{0}', space=vmem, size = 0x400, scoped, tag = 'input window, operand 11, single buffered']
    #allocation25 [shape = 's32[1]{0}', space=sflag, size = 0x4, scoped, tag = 'scoped memory for tpu_custom_call.1']
    #allocation26 [shape = 'u8[32768]{0}', space=vmem, size = 0x8000, scoped, tag = 'input window, operand 12, single buffered']
    #allocation27 [shape = 'u8[512]{0}', space=vmem, size = 0x400, scoped, tag = 'input window, operand 13, single buffered']
    #allocation28 [shape = 's32[1]{0}', space=sflag, size = 0x4, scoped, tag = 'scoped memory for tpu_custom_call.1']
    #allocation29 [shape = 'u8[8192]{0}', space=vmem, size = 0x2000, scoped, tag = 'output window, operand 0']
    %19 = vsyncpa [#allocation7], 0
    %s20 = scalar_lea.sflag [#allocation7], 1
    %21 = vsyncpa %s20, 0
    %22 = vsyncpa [#allocation10], 0
    %s23 = scalar_lea.sflag [#allocation10], 1
    %24 = vsyncpa %s23, 0
    %25 = vsyncpa [#allocation13], 0
    %26 = vsyncpa [#allocation16], 0
    %27 = vsyncpa [#allocation19], 0
    %28 = vsyncpa [#allocation22], 0
    %29 = vsyncpa [#allocation25], 0
    %30 = vsyncpa [#allocation28], 0
    %31 = vsyncpa [#allocation8], 0
    %s32 = scalar_lea.sflag [#allocation8], 1
    %33 = vsyncpa %s32, 0
    loop: start=0, step=1, limit=4
    $region2: #{tpu_custom_call.1} parent=1 // loop_pre_header
      _
    $region3: #{tpu_custom_call.1} parent=1 // loop_header
      %s35 = sphi 0, %s39
      %p36 = scmp.ge.s32.totalorder %s35, 4
      %s42 = sphi 0, %s61
      %s43 = sphi 0, %s57
      %s44 = sphi 0, %s53
      %s45 = sphi 0, %s42
      %s46 = sphi 0, %s43
      %s47 = sphi 0, %s44
      %s48 = sphi 0, %s45
      %s49 = sphi 0, %s46
      %s50 = sphi 0, %s47
      %s66 = sphi 0, %s68
      %s69 = sphi 0, %s66
      %s70 = sphi 0, %s69
      %s86 = sphi 0, %s70
      %s94 = sphi 0, %s96
      %s97 = sphi 0, %s94
      %s98 = sphi 0, %s97
      %s114 = sphi 0, %s98
      %s122 = sphi 0, %s124
      %s125 = sphi 0, %s122
      %s126 = sphi 0, %s125
      %s142 = sphi 0, %s126
      %s146 = sphi 0, %s146
      %s148 = sphi 0, %s146
      %s149 = sphi 0, %s148
      %s163 = sphi 0, %s149
      %s167 = sphi 0, %s167
      %s169 = sphi 0, %s167
      %s170 = sphi 0, %s169
      %s184 = sphi 0, %s170
      %s188 = sphi 0, %s188
      %s190 = sphi 0, %s188
      %s191 = sphi 0, %s190
      %s205 = sphi 0, %s191
      %s209 = sphi 0, %s209
      %s211 = sphi 0, %s209
      %s212 = sphi 0, %s211
      %s226 = sphi 0, %s212
      %s230 = sphi 0, %s230
      %s232 = sphi 0, %s230
      %s233 = sphi 0, %s232
      %s247 = sphi 0, %s233
      %s251 = sphi 0, %s251
      %s253 = sphi 0, %s251
      %s254 = sphi 0, %s253
      %s268 = sphi 0, %s254
      %s272 = sphi 0, %s272
      %s274 = sphi 0, %s272
      %s275 = sphi 0, %s274
      %s289 = sphi 0, %s275
      %s293 = sphi 0, %s293
      %s295 = sphi 0, %s293
      %s296 = sphi 0, %s295
      %s310 = sphi 0, %s296
      %s314 = sphi 0, %s314
      %s316 = sphi 0, %s314
      %s317 = sphi 0, %s316
      %s331 = sphi 0, %s317
      %s335 = sphi 0, %s335
      %s337 = sphi 0, %s335
      %s338 = sphi 0, %s337
      %s352 = sphi 0, %s338
      %s356 = sphi 0, %s356
      %s358 = sphi 0, %s356
      %s359 = sphi 0, %s358
      %s373 = sphi 0, %s359
      %s381 = sphi 0, %s383
      %s384 = sphi 0, %s381
      %s385 = sphi 0, %s384
      %s401 = sphi 0, %s385
    $region4: #{tpu_custom_call.1} parent=1 // loop_header_branch
      %38 = sbr.rel (%p36) target = $region8
    $region5: #{tpu_custom_call.1} parent=1 // loop_body
      %s40 = ssub.s32 %s35, 1
      %s41 = ssub.s32 %s35, 2
      %s51 = sadd.s32 1, %s44
      %p52 = scmp.ge.s32.totalorder %s51, 1
      %s53 = scalar_select %p52, 0, %s51
      %s54 = sadd.s32 1, %s43
      %s55 = scalar_select %p52, %s54, %s43
      %p56 = scmp.ge.s32.totalorder %s55, 1
      %s57 = scalar_select %p56, 0, %s55
      %s58 = sadd.s32 1, %s42
      %s59 = scalar_select %p56, %s58, %s42
      %p60 = scmp.ge.s32.totalorder %s59, 2
      %s61 = scalar_select %p60, 0, %s59
      %s62 = ssub.s32 %s42, %s61
      %s63 = ssub.s32 %s43, %s57
      %s64 = sor.u32 %s62, %s63
      %p65 = scmp.eq.s32.totalorder %s64, 0
      %s67 = sadd.s32 %s66, 1
      %s68 = scalar_select %p65, %s66, %s67
      %p71 = pneg %p65
      %p72 = scmp.eq.s32.totalorder %s35, 1
      %p73 = por %p71, %p72
      %p74 = scmp.ne.s32.totalorder %s66, %s69
      %p75 = scmp.eq.s32.totalorder %s35, 0
      %p76 = por %p74, %p75
      %p77 = scmp.ne.s32.totalorder %s66, %s69
      %p78 = scmp.eq.s32.totalorder %s40, 1
      %p79 = por %p77, %p78
      %p80 = scmp.ne.s32.totalorder %s69, %s70
      %p81 = scmp.eq.s32.totalorder %s40, 0
      %p82 = por %p80, %p81
      %p83 = scmp.ne.s32.totalorder %s69, %s70
      %p84 = scmp.eq.s32.totalorder %s41, 1
      %p85 = por %p83, %p84
      %p87 = scmp.ne.s32.totalorder %s70, %s86
      %p88 = scmp.eq.s32.totalorder %s41, 0
      %p89 = por %p87, %p88
      %s90 = ssub.s32 %s42, %s61
      %s91 = ssub.s32 %s44, %s53
      %s92 = sor.u32 %s90, %s91
      %p93 = scmp.eq.s32.totalorder %s92, 0
      %s95 = sadd.s32 %s94, 1
      %s96 = scalar_select %p93, %s94, %s95
      %p99 = pneg %p93
      %p100 = scmp.eq.s32.totalorder %s35, 1
      %p101 = por %p99, %p100
      %p102 = scmp.ne.s32.totalorder %s94, %s97
      %p103 = scmp.eq.s32.totalorder %s35, 0
      %p104 = por %p102, %p103
      %p105 = scmp.ne.s32.totalorder %s94, %s97
      %p106 = scmp.eq.s32.totalorder %s40, 1
      %p107 = por %p105, %p106
      %p108 = scmp.ne.s32.totalorder %s97, %s98
      %p109 = scmp.eq.s32.totalorder %s40, 0
      %p110 = por %p108, %p109
      %p111 = scmp.ne.s32.totalorder %s97, %s98
      %p112 = scmp.eq.s32.totalorder %s41, 1
      %p113 = por %p111, %p112
      %p115 = scmp.ne.s32.totalorder %s98, %s114
      %p116 = scmp.eq.s32.totalorder %s41, 0
      %p117 = por %p115, %p116
      %s118 = ssub.s32 %s42, %s61
      %s119 = ssub.s32 %s44, %s53
      %s120 = sor.u32 %s118, %s119
      %p121 = scmp.eq.s32.totalorder %s120, 0
      %s123 = sadd.s32 %s122, 1
      %s124 = scalar_select %p121, %s122, %s123
      %p127 = pneg %p121
      %p128 = scmp.eq.s32.totalorder %s35, 1
      %p129 = por %p127, %p128
      %p130 = scmp.ne.s32.totalorder %s122, %s125
      %p131 = scmp.eq.s32.totalorder %s35, 0
      %p132 = por %p130, %p131
      %p133 = scmp.ne.s32.totalorder %s122, %s125
      %p134 = scmp.eq.s32.totalorder %s40, 1
      %p135 = por %p133, %p134
      %p136 = scmp.ne.s32.totalorder %s125, %s126
      %p137 = scmp.eq.s32.totalorder %s40, 0
      %p138 = por %p136, %p137
      %p139 = scmp.ne.s32.totalorder %s125, %s126
      %p140 = scmp.eq.s32.totalorder %s41, 1
      %p141 = por %p139, %p140
      %p143 = scmp.ne.s32.totalorder %s126, %s142
      %p144 = scmp.eq.s32.totalorder %s41, 0
      %p145 = por %p143, %p144
      %s147 = sadd.s32 %s146, 1
      %p150 = scmp.eq.s32.totalorder %s35, 1
      %p151 = scmp.ne.s32.totalorder %s146, %s148
      %p152 = scmp.eq.s32.totalorder %s35, 0
      %p153 = por %p151, %p152
      %p154 = scmp.ne.s32.totalorder %s146, %s148
      %p155 = scmp.eq.s32.totalorder %s40, 1
      %p156 = por %p154, %p155
      %p157 = scmp.ne.s32.totalorder %s148, %s149
      %p158 = scmp.eq.s32.totalorder %s40, 0
      %p159 = por %p157, %p158
      %p160 = scmp.ne.s32.totalorder %s148, %s149
      %p161 = scmp.eq.s32.totalorder %s41, 1
      %p162 = por %p160, %p161
      %p164 = scmp.ne.s32.totalorder %s149, %s163
      %p165 = scmp.eq.s32.totalorder %s41, 0
      %p166 = por %p164, %p165
      %s168 = sadd.s32 %s167, 1
      %p171 = scmp.eq.s32.totalorder %s35, 1
      %p172 = scmp.ne.s32.totalorder %s167, %s169
      %p173 = scmp.eq.s32.totalorder %s35, 0
      %p174 = por %p172, %p173
      %p175 = scmp.ne.s32.totalorder %s167, %s169
      %p176 = scmp.eq.s32.totalorder %s40, 1
      %p177 = por %p175, %p176
      %p178 = scmp.ne.s32.totalorder %s169, %s170
      %p179 = scmp.eq.s32.totalorder %s40, 0
      %p180 = por %p178, %p179
      %p181 = scmp.ne.s32.totalorder %s169, %s170
      %p182 = scmp.eq.s32.totalorder %s41, 1
      %p183 = por %p181, %p182
      %p185 = scmp.ne.s32.totalorder %s170, %s184
      %p186 = scmp.eq.s32.totalorder %s41, 0
      %p187 = por %p185, %p186
      %s189 = sadd.s32 %s188, 1
      %p192 = scmp.eq.s32.totalorder %s35, 1
      %p193 = scmp.ne.s32.totalorder %s188, %s190
      %p194 = scmp.eq.s32.totalorder %s35, 0
      %p195 = por %p193, %p194
      %p196 = scmp.ne.s32.totalorder %s188, %s190
      %p197 = scmp.eq.s32.totalorder %s40, 1
      %p198 = por %p196, %p197
      %p199 = scmp.ne.s32.totalorder %s190, %s191
      %p200 = scmp.eq.s32.totalorder %s40, 0
      %p201 = por %p199, %p200
      %p202 = scmp.ne.s32.totalorder %s190, %s191
      %p203 = scmp.eq.s32.totalorder %s41, 1
      %p204 = por %p202, %p203
      %p206 = scmp.ne.s32.totalorder %s191, %s205
      %p207 = scmp.eq.s32.totalorder %s41, 0
      %p208 = por %p206, %p207
      %s210 = sadd.s32 %s209, 1
      %p213 = scmp.eq.s32.totalorder %s35, 1
      %p214 = scmp.ne.s32.totalorder %s209, %s211
      %p215 = scmp.eq.s32.totalorder %s35, 0
      %p216 = por %p214, %p215
      %p217 = scmp.ne.s32.totalorder %s209, %s211
      %p218 = scmp.eq.s32.totalorder %s40, 1
      %p219 = por %p217, %p218
      %p220 = scmp.ne.s32.totalorder %s211, %s212
      %p221 = scmp.eq.s32.totalorder %s40, 0
      %p222 = por %p220, %p221
      %p223 = scmp.ne.s32.totalorder %s211, %s212
      %p224 = scmp.eq.s32.totalorder %s41, 1
      %p225 = por %p223, %p224
      %p227 = scmp.ne.s32.totalorder %s212, %s226
      %p228 = scmp.eq.s32.totalorder %s41, 0
      %p229 = por %p227, %p228
      %s231 = sadd.s32 %s230, 1
      %p234 = scmp.eq.s32.totalorder %s35, 1
      %p235 = scmp.ne.s32.totalorder %s230, %s232
      %p236 = scmp.eq.s32.totalorder %s35, 0
      %p237 = por %p235, %p236
      %p238 = scmp.ne.s32.totalorder %s230, %s232
      %p239 = scmp.eq.s32.totalorder %s40, 1
      %p240 = por %p238, %p239
      %p241 = scmp.ne.s32.totalorder %s232, %s233
      %p242 = scmp.eq.s32.totalorder %s40, 0
      %p243 = por %p241, %p242
      %p244 = scmp.ne.s32.totalorder %s232, %s233
      %p245 = scmp.eq.s32.totalorder %s41, 1
      %p246 = por %p244, %p245
      %p248 = scmp.ne.s32.totalorder %s233, %s247
      %p249 = scmp.eq.s32.totalorder %s41, 0
      %p250 = por %p248, %p249
      %s252 = sadd.s32 %s251, 1
      %p255 = scmp.eq.s32.totalorder %s35, 1
      %p256 = scmp.ne.s32.totalorder %s251, %s253
      %p257 = scmp.eq.s32.totalorder %s35, 0
      %p258 = por %p256, %p257
      %p259 = scmp.ne.s32.totalorder %s251, %s253
      %p260 = scmp.eq.s32.totalorder %s40, 1
      %p261 = por %p259, %p260
      %p262 = scmp.ne.s32.totalorder %s253, %s254
      %p263 = scmp.eq.s32.totalorder %s40, 0
      %p264 = por %p262, %p263
      %p265 = scmp.ne.s32.totalorder %s253, %s254
      %p266 = scmp.eq.s32.totalorder %s41, 1
      %p267 = por %p265, %p266
      %p269 = scmp.ne.s32.totalorder %s254, %s268
      %p270 = scmp.eq.s32.totalorder %s41, 0
      %p271 = por %p269, %p270
      %s273 = sadd.s32 %s272, 1
      %p276 = scmp.eq.s32.totalorder %s35, 1
      %p277 = scmp.ne.s32.totalorder %s272, %s274
      %p278 = scmp.eq.s32.totalorder %s35, 0
      %p279 = por %p277, %p278
      %p280 = scmp.ne.s32.totalorder %s272, %s274
      %p281 = scmp.eq.s32.totalorder %s40, 1
      %p282 = por %p280, %p281
      %p283 = scmp.ne.s32.totalorder %s274, %s275
      %p284 = scmp.eq.s32.totalorder %s40, 0
      %p285 = por %p283, %p284
      %p286 = scmp.ne.s32.totalorder %s274, %s275
      %p287 = scmp.eq.s32.totalorder %s41, 1
      %p288 = por %p286, %p287
      %p290 = scmp.ne.s32.totalorder %s275, %s289
      %p291 = scmp.eq.s32.totalorder %s41, 0
      %p292 = por %p290, %p291
      %s294 = sadd.s32 %s293, 1
      %p297 = scmp.eq.s32.totalorder %s35, 1
      %p298 = scmp.ne.s32.totalorder %s293, %s295
      %p299 = scmp.eq.s32.totalorder %s35, 0
      %p300 = por %p298, %p299
      %p301 = scmp.ne.s32.totalorder %s293, %s295
      %p302 = scmp.eq.s32.totalorder %s40, 1
      %p303 = por %p301, %p302
      %p304 = scmp.ne.s32.totalorder %s295, %s296
      %p305 = scmp.eq.s32.totalorder %s40, 0
      %p306 = por %p304, %p305
      %p307 = scmp.ne.s32.totalorder %s295, %s296
      %p308 = scmp.eq.s32.totalorder %s41, 1
      %p309 = por %p307, %p308
      %p311 = scmp.ne.s32.totalorder %s296, %s310
      %p312 = scmp.eq.s32.totalorder %s41, 0
      %p313 = por %p311, %p312
      %s315 = sadd.s32 %s314, 1
      %p318 = scmp.eq.s32.totalorder %s35, 1
      %p319 = scmp.ne.s32.totalorder %s314, %s316
      %p320 = scmp.eq.s32.totalorder %s35, 0
      %p321 = por %p319, %p320
      %p322 = scmp.ne.s32.totalorder %s314, %s316
      %p323 = scmp.eq.s32.totalorder %s40, 1
      %p324 = por %p322, %p323
      %p325 = scmp.ne.s32.totalorder %s316, %s317
      %p326 = scmp.eq.s32.totalorder %s40, 0
      %p327 = por %p325, %p326
      %p328 = scmp.ne.s32.totalorder %s316, %s317
      %p329 = scmp.eq.s32.totalorder %s41, 1
      %p330 = por %p328, %p329
      %p332 = scmp.ne.s32.totalorder %s317, %s331
      %p333 = scmp.eq.s32.totalorder %s41, 0
      %p334 = por %p332, %p333
      %s336 = sadd.s32 %s335, 1
      %p339 = scmp.eq.s32.totalorder %s35, 1
      %p340 = scmp.ne.s32.totalorder %s335, %s337
      %p341 = scmp.eq.s32.totalorder %s35, 0
      %p342 = por %p340, %p341
      %p343 = scmp.ne.s32.totalorder %s335, %s337
      %p344 = scmp.eq.s32.totalorder %s40, 1
      %p345 = por %p343, %p344
      %p346 = scmp.ne.s32.totalorder %s337, %s338
      %p347 = scmp.eq.s32.totalorder %s40, 0
      %p348 = por %p346, %p347
      %p349 = scmp.ne.s32.totalorder %s337, %s338
      %p350 = scmp.eq.s32.totalorder %s41, 1
      %p351 = por %p349, %p350
      %p353 = scmp.ne.s32.totalorder %s338, %s352
      %p354 = scmp.eq.s32.totalorder %s41, 0
      %p355 = por %p353, %p354
      %s357 = sadd.s32 %s356, 1
      %p360 = scmp.eq.s32.totalorder %s35, 1
      %p361 = scmp.ne.s32.totalorder %s356, %s358
      %p362 = scmp.eq.s32.totalorder %s35, 0
      %p363 = por %p361, %p362
      %p364 = scmp.ne.s32.totalorder %s356, %s358
      %p365 = scmp.eq.s32.totalorder %s40, 1
      %p366 = por %p364, %p365
      %p367 = scmp.ne.s32.totalorder %s358, %s359
      %p368 = scmp.eq.s32.totalorder %s40, 0
      %p369 = por %p367, %p368
      %p370 = scmp.ne.s32.totalorder %s358, %s359
      %p371 = scmp.eq.s32.totalorder %s41, 1
      %p372 = por %p370, %p371
      %p374 = scmp.ne.s32.totalorder %s359, %s373
      %p375 = scmp.eq.s32.totalorder %s41, 0
      %p376 = por %p374, %p375
      %s377 = ssub.s32 %s42, %s61
      %s378 = ssub.s32 %s43, %s57
      %s379 = sor.u32 %s377, %s378
      %p380 = scmp.eq.s32.totalorder %s379, 0
      %s382 = sadd.s32 %s381, 1
      %s383 = scalar_select %p380, %s381, %s382
      %p386 = pneg %p380
      %p387 = scmp.eq.s32.totalorder %s35, 1
      %p388 = por %p386, %p387
      %p389 = scmp.ne.s32.totalorder %s381, %s384
      %p390 = scmp.eq.s32.totalorder %s35, 0
      %p391 = por %p389, %p390
      %p392 = scmp.ne.s32.totalorder %s381, %s384
      %p393 = scmp.eq.s32.totalorder %s40, 1
      %p394 = por %p392, %p393
      %p395 = scmp.ne.s32.totalorder %s384, %s385
      %p396 = scmp.eq.s32.totalorder %s40, 0
      %p397 = por %p395, %p396
      %p398 = scmp.ne.s32.totalorder %s384, %s385
      %p399 = scmp.eq.s32.totalorder %s41, 1
      %p400 = por %p398, %p399
      %p402 = scmp.ne.s32.totalorder %s385, %s401
      %p403 = scmp.eq.s32.totalorder %s41, 0
      %p404 = por %p402, %p403
      %p405 = scmp.le.s32.totalorder 1, %s35
      %p406 = scmp.lt.s32.totalorder %s35, 3
      %p407 = pnand %p405, %p406
      %p408 = pneg %p407
      // Predicated region
      $region9: #{tpu_custom_call.1} parent=5 // pred_check
        _
      $region10: #{tpu_custom_call.1} parent=5 // pred_check_branch
        %410 = sbr.rel (%p407) target = $region12
      $region11: #{tpu_custom_call.1} parent=5 // pred_region
        %s411 = ssub.s32 %s35, 1
        // Predicated region
        $region13: #{tpu_custom_call.1} parent=11 // pred_check
          %p412 = pneg %p159
        $region14: #{tpu_custom_call.1} parent=11 // pred_check_branch
          %414 = sbr.rel (%p412) target = $region16
        $region15: #{tpu_custom_call.1} parent=11 // pred_region
          %s416 = ssub.s32 256, 256
          %417 = vsyncadd [#allocation13], %s416
          %s418 = sshll.u32 [#allocation12], 4
          %s419 = int_to_ptr.vmem [resolvable:$true] %s418
          %424 = dma.hbm_to_vmem [thread:$0]  %s3, 256, %s419, [#allocation13], 64, 64, 4
        $region16: #{tpu_custom_call.1} parent=11 // pred_fallthru
          _
        // Predicated region
        $region17: #{tpu_custom_call.1} parent=11 // pred_check
          %p425 = pneg %p180
        $region18: #{tpu_custom_call.1} parent=11 // pred_check_branch
          %427 = sbr.rel (%p425) target = $region20
        $region19: #{tpu_custom_call.1} parent=11 // pred_region
          %s429 = ssub.s32 256, 256
          %430 = vsyncadd [#allocation13], %s429
          %s431 = sshll.u32 [#allocation14], 4
          %s432 = int_to_ptr.vmem [resolvable:$true] %s431
          %437 = dma.hbm_to_vmem [thread:$0]  %s4, 256, %s432, [#allocation13], 64, 64, 4
        $region20: #{tpu_custom_call.1} parent=11 // pred_fallthru
          _
        // Predicated region
        $region21: #{tpu_custom_call.1} parent=11 // pred_check
          %p438 = pneg %p201
        $region22: #{tpu_custom_call.1} parent=11 // pred_check_branch
          %440 = sbr.rel (%p438) target = $region24
        $region23: #{tpu_custom_call.1} parent=11 // pred_region
          %s442 = ssub.s32 16, 16
          %443 = vsyncadd [#allocation16], %s442
          %s445 = sshll.u32 [#allocation15], 4
          %s446 = int_to_ptr.vmem [resolvable:$true] %s445
          %448 = dma.hbm_to_vmem [thread:$0]  %s5, 16, %s446, [#allocation16]
        $region24: #{tpu_custom_call.1} parent=11 // pred_fallthru
          _
        // Predicated region
        $region25: #{tpu_custom_call.1} parent=11 // pred_check
          %p449 = pneg %p222
        $region26: #{tpu_custom_call.1} parent=11 // pred_check_branch
          %451 = sbr.rel (%p449) target = $region28
        $region27: #{tpu_custom_call.1} parent=11 // pred_region
          %s453 = ssub.s32 16, 16
          %454 = vsyncadd [#allocation16], %s453
          %s456 = sshll.u32 [#allocation17], 4
          %s457 = int_to_ptr.vmem [resolvable:$true] %s456
          %459 = dma.hbm_to_vmem [thread:$0]  %s6, 16, %s457, [#allocation16]
        $region28: #{tpu_custom_call.1} parent=11 // pred_fallthru
          _
        // Predicated region
        $region29: #{tpu_custom_call.1} parent=11 // pred_check
          %p460 = pneg %p243
        $region30: #{tpu_custom_call.1} parent=11 // pred_check_branch
          %462 = sbr.rel (%p460) target = $region32
        $region31: #{tpu_custom_call.1} parent=11 // pred_region
          %s464 = ssub.s32 16, 16
          %465 = vsyncadd [#allocation19], %s464
          %s467 = sshll.u32 [#allocation18], 4
          %s468 = int_to_ptr.vmem [resolvable:$true] %s467
          %470 = dma.hbm_to_vmem [thread:$0]  %s7, 16, %s468, [#allocation19]
        $region32: #{tpu_custom_call.1} parent=11 // pred_fallthru
          _
        // Predicated region
        $region33: #{tpu_custom_call.1} parent=11 // pred_check
          %p471 = pneg %p264
        $region34: #{tpu_custom_call.1} parent=11 // pred_check_branch
          %473 = sbr.rel (%p471) target = $region36
        $region35: #{tpu_custom_call.1} parent=11 // pred_region
          %s475 = ssub.s32 16, 16
          %476 = vsyncadd [#allocation19], %s475
          %s478 = sshll.u32 [#allocation20], 4
          %s479 = int_to_ptr.vmem [resolvable:$true] %s478
          %481 = dma.hbm_to_vmem [thread:$0]  %s8, 16, %s479, [#allocation19]
        $region36: #{tpu_custom_call.1} parent=11 // pred_fallthru
          _
        // Predicated region
        $region37: #{tpu_custom_call.1} parent=11 // pred_check
          %p482 = pneg %p285
        $region38: #{tpu_custom_call.1} parent=11 // pred_check_branch
          %484 = sbr.rel (%p482) target = $region40
        $region39: #{tpu_custom_call.1} parent=11 // pred_region
          %s486 = ssub.s32 16, 16
          %487 = vsyncadd [#allocation22], %s486
          %s489 = sshll.u32 [#allocation21], 4
          %s490 = int_to_ptr.vmem [resolvable:$true] %s489
          %492 = dma.hbm_to_vmem [thread:$0]  %s9, 16, %s490, [#allocation22]
        $region40: #{tpu_custom_call.1} parent=11 // pred_fallthru
          _
        // Predicated region
        $region41: #{tpu_custom_call.1} parent=11 // pred_check
          %p493 = pneg %p306
        $region42: #{tpu_custom_call.1} parent=11 // pred_check_branch
          %495 = sbr.rel (%p493) target = $region44
        $region43: #{tpu_custom_call.1} parent=11 // pred_region
          %s497 = ssub.s32 256, 256
          %498 = vsyncadd [#allocation22], %s497
          %s499 = sshll.u32 [#allocation23], 4
          %s500 = int_to_ptr.vmem [resolvable:$true] %s499
          %505 = dma.hbm_to_vmem [thread:$0]  %s10, 256, %s500, [#allocation22], 64, 64, 4
        $region44: #{tpu_custom_call.1} parent=11 // pred_fallthru
          _
        // Predicated region
        $region45: #{tpu_custom_call.1} parent=11 // pred_check
          %p506 = pneg %p327
        $region46: #{tpu_custom_call.1} parent=11 // pred_check_branch
          %508 = sbr.rel (%p506) target = $region48
        $region47: #{tpu_custom_call.1} parent=11 // pred_region
          %s510 = ssub.s32 16, 16
          %511 = vsyncadd [#allocation25], %s510
          %s513 = sshll.u32 [#allocation24], 4
          %s514 = int_to_ptr.vmem [resolvable:$true] %s513
          %516 = dma.hbm_to_vmem [thread:$0]  %s11, 16, %s514, [#allocation25]
        $region48: #{tpu_custom_call.1} parent=11 // pred_fallthru
          _
        // Predicated region
        $region49: #{tpu_custom_call.1} parent=11 // pred_check
          %p517 = pneg %p348
        $region50: #{tpu_custom_call.1} parent=11 // pred_check_branch
          %519 = sbr.rel (%p517) target = $region52
        $region51: #{tpu_custom_call.1} parent=11 // pred_region
          %s521 = ssub.s32 1024, 1024
          %522 = vsyncadd [#allocation25], %s521
          %s523 = sshll.u32 [#allocation26], 4
          %s524 = int_to_ptr.vmem [resolvable:$true] %s523
          %529 = dma.hbm_to_vmem [thread:$0]  %s12, 1024, %s524, [#allocation25], 64, 64, 4
        $region52: #{tpu_custom_call.1} parent=11 // pred_fallthru
          _
        // Predicated region
        $region53: #{tpu_custom_call.1} parent=11 // pred_check
          %p530 = pneg %p369
        $region54: #{tpu_custom_call.1} parent=11 // pred_check_branch
          %532 = sbr.rel (%p530) target = $region56
        $region55: #{tpu_custom_call.1} parent=11 // pred_region
          %s534 = ssub.s32 16, 16
          %535 = vsyncadd [#allocation28], %s534
          %s537 = sshll.u32 [#allocation27], 4
          %s538 = int_to_ptr.vmem [resolvable:$true] %s537
          %540 = dma.hbm_to_vmem [thread:$0]  %s13, 16, %s538, [#allocation28]
        $region56: #{tpu_custom_call.1} parent=11 // pred_fallthru
          _
      $region12: #{tpu_custom_call.1} parent=5 // pred_fallthru
        _
      %p541 = scmp.lt.s32.totalorder %s35, 2
      // Predicated region
      $region57: #{tpu_custom_call.1} parent=5 // pred_check
        %p542 = pneg %p541
      $region58: #{tpu_custom_call.1} parent=5 // pred_check_branch
        %544 = sbr.rel (%p542) target = $region60
      $region59: #{tpu_custom_call.1} parent=5 // pred_region
        // Predicated region
        $region61: #{tpu_custom_call.1} parent=59 // pred_check
          %p545 = pneg %p76
        $region62: #{tpu_custom_call.1} parent=59 // pred_check_branch
          %547 = sbr.rel (%p545) target = $region64
        $region63: #{tpu_custom_call.1} parent=59 // pred_region
          %s548 = sand.u32 %s66, 1
          %s549 = scalar_lea.sflag [#allocation7], %s548
          %s550 = sand.u32 %s66, 1
          %s551 = smul.addr %s550, 8
          %s552 = scalar_lea.vmem [#allocation6], %s551
          %s554 = ssub.s32 128, 128
          %555 = vsyncadd %s549, %s554
          %s556 = sadd.s32 %s43, %s42
          %s557 = smul.addr %s556, 128
          %s558 = scalar_lea.hbm %s0, %s557
          %s560 = sshll.u32 %s552, 4
          %s561 = int_to_ptr.vmem [resolvable:$true] %s560
          %563 = dma.hbm_to_vmem [thread:$0]  %s558, 128, %s561, %s549
        $region64: #{tpu_custom_call.1} parent=59 // pred_fallthru
          _
        // Predicated region
        $region65: #{tpu_custom_call.1} parent=59 // pred_check
          %p564 = pneg %p104
        $region66: #{tpu_custom_call.1} parent=59 // pred_check_branch
          %566 = sbr.rel (%p564) target = $region68
        $region67: #{tpu_custom_call.1} parent=59 // pred_region
          %s567 = sand.u32 %s35, 1
          %s568 = scalar_lea.sflag [#allocation10], %s567
          %s569 = sand.u32 %s94, 1
          %s570 = smul.addr %s569, 4
          %s571 = scalar_lea.vmem [#allocation9], %s570
          %s573 = ssub.s32 64, 64
          %574 = vsyncadd %s568, %s573
          %s575 = sadd.s32 %s44, %s42
          %s576 = smul.addr %s575, 64
          %s577 = scalar_lea.hbm %s1, %s576
          %s579 = sshll.u32 %s571, 4
          %s580 = int_to_ptr.vmem [resolvable:$true] %s579
          %582 = dma.hbm_to_vmem [thread:$0]  %s577, 64, %s580, %s568
        $region68: #{tpu_custom_call.1} parent=59 // pred_fallthru
          _
        // Predicated region
        $region69: #{tpu_custom_call.1} parent=59 // pred_check
          %p583 = pneg %p132
        $region70: #{tpu_custom_call.1} parent=59 // pred_check_branch
          %585 = sbr.rel (%p583) target = $region72
        $region71: #{tpu_custom_call.1} parent=59 // pred_region
          %s586 = sand.u32 %s35, 1
          %s587 = scalar_lea.sflag [#allocation10], %s586
          %s588 = sand.u32 %s122, 1
          %s589 = smul.addr %s588, 4
          %s590 = scalar_lea.vmem [#allocation11], %s589
          %s592 = ssub.s32 64, 64
          %593 = vsyncadd %s587, %s592
          %s594 = sadd.s32 %s44, %s42
          %s595 = smul.addr %s594, 64
          %s596 = scalar_lea.hbm %s2, %s595
          %s598 = sshll.u32 %s590, 4
          %s599 = int_to_ptr.vmem [resolvable:$true] %s598
          %601 = dma.hbm_to_vmem [thread:$0]  %s596, 64, %s599, %s587
        $region72: #{tpu_custom_call.1} parent=59 // pred_fallthru
          _
      $region60: #{tpu_custom_call.1} parent=5 // pred_fallthru
        _
      %p602 = scmp.le.s32.totalorder 1, %s35
      %p603 = scmp.lt.s32.totalorder %s35, 3
      %p604 = pnand %p602, %p603
      %p605 = pneg %p604
      // Predicated region
      $region73: #{tpu_custom_call.1} parent=5 // pred_check
        _
      $region74: #{tpu_custom_call.1} parent=5 // pred_check_branch
        %607 = sbr.rel (%p604) target = $region76
      $region75: #{tpu_custom_call.1} parent=5 // pred_region
        %s608 = ssub.s32 %s35, 1
        %s609 = sand.u32 %s69, 1
        %s610 = scalar_lea.sflag [#allocation7], %s609
        %s611 = sand.u32 %s69, 1
        %s612 = smul.addr %s611, 8
        %s613 = scalar_lea.vmem [#allocation6], %s612
        // Predicated region
        $region77: #{tpu_custom_call.1} parent=75 // pred_check
          %p614 = pneg %p82
        $region78: #{tpu_custom_call.1} parent=75 // pred_check_branch
          %616 = sbr.rel (%p614) target = $region80
        $region79: #{tpu_custom_call.1} parent=75 // pred_region
          %617 = dma.done %s610, 128
        $region80: #{tpu_custom_call.1} parent=75 // pred_fallthru
          _
        %s618 = sand.u32 %s40, 1
        %s619 = scalar_lea.sflag [#allocation10], %s618
        %s620 = sand.u32 %s97, 1
        %s621 = smul.addr %s620, 4
        %s622 = scalar_lea.vmem [#allocation9], %s621
        // Predicated region
        $region81: #{tpu_custom_call.1} parent=75 // pred_check
          %p623 = pneg %p110
        $region82: #{tpu_custom_call.1} parent=75 // pred_check_branch
          %625 = sbr.rel (%p623) target = $region84
        $region83: #{tpu_custom_call.1} parent=75 // pred_region
          %626 = dma.done %s619, 64
        $region84: #{tpu_custom_call.1} parent=75 // pred_fallthru
          _
        %s627 = sand.u32 %s40, 1
        %s628 = scalar_lea.sflag [#allocation10], %s627
        %s629 = sand.u32 %s125, 1
        %s630 = smul.addr %s629, 4
        %s631 = scalar_lea.vmem [#allocation11], %s630
        // Predicated region
        $region85: #{tpu_custom_call.1} parent=75 // pred_check
          %p632 = pneg %p138
        $region86: #{tpu_custom_call.1} parent=75 // pred_check_branch
          %634 = sbr.rel (%p632) target = $region88
        $region87: #{tpu_custom_call.1} parent=75 // pred_region
          %635 = dma.done %s628, 64
        $region88: #{tpu_custom_call.1} parent=75 // pred_fallthru
          _
        // Predicated region
        $region89: #{tpu_custom_call.1} parent=75 // pred_check
          %p636 = pneg %p159
        $region90: #{tpu_custom_call.1} parent=75 // pred_check_branch
          %638 = sbr.rel (%p636) target = $region92
        $region91: #{tpu_custom_call.1} parent=75 // pred_region
          %639 = dma.done [#allocation13], 256
        $region92: #{tpu_custom_call.1} parent=75 // pred_fallthru
          _
        // Predicated region
        $region93: #{tpu_custom_call.1} parent=75 // pred_check
          %p640 = pneg %p180
        $region94: #{tpu_custom_call.1} parent=75 // pred_check_branch
          %642 = sbr.rel (%p640) target = $region96
        $region95: #{tpu_custom_call.1} parent=75 // pred_region
          %643 = dma.done [#allocation13], 256
        $region96: #{tpu_custom_call.1} parent=75 // pred_fallthru
          _
        // Predicated region
        $region97: #{tpu_custom_call.1} parent=75 // pred_check
          %p644 = pneg %p201
        $region98: #{tpu_custom_call.1} parent=75 // pred_check_branch
          %646 = sbr.rel (%p644) target = $region100
        $region99: #{tpu_custom_call.1} parent=75 // pred_region
          %647 = dma.done [#allocation16], 16
        $region100: #{tpu_custom_call.1} parent=75 // pred_fallthru
          _
        // Predicated region
        $region101: #{tpu_custom_call.1} parent=75 // pred_check
          %p648 = pneg %p222
        $region102: #{tpu_custom_call.1} parent=75 // pred_check_branch
          %650 = sbr.rel (%p648) target = $region104
        $region103: #{tpu_custom_call.1} parent=75 // pred_region
          %651 = dma.done [#allocation16], 16
        $region104: #{tpu_custom_call.1} parent=75 // pred_fallthru
          _
        // Predicated region
        $region105: #{tpu_custom_call.1} parent=75 // pred_check
          %p652 = pneg %p243
        $region106: #{tpu_custom_call.1} parent=75 // pred_check_branch
          %654 = sbr.rel (%p652) target = $region108
        $region107: #{tpu_custom_call.1} parent=75 // pred_region
          %655 = dma.done [#allocation19], 16
        $region108: #{tpu_custom_call.1} parent=75 // pred_fallthru
          _
        // Predicated region
        $region109: #{tpu_custom_call.1} parent=75 // pred_check
          %p656 = pneg %p264
        $region110: #{tpu_custom_call.1} parent=75 // pred_check_branch
          %658 = sbr.rel (%p656) target = $region112
        $region111: #{tpu_custom_call.1} parent=75 // pred_region
          %659 = dma.done [#allocation19], 16
        $region112: #{tpu_custom_call.1} parent=75 // pred_fallthru
          _
        // Predicated region
        $region113: #{tpu_custom_call.1} parent=75 // pred_check
          %p660 = pneg %p285
        $region114: #{tpu_custom_call.1} parent=75 // pred_check_branch
          %662 = sbr.rel (%p660) target = $region116
        $region115: #{tpu_custom_call.1} parent=75 // pred_region
          %663 = dma.done [#allocation22], 16
        $region116: #{tpu_custom_call.1} parent=75 // pred_fallthru
          _
        // Predicated region
        $region117: #{tpu_custom_call.1} parent=75 // pred_check
          %p664 = pneg %p306
        $region118: #{tpu_custom_call.1} parent=75 // pred_check_branch
          %666 = sbr.rel (%p664) target = $region120
        $region119: #{tpu_custom_call.1} parent=75 // pred_region
          %667 = dma.done [#allocation22], 256
        $region120: #{tpu_custom_call.1} parent=75 // pred_fallthru
          _
        // Predicated region
        $region121: #{tpu_custom_call.1} parent=75 // pred_check
          %p668 = pneg %p327
        $region122: #{tpu_custom_call.1} parent=75 // pred_check_branch
          %670 = sbr.rel (%p668) target = $region124
        $region123: #{tpu_custom_call.1} parent=75 // pred_region
          %671 = dma.done [#allocation25], 16
        $region124: #{tpu_custom_call.1} parent=75 // pred_fallthru
          _
        // Predicated region
        $region125: #{tpu_custom_call.1} parent=75 // pred_check
          %p672 = pneg %p348
        $region126: #{tpu_custom_call.1} parent=75 // pred_check_branch
          %674 = sbr.rel (%p672) target = $region128
        $region127: #{tpu_custom_call.1} parent=75 // pred_region
          %675 = dma.done [#allocation25], 1024
        $region128: #{tpu_custom_call.1} parent=75 // pred_fallthru
          _
        // Predicated region
        $region129: #{tpu_custom_call.1} parent=75 // pred_check
          %p676 = pneg %p369
        $region130: #{tpu_custom_call.1} parent=75 // pred_check_branch
          %678 = sbr.rel (%p676) target = $region132
        $region131: #{tpu_custom_call.1} parent=75 // pred_region
          %679 = dma.done [#allocation28], 16
        $region132: #{tpu_custom_call.1} parent=75 // pred_fallthru
          _
        %s680 = sand.u32 %s69, 1
        %s681 = scalar_lea.sflag [#allocation7], %s680
        %s682 = sand.u32 %s69, 1
        %s683 = smul.addr %s682, 8
        %s684 = scalar_lea.vmem [#allocation6], %s683
        %p685 = pneg %p82
        %p686 = pneg %p79
        %s687 = sand.u32 %s40, 1
        %s688 = scalar_lea.sflag [#allocation10], %s687
        %s689 = sand.u32 %s97, 1
        %s690 = smul.addr %s689, 4
        %s691 = scalar_lea.vmem [#allocation9], %s690
        %p692 = pneg %p110
        %p693 = pneg %p107
        %s694 = sand.u32 %s40, 1
        %s695 = scalar_lea.sflag [#allocation10], %s694
        %s696 = sand.u32 %s125, 1
        %s697 = smul.addr %s696, 4
        %s698 = scalar_lea.vmem [#allocation11], %s697
        %p699 = pneg %p138
        %p700 = pneg %p135
        %p701 = pneg %p159
        %p702 = pneg %p156
        %p703 = pneg %p180
        %p704 = pneg %p177
        %p705 = pneg %p201
        %p706 = pneg %p198
        %p707 = pneg %p222
        %p708 = pneg %p219
        %p709 = pneg %p243
        %p710 = pneg %p240
        %p711 = pneg %p264
        %p712 = pneg %p261
        %p713 = pneg %p285
        %p714 = pneg %p282
        %p715 = pneg %p306
        %p716 = pneg %p303
        %p717 = pneg %p327
        %p718 = pneg %p324
        %p719 = pneg %p348
        %p720 = pneg %p345
        %p721 = pneg %p369
        %p722 = pneg %p366
        %p723 = pneg %p397
        %p724 = pneg %p394
        %s725 = sand.u32 %s384, 1
        %s726 = scalar_lea.sflag [#allocation8], %s725
        %s727 = sand.u32 %s384, 1
        %s728 = smul.addr %s727, 8
        %s729 = scalar_lea.vmem [#allocation29], %s728
        %p731 = scmp.eq.s32.totalorder %s47, 0
        // Predicated region
        $region133: #{tpu_custom_call.1} parent=75 // pred_check
          %p732 = pneg %p731
        $region134: #{tpu_custom_call.1} parent=75 // pred_check_branch
          %734 = sbr.rel (%p732) target = $region136
        $region135: #{tpu_custom_call.1} parent=75 // pred_region
          %vm735 = vcmask 7168
          %736 = vst.msk [vmem:[#allocation3] sm:$0xff] %vm735, -inf
          %737 = vst.msk [vmem:[#allocation3 + $0x8] sm:$0xff] %vm735, -inf
          %738 = vst.msk [vmem:[#allocation3 + $0x10] sm:$0xff] %vm735, -inf
          %739 = vst.msk [vmem:[#allocation3 + $0x18] sm:$0xff] %vm735, -inf
          %740 = vst.msk [vmem:[#allocation4] sm:$0xff] %vm735, 0.0
          %741 = vst.msk [vmem:[#allocation4 + $0x8] sm:$0xff] %vm735, 0.0
          %742 = vst.msk [vmem:[#allocation4 + $0x10] sm:$0xff] %vm735, 0.0
          %743 = vst.msk [vmem:[#allocation4 + $0x18] sm:$0xff] %vm735, 0.0
          %vm744 = vcmask 261120
          %745 = vst.msk [vmem:[#allocation5] sm:$0xff] %vm744, 0.0
          %v746 = vld [vmem:[%s613] sm:$0xff]
          %v747 = vpack.c.bf16 %v746, %v746
          %v748 = vld [vmem:[#allocation12] sm:$0xf]
          %v749 = vld [vmem:[#allocation12 + $0x4] sm:$0xf]
          %v750 = vld [vmem:[#allocation12 + $0x8] sm:$0xf]
          %v751 = vld [vmem:[#allocation12 + $0xc] sm:$0xf]
          %v756 = vunpack.c.l.b16 %v748
          %v757 = vunpack.c.l.b16 %v749
          %v758 = vunpack.c.l.b16 %v750
          %v759 = vunpack.c.l.b16 %v751
          %v760 = vpack.c.b16 %v757, %v756
          %v761 = vpack.c.b16 %v759, %v758
          %v765 = vsel %vm744, %v747, 0
          %767 = vmatprep.subr.bf16.mxu0 0
          %768 = vmatpush1.bf16.msra.mxu0 %v760
          %769 = vmatprep.subr.bf16.mxu0 0
          %770 = vmatpush1.bf16.msra.mxu0 %v761
          %771 = vmatprep.subr.bf16.mxu0 0
          %772 = vmatpush1.bf16.msra.mxu0 0
          %773 = vmatprep.subr.bf16.mxu0 0
          %774 = vmatpush1.bf16.msra.mxu0 0
          %775 = vmatprep.subr.bf16.mxu0 0
          %776 = vmatpush1.bf16.msra.mxu0 0
          %777 = vmatprep.subr.bf16.mxu0 0
          %778 = vmatpush1.bf16.msra.mxu0 0
          %779 = vmatprep.subr.bf16.mxu0 0
          %780 = vmatpush1.bf16.msra.mxu0 0
          %781 = vmatprep.subr.bf16.mxu0 0
          %782 = vmatpush1.bf16.msra.mxu0 0
          %783 = vmatprep.subr.bf16.mxu0 0
          %784 = vmatpush1.bf16.msra.mxu0 0
          %785 = vmatprep.subr.bf16.mxu0 0
          %786 = vmatpush1.bf16.msra.mxu0 0
          %787 = vmatprep.subr.bf16.mxu0 0
          %788 = vmatpush1.bf16.msra.mxu0 0
          %789 = vmatprep.subr.bf16.mxu0 0
          %790 = vmatpush1.bf16.msra.mxu0 0
          %791 = vmatprep.subr.bf16.mxu0 0
          %792 = vmatpush1.bf16.msra.mxu0 0
          %793 = vmatprep.subr.bf16.mxu0 0
          %794 = vmatpush1.bf16.msra.mxu0 0
          %795 = vmatprep.subr.bf16.mxu0 0
          %796 = vmatpush1.bf16.msra.mxu0 0
          %797 = vmatprep.subr.bf16.mxu0 0
          %798 = vmatpush1.bf16.msra.mxu0 0
          %799 = vmatprep.mubr.bf16.mxu0 0
          %800 = vmatmul.mubr.bf16.gmra.mrb[0].mxu0 %v765
          %v801 = vpop.f32.mrb[0].mxu0
          %v802 = vadd.f32 0.0, %v801
          %v803 = vpop.f32.mrb[0].mxu0
          %v804 = vpop.f32.mrb[0].mxu0
          %v805 = vpop.f32.mrb[0].mxu0
          %806 = vdwg.mxu0
          %v807 = vpack.c.bf16 %v802, %v802
          %vm808 = vcmask 257024
          %809 = vst.msk [vmem:[#allocation2] sm:$0xf] %vm808, %v807
        $region136: #{tpu_custom_call.1} parent=75 // pred_fallthru
          _
        %s810 = smul.u32 %s47, 8
        %s811 = smul.u32 %s46, 8
        %s812 = sadd.s32 %s811, 7
        %p813 = scmp.le.s32.totalorder %s810, %s812
        // Predicated region
        $region137: #{tpu_custom_call.1} parent=75 // pred_check
          %p814 = pneg %p813
        $region138: #{tpu_custom_call.1} parent=75 // pred_check_branch
          %816 = sbr.rel (%p814) target = $region140
        $region139: #{tpu_custom_call.1} parent=75 // pred_region
          %v817 = vld [vmem:[%s622] sm:$0xf]
          %v818 = vld [vmem:[%s631] sm:$0xf]
          %v819 = vld [vmem:[#allocation2] sm:$0xf]
          %v820 = vlaneseq
          %v821 = vshrl.u32 %v820, 7
          %v822 = vstv %s811
          %v823 = vadd.s32 %v822, %v821
          %v824 = vlaneseq
          %v825 = vand.u32 %v824, 127
          %v826 = vstv %s810
          %v827 = vadd.s32 %v826, %v825
          %vm828 = vcmp.gt.s32.totalorder %v827, %v823
          %v829 = vsel %vm828, -1e+20, 0.0
          %vm830 = vcmask 64512
          %v832 = vsel %vm830, %v819, 0
          %v835 = vsel %vm830, %v817, 0
          %837 = vmatprep.subr.bf16.mxu0 0
          %838 = vmatpush1.bf16.xpose.msra.mxu0 %v835
          %839 = vmatprep.subr.bf16.mxu0 0
          %840 = vmatpush1.bf16.xpose.msra.mxu0 0
          %841 = vmatprep.subr.bf16.mxu0 0
          %842 = vmatpush1.bf16.xpose.msra.mxu0 0
          %843 = vmatprep.subr.bf16.mxu0 0
          %844 = vmatpush1.bf16.xpose.msra.mxu0 0
          %845 = vmatprep.subr.bf16.mxu0 0
          %846 = vmatpush1.bf16.xpose.msra.mxu0 0
          %847 = vmatprep.subr.bf16.mxu0 0
          %848 = vmatpush1.bf16.xpose.msra.mxu0 0
          %849 = vmatprep.subr.bf16.mxu0 0
          %850 = vmatpush1.bf16.xpose.msra.mxu0 0
          %851 = vmatprep.subr.bf16.mxu0 0
          %852 = vmatpush1.bf16.xpose.msra.mxu0 0
          %853 = vmatprep.subr.bf16.mxu0 0
          %854 = vmatpush1.bf16.xpose.msra.mxu0 0
          %855 = vmatprep.subr.bf16.mxu0 0
          %856 = vmatpush1.bf16.xpose.msra.mxu0 0
          %857 = vmatprep.subr.bf16.mxu0 0
          %858 = vmatpush1.bf16.xpose.msra.mxu0 0
          %859 = vmatprep.subr.bf16.mxu0 0
          %860 = vmatpush1.bf16.xpose.msra.mxu0 0
          %861 = vmatprep.subr.bf16.mxu0 0
          %862 = vmatpush1.bf16.xpose.msra.mxu0 0
          %863 = vmatprep.subr.bf16.mxu0 0
          %864 = vmatpush1.bf16.xpose.msra.mxu0 0
          %865 = vmatprep.subr.bf16.mxu0 0
          %866 = vmatpush1.bf16.xpose.msra.mxu0 0
          %867 = vmatprep.subr.bf16.mxu0 0
          %868 = vmatpush1.bf16.xpose.msra.mxu0 0
          %869 = vmatprep.mubr.bf16.mxu0 0
          %870 = vmatmul.mubr.bf16.gmra.mrb[0].mxu0 %v832
          %v871 = vpop.f32.mrb[0].mxu0
          %v872 = vadd.f32 %v829, %v871
          %v873 = vpop.f32.mrb[0].mxu0
          %v874 = vpop.f32.mrb[0].mxu0
          %v875 = vpop.f32.mrb[0].mxu0
          %876 = vdwg.mxu0
          %v877 = vld [vmem:[#allocation3] sm:$0xff]
          %v878 = vsel %vm830, %v872, -inf
          %879 = vmax.xlane.f32.xlu0 %v878
          %v880 = vpop.xlane.xlu0 %879
          %v881 = vmax.f32 %v877, %v880
          %v882 = vsub.f32 %v877, %v881
          %v883 = vmul.f32 %v882, 1.442695
          %v884 = vpow.pop %v883
          %886 = vset.pattern.permute.xlu0 0
          %887 = vperm.xlu0 %886, %v881
          %v888 = vpop.permute.xlu0 %887
          %v890 = vsub.f32 %v872, %v888
          %v891 = vmul.f32 %v890, 1.442695
          %v892 = vpow.pop %v891
          %v893 = vld [vmem:[#allocation4] sm:$0xff]
          %v894 = vmul.f32 %v884, %v893
          %v895 = vsel %vm830, %v892, 0.0
          %896 = vadd.xlane.f32.xlu0 %v895
          %v897 = vpop.xlane.xlu0 %896
          %v898 = vadd.f32 %v894, %v897
          %vm899 = vcmask 7168
          %900 = vst.msk [vmem:[#allocation4] sm:$0xff] %vm899, %v898
          %v901 = vld [vmem:[#allocation5] sm:$0xff]
          %903 = vset.pattern.permute.xlu0 0
          %904 = vperm.xlu0 %903, %v884
          %v905 = vpop.permute.xlu0 %904
          %v907 = vmul.f32 %v905, %v901
          %v908 = vpack.c.bf16 %v892, %v892
          %v910 = vsel %vm830, %v908, 0
          %vm912 = vcmask 1043456
          %v914 = vsel %vm912, %v818, 0
          %916 = vmatprep.subr.bf16.mxu0 0
          %917 = vmatpush1.bf16.msra.mxu0 %v914
          %918 = vmatprep.subr.bf16.mxu0 0
          %919 = vmatpush1.bf16.msra.mxu0 0
          %920 = vmatprep.subr.bf16.mxu0 0
          %921 = vmatpush1.bf16.msra.mxu0 0
          %922 = vmatprep.subr.bf16.mxu0 0
          %923 = vmatpush1.bf16.msra.mxu0 0
          %924 = vmatprep.subr.bf16.mxu0 0
          %925 = vmatpush1.bf16.msra.mxu0 0
          %926 = vmatprep.subr.bf16.mxu0 0
          %927 = vmatpush1.bf16.msra.mxu0 0
          %928 = vmatprep.subr.bf16.mxu0 0
          %929 = vmatpush1.bf16.msra.mxu0 0
          %930 = vmatprep.subr.bf16.mxu0 0
          %931 = vmatpush1.bf16.msra.mxu0 0
          %932 = vmatprep.subr.bf16.mxu0 0
          %933 = vmatpush1.bf16.msra.mxu0 0
          %934 = vmatprep.subr.bf16.mxu0 0
          %935 = vmatpush1.bf16.msra.mxu0 0
          %936 = vmatprep.subr.bf16.mxu0 0
          %937 = vmatpush1.bf16.msra.mxu0 0
          %938 = vmatprep.subr.bf16.mxu0 0
          %939 = vmatpush1.bf16.msra.mxu0 0
          %940 = vmatprep.subr.bf16.mxu0 0
          %941 = vmatpush1.bf16.msra.mxu0 0
          %942 = vmatprep.subr.bf16.mxu0 0
          %943 = vmatpush1.bf16.msra.mxu0 0
          %944 = vmatprep.subr.bf16.mxu0 0
          %945 = vmatpush1.bf16.msra.mxu0 0
          %946 = vmatprep.subr.bf16.mxu0 0
          %947 = vmatpush1.bf16.msra.mxu0 0
          %948 = vmatprep.mubr.bf16.mxu0 0
          %949 = vmatmul.mubr.bf16.gmra.mrb[0].mxu0 %v910
          %v950 = vpop.f32.mrb[0].mxu0
          %v951 = vadd.f32 0.0, %v950
          %v952 = vpop.f32.mrb[0].mxu0
          %v953 = vpop.f32.mrb[0].mxu0
          %v954 = vpop.f32.mrb[0].mxu0
          %955 = vdwg.mxu0
          %v956 = vadd.f32 %v907, %v951
          %957 = vst.msk [vmem:[#allocation5] sm:$0xff] %vm830, %v956
          %958 = vst.msk [vmem:[#allocation3] sm:$0xff] %vm899, %v881
          %v960 = vunpack.c.l.b16 %v819
          %v961 = vpack.c.b16 %v960, %v960
          %962 = vrot.lane.b32.xlu0 %v961, 120
          %v963 = vpop.permute.xlu0 %962
          %v965 = vunpack.c.l.b16 %v817
          %v966 = vpack.c.b16 %v965, %v965
          %967 = vrot.lane.b32.xlu0 %v966, 120
          %v968 = vpop.permute.xlu0 %967
          %v970 = vsel %vm830, %v963, 0
          %v973 = vsel %vm830, %v968, 0
          %975 = vmatprep.subr.bf16.mxu0 0
          %976 = vmatpush1.bf16.xpose.msra.mxu0 %v973
          %977 = vmatprep.subr.bf16.mxu0 0
          %978 = vmatpush1.bf16.xpose.msra.mxu0 0
          %979 = vmatprep.subr.bf16.mxu0 0
          %980 = vmatpush1.bf16.xpose.msra.mxu0 0
          %981 = vmatprep.subr.bf16.mxu0 0
          %982 = vmatpush1.bf16.xpose.msra.mxu0 0
          %983 = vmatprep.subr.bf16.mxu0 0
          %984 = vmatpush1.bf16.xpose.msra.mxu0 0
          %985 = vmatprep.subr.bf16.mxu0 0
          %986 = vmatpush1.bf16.xpose.msra.mxu0 0
          %987 = vmatprep.subr.bf16.mxu0 0
          %988 = vmatpush1.bf16.xpose.msra.mxu0 0
          %989 = vmatprep.subr.bf16.mxu0 0
          %990 = vmatpush1.bf16.xpose.msra.mxu0 0
          %991 = vmatprep.subr.bf16.mxu0 0
          %992 = vmatpush1.bf16.xpose.msra.mxu0 0
          %993 = vmatprep.subr.bf16.mxu0 0
          %994 = vmatpush1.bf16.xpose.msra.mxu0 0
          %995 = vmatprep.subr.bf16.mxu0 0
          %996 = vmatpush1.bf16.xpose.msra.mxu0 0
          %997 = vmatprep.subr.bf16.mxu0 0
          %998 = vmatpush1.bf16.xpose.msra.mxu0 0
          %999 = vmatprep.subr.bf16.mxu0 0
          %1000 = vmatpush1.bf16.xpose.msra.mxu0 0
          %1001 = vmatprep.subr.bf16.mxu0 0
          %1002 = vmatpush1.bf16.xpose.msra.mxu0 0
          %1003 = vmatprep.subr.bf16.mxu0 0
          %1004 = vmatpush1.bf16.xpose.msra.mxu0 0
          %1005 = vmatprep.subr.bf16.mxu0 0
          %1006 = vmatpush1.bf16.xpose.msra.mxu0 0
          %1007 = vmatprep.mubr.bf16.mxu0 0
          %1008 = vmatmul.mubr.bf16.gmra.mrb[0].mxu0 %v970
          %v1009 = vpop.f32.mrb[0].mxu0
          %v1010 = vadd.f32 %v829, %v1009
          %v1011 = vpop.f32.mrb[0].mxu0
          %v1012 = vpop.f32.mrb[0].mxu0
          %v1013 = vpop.f32.mrb[0].mxu0
          %1014 = vdwg.mxu0
          %s1015 = scalar_lea.vmem [#allocation3], 8
          %v1016 = vld [vmem:[%s1015] sm:$0xff]
          %v1017 = vsel %vm830, %v1010, -inf
          %1018 = vmax.xlane.f32.xlu0 %v1017
          %v1019 = vpop.xlane.xlu0 %1018
          %v1020 = vmax.f32 %v1016, %v1019
          %v1021 = vsub.f32 %v1016, %v1020
          %v1022 = vmul.f32 %v1021, 1.442695
          %v1023 = vpow.pop %v1022
          %1025 = vset.pattern.permute.xlu0 0
          %1026 = vperm.xlu0 %1025, %v1020
          %v1027 = vpop.permute.xlu0 %1026
          %v1029 = vsub.f32 %v1010, %v1027
          %v1030 = vmul.f32 %v1029, 1.442695
          %v1031 = vpow.pop %v1030
          %s1032 = scalar_lea.vmem [#allocation4], 8
          %v1033 = vld [vmem:[%s1032] sm:$0xff]
          %v1034 = vmul.f32 %v1023, %v1033
          %v1035 = vsel %vm830, %v1031, 0.0
          %1036 = vadd.xlane.f32.xlu0 %v1035
          %v1037 = vpop.xlane.xlu0 %1036
          %v1038 = vadd.f32 %v1034, %v1037
          %1039 = vst.msk [vmem:[%s1032] sm:$0xff] %vm899, %v1038
          %v1040 = vld [vmem:[#allocation5] sm:$0xff]
          %1042 = vset.pattern.permute.xlu0 0
          %1043 = vperm.xlu0 %1042, %v1023
          %v1044 = vpop.permute.xlu0 %1043
          %v1046 = vmul.f32 %v1044, %v1040
          %v1047 = vpack.c.bf16 %v1031, %v1031
          %v1049 = vunpack.c.l.b16 %v818
          %v1050 = vpack.c.b16 %v1049, %v1049
          %1051 = vrot.lane.b32.xlu0 %v1050, 120
          %v1052 = vpop.permute.xlu0 %1051
          %v1054 = vsel %vm830, %v1047, 0
          %v1057 = vsel %vm912, %v1052, 0
          %1059 = vmatprep.subr.bf16.mxu0 0
          %1060 = vmatpush1.bf16.msra.mxu0 %v1057
          %1061 = vmatprep.subr.bf16.mxu0 0
          %1062 = vmatpush1.bf16.msra.mxu0 0
          %1063 = vmatprep.subr.bf16.mxu0 0
          %1064 = vmatpush1.bf16.msra.mxu0 0
          %1065 = vmatprep.subr.bf16.mxu0 0
          %1066 = vmatpush1.bf16.msra.mxu0 0
          %1067 = vmatprep.subr.bf16.mxu0 0
          %1068 = vmatpush1.bf16.msra.mxu0 0
          %1069 = vmatprep.subr.bf16.mxu0 0
          %1070 = vmatpush1.bf16.msra.mxu0 0
          %1071 = vmatprep.subr.bf16.mxu0 0
          %1072 = vmatpush1.bf16.msra.mxu0 0
          %1073 = vmatprep.subr.bf16.mxu0 0
          %1074 = vmatpush1.bf16.msra.mxu0 0
          %1075 = vmatprep.subr.bf16.mxu0 0
          %1076 = vmatpush1.bf16.msra.mxu0 0
          %1077 = vmatprep.subr.bf16.mxu0 0
          %1078 = vmatpush1.bf16.msra.mxu0 0
          %1079 = vmatprep.subr.bf16.mxu0 0
          %1080 = vmatpush1.bf16.msra.mxu0 0
          %1081 = vmatprep.subr.bf16.mxu0 0
          %1082 = vmatpush1.bf16.msra.mxu0 0
          %1083 = vmatprep.subr.bf16.mxu0 0
          %1084 = vmatpush1.bf16.msra.mxu0 0
          %1085 = vmatprep.subr.bf16.mxu0 0
          %1086 = vmatpush1.bf16.msra.mxu0 0
          %1087 = vmatprep.subr.bf16.mxu0 0
          %1088 = vmatpush1.bf16.msra.mxu0 0
          %1089 = vmatprep.subr.bf16.mxu0 0
          %1090 = vmatpush1.bf16.msra.mxu0 0
          %1091 = vmatprep.mubr.bf16.mxu0 0
          %1092 = vmatmul.mubr.bf16.gmra.mrb[0].mxu0 %v1054
          %v1093 = vpop.f32.mrb[0].mxu0
          %v1094 = vadd.f32 0.0, %v1093
          %v1095 = vpop.f32.mrb[0].mxu0
          %v1096 = vpop.f32.mrb[0].mxu0
          %v1097 = vpop.f32.mrb[0].mxu0
          %1098 = vdwg.mxu0
          %1100 = vrot.lane.b32.xlu0 %v1094, 8
          %v1101 = vpop.permute.xlu0 %1100
          %v1103 = vadd.f32 %v1046, %v1101
          %vm1104 = vcmask 130112
          %1105 = vst.msk [vmem:[#allocation5] sm:$0xff] %vm1104, %v1103
          %1106 = vst.msk [vmem:[%s1015] sm:$0xff] %vm899, %v1020
          %1107 = vrot.lane.b32.xlu0 %v961, 112
          %v1108 = vpop.permute.xlu0 %1107
          %1109 = vrot.lane.b32.xlu0 %v966, 112
          %v1110 = vpop.permute.xlu0 %1109
          %v1112 = vsel %vm830, %v1108, 0
          %v1115 = vsel %vm830, %v1110, 0
          %1117 = vmatprep.subr.bf16.mxu0 0
          %1118 = vmatpush1.bf16.xpose.msra.mxu0 %v1115
          %1119 = vmatprep.subr.bf16.mxu0 0
          %1120 = vmatpush1.bf16.xpose.msra.mxu0 0
          %1121 = vmatprep.subr.bf16.mxu0 0
          %1122 = vmatpush1.bf16.xpose.msra.mxu0 0
          %1123 = vmatprep.subr.bf16.mxu0 0
          %1124 = vmatpush1.bf16.xpose.msra.mxu0 0
          %1125 = vmatprep.subr.bf16.mxu0 0
          %1126 = vmatpush1.bf16.xpose.msra.mxu0 0
          %1127 = vmatprep.subr.bf16.mxu0 0
          %1128 = vmatpush1.bf16.xpose.msra.mxu0 0
          %1129 = vmatprep.subr.bf16.mxu0 0
          %1130 = vmatpush1.bf16.xpose.msra.mxu0 0
          %1131 = vmatprep.subr.bf16.mxu0 0
          %1132 = vmatpush1.bf16.xpose.msra.mxu0 0
          %1133 = vmatprep.subr.bf16.mxu0 0
          %1134 = vmatpush1.bf16.xpose.msra.mxu0 0
          %1135 = vmatprep.subr.bf16.mxu0 0
          %1136 = vmatpush1.bf16.xpose.msra.mxu0 0
          %1137 = vmatprep.subr.bf16.mxu0 0
          %1138 = vmatpush1.bf16.xpose.msra.mxu0 0
          %1139 = vmatprep.subr.bf16.mxu0 0
          %1140 = vmatpush1.bf16.xpose.msra.mxu0 0
          %1141 = vmatprep.subr.bf16.mxu0 0
          %1142 = vmatpush1.bf16.xpose.msra.mxu0 0
          %1143 = vmatprep.subr.bf16.mxu0 0
          %1144 = vmatpush1.bf16.xpose.msra.mxu0 0
          %1145 = vmatprep.subr.bf16.mxu0 0
          %1146 = vmatpush1.bf16.xpose.msra.mxu0 0
          %1147 = vmatprep.subr.bf16.mxu0 0
          %1148 = vmatpush1.bf16.xpose.msra.mxu0 0
          %1149 = vmatprep.mubr.bf16.mxu0 0
          %1150 = vmatmul.mubr.bf16.gmra.mrb[0].mxu0 %v1112
          %v1151 = vpop.f32.mrb[0].mxu0
          %v1152 = vadd.f32 %v829, %v1151
          %v1153 = vpop.f32.mrb[0].mxu0
          %v1154 = vpop.f32.mrb[0].mxu0
          %v1155 = vpop.f32.mrb[0].mxu0
          %1156 = vdwg.mxu0
          %s1157 = scalar_lea.vmem [#allocation3], 16
          %v1158 = vld [vmem:[%s1157] sm:$0xff]
          %v1159 = vsel %vm830, %v1152, -inf
          %1160 = vmax.xlane.f32.xlu0 %v1159
          %v1161 = vpop.xlane.xlu0 %1160
          %v1162 = vmax.f32 %v1158, %v1161
          %v1163 = vsub.f32 %v1158, %v1162
          %v1164 = vmul.f32 %v1163, 1.442695
          %v1165 = vpow.pop %v1164
          %1167 = vset.pattern.permute.xlu0 0
          %1168 = vperm.xlu0 %1167, %v1162
          %v1169 = vpop.permute.xlu0 %1168
          %v1171 = vsub.f32 %v1152, %v1169
          %v1172 = vmul.f32 %v1171, 1.442695
          %v1173 = vpow.pop %v1172
          %s1174 = scalar_lea.vmem [#allocation4], 16
          %v1175 = vld [vmem:[%s1174] sm:$0xff]
          %v1176 = vmul.f32 %v1165, %v1175
          %v1177 = vsel %vm830, %v1173, 0.0
          %1178 = vadd.xlane.f32.xlu0 %v1177
          %v1179 = vpop.xlane.xlu0 %1178
          %v1180 = vadd.f32 %v1176, %v1179
          %1181 = vst.msk [vmem:[%s1174] sm:$0xff] %vm899, %v1180
          %v1182 = vld [vmem:[#allocation5] sm:$0xff]
          %1184 = vset.pattern.permute.xlu0 0
          %1185 = vperm.xlu0 %1184, %v1165
          %v1186 = vpop.permute.xlu0 %1185
          %v1188 = vmul.f32 %v1186, %v1182
          %v1189 = vpack.c.bf16 %v1173, %v1173
          %1190 = vrot.lane.b32.xlu0 %v1050, 112
          %v1191 = vpop.permute.xlu0 %1190
          %v1193 = vsel %vm830, %v1189, 0
          %v1196 = vsel %vm912, %v1191, 0
          %1198 = vmatprep.subr.bf16.mxu0 0
          %1199 = vmatpush1.bf16.msra.mxu0 %v1196
          %1200 = vmatprep.subr.bf16.mxu0 0
          %1201 = vmatpush1.bf16.msra.mxu0 0
          %1202 = vmatprep.subr.bf16.mxu0 0
          %1203 = vmatpush1.bf16.msra.mxu0 0
          %1204 = vmatprep.subr.bf16.mxu0 0
          %1205 = vmatpush1.bf16.msra.mxu0 0
          %1206 = vmatprep.subr.bf16.mxu0 0
          %1207 = vmatpush1.bf16.msra.mxu0 0
          %1208 = vmatprep.subr.bf16.mxu0 0
          %1209 = vmatpush1.bf16.msra.mxu0 0
          %1210 = vmatprep.subr.bf16.mxu0 0
          %1211 = vmatpush1.bf16.msra.mxu0 0
          %1212 = vmatprep.subr.bf16.mxu0 0
          %1213 = vmatpush1.bf16.msra.mxu0 0
          %1214 = vmatprep.subr.bf16.mxu0 0
          %1215 = vmatpush1.bf16.msra.mxu0 0
          %1216 = vmatprep.subr.bf16.mxu0 0
          %1217 = vmatpush1.bf16.msra.mxu0 0
          %1218 = vmatprep.subr.bf16.mxu0 0
          %1219 = vmatpush1.bf16.msra.mxu0 0
          %1220 = vmatprep.subr.bf16.mxu0 0
          %1221 = vmatpush1.bf16.msra.mxu0 0
          %1222 = vmatprep.subr.bf16.mxu0 0
          %1223 = vmatpush1.bf16.msra.mxu0 0
          %1224 = vmatprep.subr.bf16.mxu0 0
          %1225 = vmatpush1.bf16.msra.mxu0 0
          %1226 = vmatprep.subr.bf16.mxu0 0
          %1227 = vmatpush1.bf16.msra.mxu0 0
          %1228 = vmatprep.subr.bf16.mxu0 0
          %1229 = vmatpush1.bf16.msra.mxu0 0
          %1230 = vmatprep.mubr.bf16.mxu0 0
          %1231 = vmatmul.mubr.bf16.gmra.mrb[0].mxu0 %v1193
          %v1232 = vpop.f32.mrb[0].mxu0
          %v1233 = vadd.f32 0.0, %v1232
          %v1234 = vpop.f32.mrb[0].mxu0
          %v1235 = vpop.f32.mrb[0].mxu0
          %v1236 = vpop.f32.mrb[0].mxu0
          %1237 = vdwg.mxu0
          %1239 = vrot.lane.b32.xlu0 %v1233, 16
          %v1240 = vpop.permute.xlu0 %1239
          %v1242 = vadd.f32 %v1188, %v1240
          %vm1243 = vcmask 195712
          %1244 = vst.msk [vmem:[#allocation5] sm:$0xff] %vm1243, %v1242
          %1245 = vst.msk [vmem:[%s1157] sm:$0xff] %vm899, %v1162
          %1246 = vrot.lane.b32.xlu0 %v961, 104
          %v1247 = vpop.permute.xlu0 %1246
          %1248 = vrot.lane.b32.xlu0 %v966, 104
          %v1249 = vpop.permute.xlu0 %1248
          %v1251 = vsel %vm830, %v1247, 0
          %v1254 = vsel %vm830, %v1249, 0
          %1256 = vmatprep.subr.bf16.mxu0 0
          %1257 = vmatpush1.bf16.xpose.msra.mxu0 %v1254
          %1258 = vmatprep.subr.bf16.mxu0 0
          %1259 = vmatpush1.bf16.xpose.msra.mxu0 0
          %1260 = vmatprep.subr.bf16.mxu0 0
          %1261 = vmatpush1.bf16.xpose.msra.mxu0 0
          %1262 = vmatprep.subr.bf16.mxu0 0
          %1263 = vmatpush1.bf16.xpose.msra.mxu0 0
          %1264 = vmatprep.subr.bf16.mxu0 0
          %1265 = vmatpush1.bf16.xpose.msra.mxu0 0
          %1266 = vmatprep.subr.bf16.mxu0 0
          %1267 = vmatpush1.bf16.xpose.msra.mxu0 0
          %1268 = vmatprep.subr.bf16.mxu0 0
          %1269 = vmatpush1.bf16.xpose.msra.mxu0 0
          %1270 = vmatprep.subr.bf16.mxu0 0
          %1271 = vmatpush1.bf16.xpose.msra.mxu0 0
          %1272 = vmatprep.subr.bf16.mxu0 0
          %1273 = vmatpush1.bf16.xpose.msra.mxu0 0
          %1274 = vmatprep.subr.bf16.mxu0 0
          %1275 = vmatpush1.bf16.xpose.msra.mxu0 0
          %1276 = vmatprep.subr.bf16.mxu0 0
          %1277 = vmatpush1.bf16.xpose.msra.mxu0 0
          %1278 = vmatprep.subr.bf16.mxu0 0
          %1279 = vmatpush1.bf16.xpose.msra.mxu0 0
          %1280 = vmatprep.subr.bf16.mxu0 0
          %1281 = vmatpush1.bf16.xpose.msra.mxu0 0
          %1282 = vmatprep.subr.bf16.mxu0 0
          %1283 = vmatpush1.bf16.xpose.msra.mxu0 0
          %1284 = vmatprep.subr.bf16.mxu0 0
          %1285 = vmatpush1.bf16.xpose.msra.mxu0 0
          %1286 = vmatprep.subr.bf16.mxu0 0
          %1287 = vmatpush1.bf16.xpose.msra.mxu0 0
          %1288 = vmatprep.mubr.bf16.mxu0 0
          %1289 = vmatmul.mubr.bf16.gmra.mrb[0].mxu0 %v1251
          %v1290 = vpop.f32.mrb[0].mxu0
          %v1291 = vadd.f32 %v829, %v1290
          %v1292 = vpop.f32.mrb[0].mxu0
          %v1293 = vpop.f32.mrb[0].mxu0
          %v1294 = vpop.f32.mrb[0].mxu0
          %1295 = vdwg.mxu0
          %s1296 = scalar_lea.vmem [#allocation3], 24
          %v1297 = vld [vmem:[%s1296] sm:$0xff]
          %v1298 = vsel %vm830, %v1291, -inf
          %1299 = vmax.xlane.f32.xlu0 %v1298
          %v1300 = vpop.xlane.xlu0 %1299
          %v1301 = vmax.f32 %v1297, %v1300
          %v1302 = vsub.f32 %v1297, %v1301
          %v1303 = vmul.f32 %v1302, 1.442695
          %v1304 = vpow.pop %v1303
          %1306 = vset.pattern.permute.xlu0 0
          %1307 = vperm.xlu0 %1306, %v1301
          %v1308 = vpop.permute.xlu0 %1307
          %v1310 = vsub.f32 %v1291, %v1308
          %v1311 = vmul.f32 %v1310, 1.442695
          %v1312 = vpow.pop %v1311
          %s1313 = scalar_lea.vmem [#allocation4], 24
          %v1314 = vld [vmem:[%s1313] sm:$0xff]
          %v1315 = vmul.f32 %v1304, %v1314
          %v1316 = vsel %vm830, %v1312, 0.0
          %1317 = vadd.xlane.f32.xlu0 %v1316
          %v1318 = vpop.xlane.xlu0 %1317
          %v1319 = vadd.f32 %v1315, %v1318
          %1320 = vst.msk [vmem:[%s1313] sm:$0xff] %vm899, %v1319
          %v1321 = vld [vmem:[#allocation5] sm:$0xff]
          %1323 = vset.pattern.permute.xlu0 0
          %1324 = vperm.xlu0 %1323, %v1304
          %v1325 = vpop.permute.xlu0 %1324
          %v1327 = vmul.f32 %v1325, %v1321
          %v1328 = vpack.c.bf16 %v1312, %v1312
          %1329 = vrot.lane.b32.xlu0 %v1050, 104
          %v1330 = vpop.permute.xlu0 %1329
          %v1332 = vsel %vm830, %v1328, 0
          %v1335 = vsel %vm912, %v1330, 0
          %1337 = vmatprep.subr.bf16.mxu0 0
          %1338 = vmatpush1.bf16.msra.mxu0 %v1335
          %1339 = vmatprep.subr.bf16.mxu0 0
          %1340 = vmatpush1.bf16.msra.mxu0 0
          %1341 = vmatprep.subr.bf16.mxu0 0
          %1342 = vmatpush1.bf16.msra.mxu0 0
          %1343 = vmatprep.subr.bf16.mxu0 0
          %1344 = vmatpush1.bf16.msra.mxu0 0
          %1345 = vmatprep.subr.bf16.mxu0 0
          %1346 = vmatpush1.bf16.msra.mxu0 0
          %1347 = vmatprep.subr.bf16.mxu0 0
          %1348 = vmatpush1.bf16.msra.mxu0 0
          %1349 = vmatprep.subr.bf16.mxu0 0
          %1350 = vmatpush1.bf16.msra.mxu0 0
          %1351 = vmatprep.subr.bf16.mxu0 0
          %1352 = vmatpush1.bf16.msra.mxu0 0
          %1353 = vmatprep.subr.bf16.mxu0 0
          %1354 = vmatpush1.bf16.msra.mxu0 0
          %1355 = vmatprep.subr.bf16.mxu0 0
          %1356 = vmatpush1.bf16.msra.mxu0 0
          %1357 = vmatprep.subr.bf16.mxu0 0
          %1358 = vmatpush1.bf16.msra.mxu0 0
          %1359 = vmatprep.subr.bf16.mxu0 0
          %1360 = vmatpush1.bf16.msra.mxu0 0
          %1361 = vmatprep.subr.bf16.mxu0 0
          %1362 = vmatpush1.bf16.msra.mxu0 0
          %1363 = vmatprep.subr.bf16.mxu0 0
          %1364 = vmatpush1.bf16.msra.mxu0 0
          %1365 = vmatprep.subr.bf16.mxu0 0
          %1366 = vmatpush1.bf16.msra.mxu0 0
          %1367 = vmatprep.subr.bf16.mxu0 0
          %1368 = vmatpush1.bf16.msra.mxu0 0
          %1369 = vmatprep.mubr.bf16.mxu0 0
          %1370 = vmatmul.mubr.bf16.gmra.mrb[0].mxu0 %v1332
          %v1371 = vpop.f32.mrb[0].mxu0
          %v1372 = vadd.f32 0.0, %v1371
          %v1373 = vpop.f32.mrb[0].mxu0
          %v1374 = vpop.f32.mrb[0].mxu0
          %v1375 = vpop.f32.mrb[0].mxu0
          %1376 = vdwg.mxu0
          %1378 = vrot.lane.b32.xlu0 %v1372, 24
          %v1379 = vpop.permute.xlu0 %1378
          %v1381 = vadd.f32 %v1327, %v1379
          %vm1382 = vcmask 261312
          %1383 = vst.msk [vmem:[#allocation5] sm:$0xff] %vm1382, %v1381
          %1384 = vst.msk [vmem:[%s1296] sm:$0xff] %vm899, %v1301
        $region140: #{tpu_custom_call.1} parent=75 // pred_fallthru
          _
        // Predicated region
        $region141: #{tpu_custom_call.1} parent=75 // pred_check
          %p1385 = pneg %p731
        $region142: #{tpu_custom_call.1} parent=75 // pred_check_branch
          %1387 = sbr.rel (%p1385) target = $region144
        $region143: #{tpu_custom_call.1} parent=75 // pred_region
          %v1388 = vld [vmem:[#allocation5] sm:$0xff]
          %v1389 = vld [vmem:[#allocation4] sm:$0xff]
          %v1390 = vrcp.pop %v1389
          %1392 = vset.pattern.permute.xlu0 0
          %1393 = vperm.xlu0 %1392, %v1390
          %v1394 = vpop.permute.xlu0 %1393
          %v1396 = vmul.f32 %v1388, %v1394
          %vm1397 = vcmask 64512
          %1398 = vst.msk [vmem:[#allocation5] sm:$0xff] %vm1397, %v1396
          %v1399 = vld [vmem:[#allocation5] sm:$0xff]
          %s1400 = scalar_lea.vmem [#allocation4], 8
          %v1401 = vld [vmem:[%s1400] sm:$0xff]
          %v1402 = vrcp.pop %v1401
          %1404 = vset.pattern.permute.xlu0 0
          %1405 = vperm.xlu0 %1404, %v1402
          %v1406 = vpop.permute.xlu0 %1405
          %v1408 = vmul.f32 %v1399, %v1406
          %vm1409 = vcmask 130112
          %1410 = vst.msk [vmem:[#allocation5] sm:$0xff] %vm1409, %v1408
          %v1411 = vld [vmem:[#allocation5] sm:$0xff]
          %s1412 = scalar_lea.vmem [#allocation4], 16
          %v1413 = vld [vmem:[%s1412] sm:$0xff]
          %v1414 = vrcp.pop %v1413
          %1416 = vset.pattern.permute.xlu0 0
          %1417 = vperm.xlu0 %1416, %v1414
          %v1418 = vpop.permute.xlu0 %1417
          %v1420 = vmul.f32 %v1411, %v1418
          %vm1421 = vcmask 195712
          %1422 = vst.msk [vmem:[#allocation5] sm:$0xff] %vm1421, %v1420
          %v1423 = vld [vmem:[#allocation5] sm:$0xff]
          %s1424 = scalar_lea.vmem [#allocation4], 24
          %v1425 = vld [vmem:[%s1424] sm:$0xff]
          %v1426 = vrcp.pop %v1425
          %1428 = vset.pattern.permute.xlu0 0
          %1429 = vperm.xlu0 %1428, %v1426
          %v1430 = vpop.permute.xlu0 %1429
          %v1432 = vmul.f32 %v1423, %v1430
          %vm1433 = vcmask 261312
          %1434 = vst.msk [vmem:[#allocation5] sm:$0xff] %vm1433, %v1432
          %v1435 = vld [vmem:[#allocation5] sm:$0xff]
          %v1436 = vpack.c.bf16 %v1435, %v1435
          %v1437 = vld [vmem:[#allocation14] sm:$0xf]
          %v1438 = vld [vmem:[#allocation14 + $0x4] sm:$0xf]
          %v1439 = vld [vmem:[#allocation14 + $0x8] sm:$0xf]
          %v1440 = vld [vmem:[#allocation14 + $0xc] sm:$0xf]
          %v1441 = vld [vmem:[#allocation15] sm:$0x1]
          %v1443 = vlaneseq
          %v1444 = vshrl.u32 %v1443, 7
          %v1445 = vsub.s32 0, %v1444
          %v1446 = vrot.slane %v1441, %v1445
          %v1452 = vunpack.c.l.b16 %v1437
          %v1453 = vunpack.c.l.b16 %v1438
          %v1454 = vunpack.c.l.b16 %v1439
          %v1455 = vunpack.c.l.b16 %v1440
          %v1456 = vpack.c.b16 %v1453, %v1452
          %v1457 = vpack.c.b16 %v1455, %v1454
          %vm1460 = vcmask 261120
          %v1462 = vsel %vm1460, %v1436, 0
          %1464 = vmatprep.subr.bf16.mxu0 0
          %1465 = vmatpush1.bf16.msra.mxu0 %v1456
          %1466 = vmatprep.subr.bf16.mxu0 0
          %1467 = vmatpush1.bf16.msra.mxu0 %v1457
          %1468 = vmatprep.subr.bf16.mxu0 0
          %1469 = vmatpush1.bf16.msra.mxu0 0
          %1470 = vmatprep.subr.bf16.mxu0 0
          %1471 = vmatpush1.bf16.msra.mxu0 0
          %1472 = vmatprep.subr.bf16.mxu0 0
          %1473 = vmatpush1.bf16.msra.mxu0 0
          %1474 = vmatprep.subr.bf16.mxu0 0
          %1475 = vmatpush1.bf16.msra.mxu0 0
          %1476 = vmatprep.subr.bf16.mxu0 0
          %1477 = vmatpush1.bf16.msra.mxu0 0
          %1478 = vmatprep.subr.bf16.mxu0 0
          %1479 = vmatpush1.bf16.msra.mxu0 0
          %1480 = vmatprep.subr.bf16.mxu0 0
          %1481 = vmatpush1.bf16.msra.mxu0 0
          %1482 = vmatprep.subr.bf16.mxu0 0
          %1483 = vmatpush1.bf16.msra.mxu0 0
          %1484 = vmatprep.subr.bf16.mxu0 0
          %1485 = vmatpush1.bf16.msra.mxu0 0
          %1486 = vmatprep.subr.bf16.mxu0 0
          %1487 = vmatpush1.bf16.msra.mxu0 0
          %1488 = vmatprep.subr.bf16.mxu0 0
          %1489 = vmatpush1.bf16.msra.mxu0 0
          %1490 = vmatprep.subr.bf16.mxu0 0
          %1491 = vmatpush1.bf16.msra.mxu0 0
          %1492 = vmatprep.subr.bf16.mxu0 0
          %1493 = vmatpush1.bf16.msra.mxu0 0
          %1494 = vmatprep.subr.bf16.mxu0 0
          %1495 = vmatpush1.bf16.msra.mxu0 0
          %1496 = vmatprep.mubr.bf16.mxu0 0
          %1497 = vmatmul.mubr.bf16.gmra.mrb[0].mxu0 %v1462
          %v1498 = vpop.f32.mrb[0].mxu0
          %v1499 = vadd.f32 %v1446, %v1498
          %v1500 = vpop.f32.mrb[0].mxu0
          %v1501 = vpop.f32.mrb[0].mxu0
          %v1502 = vpop.f32.mrb[0].mxu0
          %1503 = vdwg.mxu0
          %v1504 = vld [vmem:[%s613] sm:$0xff]
          %v1505 = vadd.f32 %v1499, %v1504
          %v1506 = vld [vmem:[#allocation17] sm:$0x1]
          %v1507 = vld [vmem:[#allocation18] sm:$0x1]
          %v1508 = vsel %vm1460, %v1505, 0.0
          %1509 = vadd.xlane.f32.xlu0 %v1508
          %v1510 = vpop.xlane.xlu0 %1509
          %v1511 = vrcp.pop 32.0
          %v1512 = vmul.f32 %v1510, %v1511
          %v1513 = vsub.f32 %v1505, %v1512
          %v1514 = vmul.f32 %v1513, %v1513
          %v1515 = vsel %vm1460, %v1514, 0.0
          %1516 = vadd.xlane.f32.xlu0 %v1515
          %v1517 = vpop.xlane.xlu0 %1516
          %v1518 = vmul.f32 %v1517, %v1511
          %v1519 = vadd.f32 %v1518, 1e-05
          %v1520 = vrsqrt.pop %v1519
          %v1521 = vmul.f32 %v1513, %v1520
          %v1523 = vlaneseq
          %v1524 = vshrl.u32 %v1523, 7
          %v1525 = vsub.s32 0, %v1524
          %v1526 = vrot.slane %v1506, %v1525
          %v1528 = vmul.f32 %v1521, %v1526
          %v1530 = vlaneseq
          %v1531 = vshrl.u32 %v1530, 7
          %v1532 = vsub.s32 0, %v1531
          %v1533 = vrot.slane %v1507, %v1532
          %v1535 = vadd.f32 %v1528, %v1533
          %v1536 = vpack.c.bf16 %v1535, %v1535
          %v1537 = vld [vmem:[#allocation23] sm:$0xf]
          %v1538 = vld [vmem:[#allocation23 + $0x4] sm:$0xf]
          %v1539 = vld [vmem:[#allocation23 + $0x8] sm:$0xf]
          %v1540 = vld [vmem:[#allocation23 + $0xc] sm:$0xf]
          %v1541 = vld [vmem:[#allocation24] sm:$0x1]
          %v1543 = vlaneseq
          %v1544 = vshrl.u32 %v1543, 7
          %v1545 = vsub.s32 0, %v1544
          %v1546 = vrot.slane %v1541, %v1545
          %v1552 = vunpack.c.l.b16 %v1537
          %v1553 = vunpack.c.l.b16 %v1538
          %v1554 = vunpack.c.l.b16 %v1539
          %v1555 = vunpack.c.l.b16 %v1540
          %v1556 = vpack.c.b16 %v1553, %v1552
          %v1557 = vpack.c.b16 %v1555, %v1554
          %v1561 = vsel %vm1460, %v1536, 0
          %1563 = vmatprep.subr.bf16.mxu0 0
          %1564 = vmatpush1.bf16.msra.mxu0 %v1556
          %1565 = vmatprep.subr.bf16.mxu0 0
          %1566 = vmatpush1.bf16.msra.mxu0 %v1557
          %1567 = vmatprep.subr.bf16.mxu0 0
          %1568 = vmatpush1.bf16.msra.mxu0 0
          %1569 = vmatprep.subr.bf16.mxu0 0
          %1570 = vmatpush1.bf16.msra.mxu0 0
          %1571 = vmatprep.subr.bf16.mxu0 0
          %1572 = vmatpush1.bf16.msra.mxu0 0
          %1573 = vmatprep.subr.bf16.mxu0 0
          %1574 = vmatpush1.bf16.msra.mxu0 0
          %1575 = vmatprep.subr.bf16.mxu0 0
          %1576 = vmatpush1.bf16.msra.mxu0 0
          %1577 = vmatprep.subr.bf16.mxu0 0
          %1578 = vmatpush1.bf16.msra.mxu0 0
          %1579 = vmatprep.subr.bf16.mxu0 0
          %1580 = vmatpush1.bf16.msra.mxu0 0
          %1581 = vmatprep.subr.bf16.mxu0 0
          %1582 = vmatpush1.bf16.msra.mxu0 0
          %1583 = vmatprep.subr.bf16.mxu0 0
          %1584 = vmatpush1.bf16.msra.mxu0 0
          %1585 = vmatprep.subr.bf16.mxu0 0
          %1586 = vmatpush1.bf16.msra.mxu0 0
          %1587 = vmatprep.subr.bf16.mxu0 0
          %1588 = vmatpush1.bf16.msra.mxu0 0
          %1589 = vmatprep.subr.bf16.mxu0 0
          %1590 = vmatpush1.bf16.msra.mxu0 0
          %1591 = vmatprep.subr.bf16.mxu0 0
          %1592 = vmatpush1.bf16.msra.mxu0 0
          %1593 = vmatprep.subr.bf16.mxu0 0
          %1594 = vmatpush1.bf16.msra.mxu0 0
          %1595 = vmatprep.mubr.bf16.mxu0 0
          %1596 = vmatmul.mubr.bf16.gmra.mrb[0].mxu0 %v1561
          %v1597 = vpop.f32.mrb[0].mxu0
          %v1598 = vadd.f32 %v1546, %v1597
          %v1599 = vpop.f32.mrb[0].mxu0
          %v1600 = vpop.f32.mrb[0].mxu0
          %v1601 = vpop.f32.mrb[0].mxu0
          %1602 = vdwg.mxu0
          %v1603 = vmax.f32 %v1598, 0.0
          %v1604 = vpack.c.bf16 %v1603, %v1603
          %v1605 = vld [vmem:[#allocation26] sm:$0xf]
          %v1606 = vld [vmem:[#allocation26 + $0x4] sm:$0xf]
          %v1607 = vld [vmem:[#allocation26 + $0x8] sm:$0xf]
          %v1608 = vld [vmem:[#allocation26 + $0xc] sm:$0xf]
          %v1609 = vld [vmem:[#allocation26 + $0x10] sm:$0xf]
          %v1610 = vld [vmem:[#allocation26 + $0x14] sm:$0xf]
          %v1611 = vld [vmem:[#allocation26 + $0x18] sm:$0xf]
          %v1612 = vld [vmem:[#allocation26 + $0x1c] sm:$0xf]
          %v1613 = vld [vmem:[#allocation26 + $0x20] sm:$0xf]
          %v1614 = vld [vmem:[#allocation26 + $0x24] sm:$0xf]
          %v1615 = vld [vmem:[#allocation26 + $0x28] sm:$0xf]
          %v1616 = vld [vmem:[#allocation26 + $0x2c] sm:$0xf]
          %v1617 = vld [vmem:[#allocation26 + $0x30] sm:$0xf]
          %v1618 = vld [vmem:[#allocation26 + $0x34] sm:$0xf]
          %v1619 = vld [vmem:[#allocation26 + $0x38] sm:$0xf]
          %v1620 = vld [vmem:[#allocation26 + $0x3c] sm:$0xf]
          %v1621 = vld [vmem:[#allocation27] sm:$0x1]
          %v1623 = vlaneseq
          %v1624 = vshrl.u32 %v1623, 7
          %v1625 = vsub.s32 0, %v1624
          %v1626 = vrot.slane %v1621, %v1625
          %v1644 = vunpack.c.l.b16 %v1605
          %v1645 = vunpack.c.l.b16 %v1606
          %v1646 = vunpack.c.l.b16 %v1607
          %v1647 = vunpack.c.l.b16 %v1608
          %v1648 = vunpack.c.l.b16 %v1609
          %v1649 = vunpack.c.l.b16 %v1610
          %v1650 = vunpack.c.l.b16 %v1611
          %v1651 = vunpack.c.l.b16 %v1612
          %v1652 = vunpack.c.l.b16 %v1613
          %v1653 = vunpack.c.l.b16 %v1614
          %v1654 = vunpack.c.l.b16 %v1615
          %v1655 = vunpack.c.l.b16 %v1616
          %v1656 = vunpack.c.l.b16 %v1617
          %v1657 = vunpack.c.l.b16 %v1618
          %v1658 = vunpack.c.l.b16 %v1619
          %v1659 = vunpack.c.l.b16 %v1620
          %v1660 = vpack.c.b16 %v1645, %v1644
          %v1661 = vpack.c.b16 %v1647, %v1646
          %v1662 = vpack.c.b16 %v1649, %v1648
          %v1663 = vpack.c.b16 %v1651, %v1650
          %v1664 = vpack.c.b16 %v1653, %v1652
          %v1665 = vpack.c.b16 %v1655, %v1654
          %v1666 = vpack.c.b16 %v1657, %v1656
          %v1667 = vpack.c.b16 %v1659, %v1658
          %1676 = vmatprep.subr.bf16.mxu0 0
          %1677 = vmatpush1.bf16.msra.mxu0 %v1660
          %1678 = vmatprep.subr.bf16.mxu0 0
          %1679 = vmatpush1.bf16.msra.mxu0 %v1661
          %1680 = vmatprep.subr.bf16.mxu0 0
          %1681 = vmatpush1.bf16.msra.mxu0 %v1662
          %1682 = vmatprep.subr.bf16.mxu0 0
          %1683 = vmatpush1.bf16.msra.mxu0 %v1663
          %1684 = vmatprep.subr.bf16.mxu0 0
          %1685 = vmatpush1.bf16.msra.mxu0 %v1664
          %1686 = vmatprep.subr.bf16.mxu0 0
          %1687 = vmatpush1.bf16.msra.mxu0 %v1665
          %1688 = vmatprep.subr.bf16.mxu0 0
          %1689 = vmatpush1.bf16.msra.mxu0 %v1666
          %1690 = vmatprep.subr.bf16.mxu0 0
          %1691 = vmatpush1.bf16.msra.mxu0 %v1667
          %1692 = vmatprep.subr.bf16.mxu0 0
          %1693 = vmatpush1.bf16.msra.mxu0 0
          %1694 = vmatprep.subr.bf16.mxu0 0
          %1695 = vmatpush1.bf16.msra.mxu0 0
          %1696 = vmatprep.subr.bf16.mxu0 0
          %1697 = vmatpush1.bf16.msra.mxu0 0
          %1698 = vmatprep.subr.bf16.mxu0 0
          %1699 = vmatpush1.bf16.msra.mxu0 0
          %1700 = vmatprep.subr.bf16.mxu0 0
          %1701 = vmatpush1.bf16.msra.mxu0 0
          %1702 = vmatprep.subr.bf16.mxu0 0
          %1703 = vmatpush1.bf16.msra.mxu0 0
          %1704 = vmatprep.subr.bf16.mxu0 0
          %1705 = vmatpush1.bf16.msra.mxu0 0
          %1706 = vmatprep.subr.bf16.mxu0 0
          %1707 = vmatpush1.bf16.msra.mxu0 0
          %1708 = vmatprep.mubr.bf16.mxu0 0
          %1709 = vmatmul.mubr.bf16.gmra.mrb[0].mxu0 %v1604
          %v1710 = vpop.f32.mrb[0].mxu0
          %v1711 = vadd.f32 %v1626, %v1710
          %v1712 = vpop.f32.mrb[0].mxu0
          %v1713 = vpop.f32.mrb[0].mxu0
          %v1714 = vpop.f32.mrb[0].mxu0
          %1715 = vdwg.mxu0
          %v1716 = vadd.f32 %v1711, %v1535
          %v1717 = vld [vmem:[#allocation20] sm:$0x1]
          %v1718 = vld [vmem:[#allocation21] sm:$0x1]
          %v1719 = vsel %vm1460, %v1716, 0.0
          %1720 = vadd.xlane.f32.xlu0 %v1719
          %v1721 = vpop.xlane.xlu0 %1720
          %v1722 = vmul.f32 %v1721, %v1511
          %v1723 = vsub.f32 %v1716, %v1722
          %v1724 = vmul.f32 %v1723, %v1723
          %v1725 = vsel %vm1460, %v1724, 0.0
          %1726 = vadd.xlane.f32.xlu0 %v1725
          %v1727 = vpop.xlane.xlu0 %1726
          %v1728 = vmul.f32 %v1727, %v1511
          %v1729 = vadd.f32 %v1728, 1e-05
          %v1730 = vrsqrt.pop %v1729
          %v1731 = vmul.f32 %v1723, %v1730
          %v1733 = vlaneseq
          %v1734 = vshrl.u32 %v1733, 7
          %v1735 = vsub.s32 0, %v1734
          %v1736 = vrot.slane %v1717, %v1735
          %v1738 = vmul.f32 %v1731, %v1736
          %v1740 = vlaneseq
          %v1741 = vshrl.u32 %v1740, 7
          %v1742 = vsub.s32 0, %v1741
          %v1743 = vrot.slane %v1718, %v1742
          %v1745 = vadd.f32 %v1738, %v1743
          %1746 = vst.msk [vmem:[%s729] sm:$0xff] %vm1460, %v1745
        $region144: #{tpu_custom_call.1} parent=75 // pred_fallthru
          _
        %s1747 = sand.u32 %s384, 1
        %s1748 = scalar_lea.sflag [#allocation8], %s1747
        %s1749 = sand.u32 %s384, 1
        %s1750 = smul.addr %s1749, 8
        %s1751 = scalar_lea.vmem [#allocation29], %s1750
        // Predicated region
        $region145: #{tpu_custom_call.1} parent=75 // pred_check
          %p1752 = pneg %p394
        $region146: #{tpu_custom_call.1} parent=75 // pred_check_branch
          %1754 = sbr.rel (%p1752) target = $region148
        $region147: #{tpu_custom_call.1} parent=75 // pred_region
          %s1756 = ssub.s32 128, 128
          %1757 = vsyncadd %s1748, %s1756
          %s1758 = sadd.s32 %s46, %s45
          %s1759 = smul.addr %s1758, 128
          %s1760 = scalar_lea.hbm %s14, %s1759
          %s1762 = sshll.u32 %s1751, 4
          %s1763 = int_to_ptr.vmem [resolvable:$true] %s1762
          %1765 = dma.vmem_to_hbm [thread:$0]  %s1763, 128, %s1760, %s1748
        $region148: #{tpu_custom_call.1} parent=75 // pred_fallthru
          _
      $region76: #{tpu_custom_call.1} parent=5 // pred_fallthru
        _
      %p1766 = scmp.le.s32.totalorder 2, %s35
      // Predicated region
      $region149: #{tpu_custom_call.1} parent=5 // pred_check
        %p1767 = pneg %p1766
      $region150: #{tpu_custom_call.1} parent=5 // pred_check_branch
        %1769 = sbr.rel (%p1767) target = $region152
      $region151: #{tpu_custom_call.1} parent=5 // pred_region
        %s1770 = ssub.s32 %s35, 2
        // Predicated region
        $region153: #{tpu_custom_call.1} parent=151 // pred_check
          %p1771 = pneg %p400
        $region154: #{tpu_custom_call.1} parent=151 // pred_check_branch
          %1773 = sbr.rel (%p1771) target = $region156
        $region155: #{tpu_custom_call.1} parent=151 // pred_region
          %s1774 = sand.u32 %s385, 1
          %s1775 = scalar_lea.sflag [#allocation8], %s1774
          %s1776 = sand.u32 %s385, 1
          %s1777 = smul.addr %s1776, 8
          %s1778 = scalar_lea.vmem [#allocation29], %s1777
          %1779 = dma.done %s1775, 128
        $region156: #{tpu_custom_call.1} parent=151 // pred_fallthru
          _
      $region152: #{tpu_custom_call.1} parent=5 // pred_fallthru
        _
    $region6: #{tpu_custom_call.1} parent=1 // loop_footer
      %s39 = sadd.s32 1, %s35
    $region7: #{tpu_custom_call.1} parent=1 // loop_footer_branch
      %34 = sbr.rel target = $region3
    $region8: #{tpu_custom_call.1} parent=1 // loop_exit
      _
    %1780 = vsyncpa [#allocation7], 1
    %s1781 = scalar_lea.sflag [#allocation7], 1
    %1782 = vsyncpa %s1781, 1
    %1783 = vsyncpa [#allocation10], 1
    %s1784 = scalar_lea.sflag [#allocation10], 1
    %1785 = vsyncpa %s1784, 1
    %1786 = vsyncpa [#allocation13], 1
    %1787 = vsyncpa [#allocation16], 1
    %1788 = vsyncpa [#allocation19], 1
    %1789 = vsyncpa [#allocation22], 1
    %1790 = vsyncpa [#allocation25], 1
    %1791 = vsyncpa [#allocation28], 1
    %1792 = vsyncpa [#allocation8], 1
    %s1793 = scalar_lea.sflag [#allocation8], 1
    %1794 = vsyncpa %s1793, 1

// kernel: tpu_custom_call.1
$region0: #{tpu_custom_call.1}
  #allocation0 [shape = 'u32[]', space=smem, size = 0x4, offset = 0x4, fixed_abs, tag = 'smem constant byte address 0x4 - core index']
  #allocation1 [shape = 'u32[144,128]{1,0:T(1,128)}', space=vmem, size = 0x12000, scoped, tag = 'internal scratch']
  #allocation2 [shape = 'bf16[8,32]{1,0:T(8,128)(2,1)}', space=vmem, size = 0x800, scoped, tag = 'scratch operand']
  #allocation3 [shape = 'f32[4,8,1]{2,1,0:T(8,128)}', space=vmem, size = 0x4000, scoped, tag = 'scratch operand']
  #allocation4 [shape = 'f32[4,8,1]{2,1,0:T(8,128)}', space=vmem, size = 0x4000, scoped, tag = 'scratch operand']
  #allocation5 [shape = 'f32[8,32]{1,0:T(8,128)}', space=vmem, size = 0x1000, scoped, tag = 'scratch operand']
  %s0 = inlined_call_operand.hbm [shape: f32[2,8,32], index: 0, kind: input, shape index: {}]
  %s1 = inlined_call_operand.hbm [shape: bf16[2,8,32], index: 1, kind: input, shape index: {}]
  %s2 = inlined_call_operand.hbm [shape: bf16[2,8,32], index: 2, kind: input, shape index: {}]
  %s3 = inlined_call_operand.hbm [shape: bf16[32,32], index: 3, kind: input, shape index: {}]
  %s4 = inlined_call_operand.hbm [shape: bf16[32,32], index: 4, kind: input, shape index: {}]
  %s5 = inlined_call_operand.hbm [shape: f32[1,32], index: 5, kind: input, shape index: {}]
  %s6 = inlined_call_operand.hbm [shape: f32[1,32], index: 6, kind: input, shape index: {}]
  %s7 = inlined_call_operand.hbm [shape: f32[1,32], index: 7, kind: input, shape index: {}]
  %s8 = inlined_call_operand.hbm [shape: f32[1,32], index: 8, kind: input, shape index: {}]
  %s9 = inlined_call_operand.hbm [shape: f32[1,32], index: 9, kind: input, shape index: {}]
  %s10 = inlined_call_operand.hbm [shape: bf16[32,128], index: 10, kind: input, shape index: {}]
  %s11 = inlined_call_operand.hbm [shape: f32[1,128], index: 11, kind: input, shape index: {}]
  %s12 = inlined_call_operand.hbm [shape: bf16[128,32], index: 12, kind: input, shape index: {}]
  %s13 = inlined_call_operand.hbm [shape: f32[1,32], index: 13, kind: input, shape index: {}]
  %s14 = inlined_call_operand.hbm [shape: f32[2,8,32], index: 14, kind: output, shape index: {}]
  %s15 = sld [smem:[#allocation0]]
  $region157: #{tpu_custom_call.1} parent=0
    _
  %s17 = ssub.s32 1, %s15
  %s18 = scalar_select 0, %s17, %s15
  $region1: #{tpu_custom_call.1} parent=0
    #allocation6 [shape = 'u8[8192]{0}', space=vmem, size = 0x2000, scoped, tag = 'input window, operand 0']
    #allocation7 [shape = 's32[2]{0}', space=sflag, size = 0x8, scoped, tag = 'scoped memory for tpu_custom_call.1']
    #allocation8 [shape = 's32[2]{0}', space=sflag, size = 0x8, scoped, tag = 'scoped memory for tpu_custom_call.1']
    #allocation9 [shape = 'u8[4096]{0}', space=vmem, size = 0x1000, scoped, tag = 'input window, operand 1']
    #allocation10 [shape = 's32[2]{0}', space=sflag, size = 0x8, scoped, tag = 'scoped memory for tpu_custom_call.1']
    #allocation11 [shape = 'u8[4096]{0}', space=vmem, size = 0x1000, scoped, tag = 'input window, operand 2']
    #allocation12 [shape = 'u8[8192]{0}', space=vmem, size = 0x2000, scoped, tag = 'input window, operand 3, single buffered']
    #allocation13 [shape = 's32[1]{0}', space=sflag, size = 0x4, scoped, tag = 'scoped memory for tpu_custom_call.1']
    #allocation14 [shape = 'u8[8192]{0}', space=vmem, size = 0x2000, scoped, tag = 'input window, operand 4, single buffered']
    #allocation15 [shape = 'u8[512]{0}', space=vmem, size = 0x400, scoped, tag = 'input window, operand 5, single buffered']
    #allocation16 [shape = 's32[1]{0}', space=sflag, size = 0x4, scoped, tag = 'scoped memory for tpu_custom_call.1']
    #allocation17 [shape = 'u8[512]{0}', space=vmem, size = 0x400, scoped, tag = 'input window, operand 6, single buffered']
    #allocation18 [shape = 'u8[512]{0}', space=vmem, size = 0x400, scoped, tag = 'input window, operand 7, single buffered']
    #allocation19 [shape = 's32[1]{0}', space=sflag, size = 0x4, scoped, tag = 'scoped memory for tpu_custom_call.1']
    #allocation20 [shape = 'u8[512]{0}', space=vmem, size = 0x400, scoped, tag = 'input window, operand 8, single buffered']
    #allocation21 [shape = 'u8[512]{0}', space=vmem, size = 0x400, scoped, tag = 'input window, operand 9, single buffered']
    #allocation22 [shape = 's32[1]{0}', space=sflag, size = 0x4, scoped, tag = 'scoped memory for tpu_custom_call.1']
    #allocation23 [shape = 'u8[8192]{0}', space=vmem, size = 0x2000, scoped, tag = 'input window, operand 10, single buffered']
    #allocation24 [shape = 'u8[512]{0}', space=vmem, size = 0x400, scoped, tag = 'input window, operand 11, single buffered']
    #allocation25 [shape = 's32[1]{0}', space=sflag, size = 0x4, scoped, tag = 'scoped memory for tpu_custom_call.1']
    #allocation26 [shape = 'u8[32768]{0}', space=vmem, size = 0x8000, scoped, tag = 'input window, operand 12, single buffered']
    #allocation27 [shape = 'u8[512]{0}', space=vmem, size = 0x400, scoped, tag = 'input window, operand 13, single buffered']
    #allocation28 [shape = 's32[1]{0}', space=sflag, size = 0x4, scoped, tag = 'scoped memory for tpu_custom_call.1']
    #allocation29 [shape = 'u8[8192]{0}', space=vmem, size = 0x2000, scoped, tag = 'output window, operand 0']
    %19 = vsyncpa [#allocation7], 0
    %s20 = scalar_lea.sflag [#allocation7], 1
    %21 = vsyncpa %s20, 0
    %22 = vsyncpa [#allocation10], 0
    %s23 = scalar_lea.sflag [#allocation10], 1
    %24 = vsyncpa %s23, 0
    %25 = vsyncpa [#allocation13], 0
    %26 = vsyncpa [#allocation16], 0
    %27 = vsyncpa [#allocation19], 0
    %28 = vsyncpa [#allocation22], 0
    %29 = vsyncpa [#allocation25], 0
    %30 = vsyncpa [#allocation28], 0
    %31 = vsyncpa [#allocation8], 0
    %s32 = scalar_lea.sflag [#allocation8], 1
    %33 = vsyncpa %s32, 0
    loop: start=0, step=1, limit=4
    $region2: #{tpu_custom_call.1} parent=1 // loop_pre_header
      _
    $region3: #{tpu_custom_call.1} parent=1 // loop_header
      %s35 = sphi 0, %s39
      %p36 = scmp.ge.s32.totalorder %s35, 4
      %s42 = sphi 0, %s61
      %s43 = sphi 0, %s57
      %s44 = sphi 0, %s53
      %s45 = sphi 0, %s42
      %s46 = sphi 0, %s43
      %s47 = sphi 0, %s44
      %s48 = sphi 0, %s45
      %s49 = sphi 0, %s46
      %s50 = sphi 0, %s47
      %s66 = sphi 0, %s68
      %s69 = sphi 0, %s66
      %s70 = sphi 0, %s69
      %s86 = sphi 0, %s70
      %s94 = sphi 0, %s96
      %s97 = sphi 0, %s94
      %s98 = sphi 0, %s97
      %s114 = sphi 0, %s98
      %s122 = sphi 0, %s124
      %s125 = sphi 0, %s122
      %s126 = sphi 0, %s125
      %s142 = sphi 0, %s126
      %s146 = sphi 0, %s146
      %s148 = sphi 0, %s146
      %s149 = sphi 0, %s148
      %s163 = sphi 0, %s149
      %s167 = sphi 0, %s167
      %s169 = sphi 0, %s167
      %s170 = sphi 0, %s169
      %s184 = sphi 0, %s170
      %s188 = sphi 0, %s188
      %s190 = sphi 0, %s188
      %s191 = sphi 0, %s190
      %s205 = sphi 0, %s191
      %s209 = sphi 0, %s209
      %s211 = sphi 0, %s209
      %s212 = sphi 0, %s211
      %s226 = sphi 0, %s212
      %s230 = sphi 0, %s230
      %s232 = sphi 0, %s230
      %s233 = sphi 0, %s232
      %s247 = sphi 0, %s233
      %s251 = sphi 0, %s251
      %s253 = sphi 0, %s251
      %s254 = sphi 0, %s253
      %s268 = sphi 0, %s254
      %s272 = sphi 0, %s272
      %s274 = sphi 0, %s272
      %s275 = sphi 0, %s274
      %s289 = sphi 0, %s275
      %s293 = sphi 0, %s293
      %s295 = sphi 0, %s293
      %s296 = sphi 0, %s295
      %s310 = sphi 0, %s296
      %s314 = sphi 0, %s314
      %s316 = sphi 0, %s314
      %s317 = sphi 0, %s316
      %s331 = sphi 0, %s317
      %s335 = sphi 0, %s335
      %s337 = sphi 0, %s335
      %s338 = sphi 0, %s337
      %s352 = sphi 0, %s338
      %s356 = sphi 0, %s356
      %s358 = sphi 0, %s356
      %s359 = sphi 0, %s358
      %s373 = sphi 0, %s359
      %s381 = sphi 0, %s383
      %s384 = sphi 0, %s381
      %s385 = sphi 0, %s384
      %s401 = sphi 0, %s385
    $region4: #{tpu_custom_call.1} parent=1 // loop_header_branch
      %38 = sbr.rel (%p36) target = $region8
    $region5: #{tpu_custom_call.1} parent=1 // loop_body
      %s40 = ssub.s32 %s35, 1
      %s41 = ssub.s32 %s35, 2
      %s51 = sadd.s32 1, %s44
      %p52 = scmp.ge.s32.totalorder %s51, 1
      %s53 = scalar_select %p52, 0, %s51
      %s54 = sadd.s32 1, %s43
      %s55 = scalar_select %p52, %s54, %s43
      %p56 = scmp.ge.s32.totalorder %s55, 1
      %s57 = scalar_select %p56, 0, %s55
      %s58 = sadd.s32 1, %s42
      %s59 = scalar_select %p56, %s58, %s42
      %p60 = scmp.ge.s32.totalorder %s59, 2
      %s61 = scalar_select %p60, 0, %s59
      %s62 = ssub.s32 %s42, %s61
      %s63 = ssub.s32 %s43, %s57
      %s64 = sor.u32 %s62, %s63
      %p65 = scmp.eq.s32.totalorder %s64, 0
      %s67 = sadd.s32 %s66, 1
      %s68 = scalar_select %p65, %s66, %s67
      %p71 = pneg %p65
      %p72 = scmp.eq.s32.totalorder %s35, 1
      %p73 = por %p71, %p72
      %p74 = scmp.ne.s32.totalorder %s66, %s69
      %p75 = scmp.eq.s32.totalorder %s35, 0
      %p76 = por %p74, %p75
      %p77 = scmp.ne.s32.totalorder %s66, %s69
      %p78 = scmp.eq.s32.totalorder %s40, 1
      %p79 = por %p77, %p78
      %p80 = scmp.ne.s32.totalorder %s69, %s70
      %p81 = scmp.eq.s32.totalorder %s40, 0
      %p82 = por %p80, %p81
      %p83 = scmp.ne.s32.totalorder %s69, %s70
      %p84 = scmp.eq.s32.totalorder %s41, 1
      %p85 = por %p83, %p84
      %p87 = scmp.ne.s32.totalorder %s70, %s86
      %p88 = scmp.eq.s32.totalorder %s41, 0
      %p89 = por %p87, %p88
      %s90 = ssub.s32 %s42, %s61
      %s91 = ssub.s32 %s44, %s53
      %s92 = sor.u32 %s90, %s91
      %p93 = scmp.eq.s32.totalorder %s92, 0
      %s95 = sadd.s32 %s94, 1
      %s96 = scalar_select %p93, %s94, %s95
      %p99 = pneg %p93
      %p100 = scmp.eq.s32.totalorder %s35, 1
      %p101 = por %p99, %p100
      %p102 = scmp.ne.s32.totalorder %s94, %s97
      %p103 = scmp.eq.s32.totalorder %s35, 0
      %p104 = por %p102, %p103
      %p105 = scmp.ne.s32.totalorder %s94, %s97
      %p106 = scmp.eq.s32.totalorder %s40, 1
      %p107 = por %p105, %p106
      %p108 = scmp.ne.s32.totalorder %s97, %s98
      %p109 = scmp.eq.s32.totalorder %s40, 0
      %p110 = por %p108, %p109
      %p111 = scmp.ne.s32.totalorder %s97, %s98
      %p112 = scmp.eq.s32.totalorder %s41, 1
      %p113 = por %p111, %p112
      %p115 = scmp.ne.s32.totalorder %s98, %s114
      %p116 = scmp.eq.s32.totalorder %s41, 0
      %p117 = por %p115, %p116
      %s118 = ssub.s32 %s42, %s61
      %s119 = ssub.s32 %s44, %s53
      %s120 = sor.u32 %s118, %s119
      %p121 = scmp.eq.s32.totalorder %s120, 0
      %s123 = sadd.s32 %s122, 1
      %s124 = scalar_select %p121, %s122, %s123
      %p127 = pneg %p121
      %p128 = scmp.eq.s32.totalorder %s35, 1
      %p129 = por %p127, %p128
      %p130 = scmp.ne.s32.totalorder %s122, %s125
      %p131 = scmp.eq.s32.totalorder %s35, 0
      %p132 = por %p130, %p131
      %p133 = scmp.ne.s32.totalorder %s122, %s125
      %p134 = scmp.eq.s32.totalorder %s40, 1
      %p135 = por %p133, %p134
      %p136 = scmp.ne.s32.totalorder %s125, %s126
      %p137 = scmp.eq.s32.totalorder %s40, 0
      %p138 = por %p136, %p137
      %p139 = scmp.ne.s32.totalorder %s125, %s126
      %p140 = scmp.eq.s32.totalorder %s41, 1
      %p141 = por %p139, %p140
      %p143 = scmp.ne.s32.totalorder %s126, %s142
      %p144 = scmp.eq.s32.totalorder %s41, 0
      %p145 = por %p143, %p144
      %s147 = sadd.s32 %s146, 1
      %p150 = scmp.eq.s32.totalorder %s35, 1
      %p151 = scmp.ne.s32.totalorder %s146, %s148
      %p152 = scmp.eq.s32.totalorder %s35, 0
      %p153 = por %p151, %p152
      %p154 = scmp.ne.s32.totalorder %s146, %s148
      %p155 = scmp.eq.s32.totalorder %s40, 1
      %p156 = por %p154, %p155
      %p157 = scmp.ne.s32.totalorder %s148, %s149
      %p158 = scmp.eq.s32.totalorder %s40, 0
      %p159 = por %p157, %p158
      %p160 = scmp.ne.s32.totalorder %s148, %s149
      %p161 = scmp.eq.s32.totalorder %s41, 1
      %p162 = por %p160, %p161
      %p164 = scmp.ne.s32.totalorder %s149, %s163
      %p165 = scmp.eq.s32.totalorder %s41, 0
      %p166 = por %p164, %p165
      %s168 = sadd.s32 %s167, 1
      %p171 = scmp.eq.s32.totalorder %s35, 1
      %p172 = scmp.ne.s32.totalorder %s167, %s169
      %p173 = scmp.eq.s32.totalorder %s35, 0
      %p174 = por %p172, %p173
      %p175 = scmp.ne.s32.totalorder %s167, %s169
      %p176 = scmp.eq.s32.totalorder %s40, 1
      %p177 = por %p175, %p176
      %p178 = scmp.ne.s32.totalorder %s169, %s170
      %p179 = scmp.eq.s32.totalorder %s40, 0
      %p180 = por %p178, %p179
      %p181 = scmp.ne.s32.totalorder %s169, %s170
      %p182 = scmp.eq.s32.totalorder %s41, 1
      %p183 = por %p181, %p182
      %p185 = scmp.ne.s32.totalorder %s170, %s184
      %p186 = scmp.eq.s32.totalorder %s41, 0
      %p187 = por %p185, %p186
      %s189 = sadd.s32 %s188, 1
      %p192 = scmp.eq.s32.totalorder %s35, 1
      %p193 = scmp.ne.s32.totalorder %s188, %s190
      %p194 = scmp.eq.s32.totalorder %s35, 0
      %p195 = por %p193, %p194
      %p196 = scmp.ne.s32.totalorder %s188, %s190
      %p197 = scmp.eq.s32.totalorder %s40, 1
      %p198 = por %p196, %p197
      %p199 = scmp.ne.s32.totalorder %s190, %s191
      %p200 = scmp.eq.s32.totalorder %s40, 0
      %p201 = por %p199, %p200
      %p202 = scmp.ne.s32.totalorder %s190, %s191
      %p203 = scmp.eq.s32.totalorder %s41, 1
      %p204 = por %p202, %p203
      %p206 = scmp.ne.s32.totalorder %s191, %s205
      %p207 = scmp.eq.s32.totalorder %s41, 0
      %p208 = por %p206, %p207
      %s210 = sadd.s32 %s209, 1
      %p213 = scmp.eq.s32.totalorder %s35, 1
      %p214 = scmp.ne.s32.totalorder %s209, %s211
      %p215 = scmp.eq.s32.totalorder %s35, 0
      %p216 = por %p214, %p215
      %p217 = scmp.ne.s32.totalorder %s209, %s211
      %p218 = scmp.eq.s32.totalorder %s40, 1
      %p219 = por %p217, %p218
      %p220 = scmp.ne.s32.totalorder %s211, %s212
      %p221 = scmp.eq.s32.totalorder %s40, 0
      %p222 = por %p220, %p221
      %p223 = scmp.ne.s32.totalorder %s211, %s212
      %p224 = scmp.eq.s32.totalorder %s41, 1
      %p225 = por %p223, %p224
      %p227 = scmp.ne.s32.totalorder %s212, %s226
      %p228 = scmp.eq.s32.totalorder %s41, 0
      %p229 = por %p227, %p228
      %s231 = sadd.s32 %s230, 1
      %p234 = scmp.eq.s32.totalorder %s35, 1
      %p235 = scmp.ne.s32.totalorder %s230, %s232
      %p236 = scmp.eq.s32.totalorder %s35, 0
      %p237 = por %p235, %p236
      %p238 = scmp.ne.s32.totalorder %s230, %s232
      %p239 = scmp.eq.s32.totalorder %s40, 1
      %p240 = por %p238, %p239
      %p241 = scmp.ne.s32.totalorder %s232, %s233
      %p242 = scmp.eq.s32.totalorder %s40, 0
      %p243 = por %p241, %p242
      %p244 = scmp.ne.s32.totalorder %s232, %s233
      %p245 = scmp.eq.s32.totalorder %s41, 1
      %p246 = por %p244, %p245
      %p248 = scmp.ne.s32.totalorder %s233, %s247
      %p249 = scmp.eq.s32.totalorder %s41, 0
      %p250 = por %p248, %p249
      %s252 = sadd.s32 %s251, 1
      %p255 = scmp.eq.s32.totalorder %s35, 1
      %p256 = scmp.ne.s32.totalorder %s251, %s253
      %p257 = scmp.eq.s32.totalorder %s35, 0
      %p258 = por %p256, %p257
      %p259 = scmp.ne.s32.totalorder %s251, %s253
      %p260 = scmp.eq.s32.totalorder %s40, 1
      %p261 = por %p259, %p260
      %p262 = scmp.ne.s32.totalorder %s253, %s254
      %p263 = scmp.eq.s32.totalorder %s40, 0
      %p264 = por %p262, %p263
      %p265 = scmp.ne.s32.totalorder %s253, %s254
      %p266 = scmp.eq.s32.totalorder %s41, 1
      %p267 = por %p265, %p266
      %p269 = scmp.ne.s32.totalorder %s254, %s268
      %p270 = scmp.eq.s32.totalorder %s41, 0
      %p271 = por %p269, %p270
      %s273 = sadd.s32 %s272, 1
      %p276 = scmp.eq.s32.totalorder %s35, 1
      %p277 = scmp.ne.s32.totalorder %s272, %s274
      %p278 = scmp.eq.s32.totalorder %s35, 0
      %p279 = por %p277, %p278
      %p280 = scmp.ne.s32.totalorder %s272, %s274
      %p281 = scmp.eq.s32.totalorder %s40, 1
      %p282 = por %p280, %p281
      %p283 = scmp.ne.s32.totalorder %s274, %s275
      %p284 = scmp.eq.s32.totalorder %s40, 0
      %p285 = por %p283, %p284
      %p286 = scmp.ne.s32.totalorder %s274, %s275
      %p287 = scmp.eq.s32.totalorder %s41, 1
      %p288 = por %p286, %p287
      %p290 = scmp.ne.s32.totalorder %s275, %s289
      %p291 = scmp.eq.s32.totalorder %s41, 0
      %p292 = por %p290, %p291
      %s294 = sadd.s32 %s293, 1
      %p297 = scmp.eq.s32.totalorder %s35, 1
      %p298 = scmp.ne.s32.totalorder %s293, %s295
      %p299 = scmp.eq.s32.totalorder %s35, 0
      %p300 = por %p298, %p299
      %p301 = scmp.ne.s32.totalorder %s293, %s295
      %p302 = scmp.eq.s32.totalorder %s40, 1
      %p303 = por %p301, %p302
      %p304 = scmp.ne.s32.totalorder %s295, %s296
      %p305 = scmp.eq.s32.totalorder %s40, 0
      %p306 = por %p304, %p305
      %p307 = scmp.ne.s32.totalorder %s295, %s296
      %p308 = scmp.eq.s32.totalorder %s41, 1
      %p309 = por %p307, %p308
      %p311 = scmp.ne.s32.totalorder %s296, %s310
      %p312 = scmp.eq.s32.totalorder %s41, 0
      %p313 = por %p311, %p312
      %s315 = sadd.s32 %s314, 1
      %p318 = scmp.eq.s32.totalorder %s35, 1
      %p319 = scmp.ne.s32.totalorder %s314, %s316
      %p320 = scmp.eq.s32.totalorder %s35, 0
      %p321 = por %p319, %p320
      %p322 = scmp.ne.s32.totalorder %s314, %s316
      %p323 = scmp.eq.s32.totalorder %s40, 1
      %p324 = por %p322, %p323
      %p325 = scmp.ne.s32.totalorder %s316, %s317
      %p326 = scmp.eq.s32.totalorder %s40, 0
      %p327 = por %p325, %p326
      %p328 = scmp.ne.s32.totalorder %s316, %s317
      %p329 = scmp.eq.s32.totalorder %s41, 1
      %p330 = por %p328, %p329
      %p332 = scmp.ne.s32.totalorder %s317, %s331
      %p333 = scmp.eq.s32.totalorder %s41, 0
      %p334 = por %p332, %p333
      %s336 = sadd.s32 %s335, 1
      %p339 = scmp.eq.s32.totalorder %s35, 1
      %p340 = scmp.ne.s32.totalorder %s335, %s337
      %p341 = scmp.eq.s32.totalorder %s35, 0
      %p342 = por %p340, %p341
      %p343 = scmp.ne.s32.totalorder %s335, %s337
      %p344 = scmp.eq.s32.totalorder %s40, 1
      %p345 = por %p343, %p344
      %p346 = scmp.ne.s32.totalorder %s337, %s338
      %p347 = scmp.eq.s32.totalorder %s40, 0
      %p348 = por %p346, %p347
      %p349 = scmp.ne.s32.totalorder %s337, %s338
      %p350 = scmp.eq.s32.totalorder %s41, 1
      %p351 = por %p349, %p350
      %p353 = scmp.ne.s32.totalorder %s338, %s352
      %p354 = scmp.eq.s32.totalorder %s41, 0
      %p355 = por %p353, %p354
      %s357 = sadd.s32 %s356, 1
      %p360 = scmp.eq.s32.totalorder %s35, 1
      %p361 = scmp.ne.s32.totalorder %s356, %s358
      %p362 = scmp.eq.s32.totalorder %s35, 0
      %p363 = por %p361, %p362
      %p364 = scmp.ne.s32.totalorder %s356, %s358
      %p365 = scmp.eq.s32.totalorder %s40, 1
      %p366 = por %p364, %p365
      %p367 = scmp.ne.s32.totalorder %s358, %s359
      %p368 = scmp.eq.s32.totalorder %s40, 0
      %p369 = por %p367, %p368
      %p370 = scmp.ne.s32.totalorder %s358, %s359
      %p371 = scmp.eq.s32.totalorder %s41, 1
      %p372 = por %p370, %p371
      %p374 = scmp.ne.s32.totalorder %s359, %s373
      %p375 = scmp.eq.s32.totalorder %s41, 0
      %p376 = por %p374, %p375
      %s377 = ssub.s32 %s42, %s61
      %s378 = ssub.s32 %s43, %s57
      %s379 = sor.u32 %s377, %s378
      %p380 = scmp.eq.s32.totalorder %s379, 0
      %s382 = sadd.s32 %s381, 1
      %s383 = scalar_select %p380, %s381, %s382
      %p386 = pneg %p380
      %p387 = scmp.eq.s32.totalorder %s35, 1
      %p388 = por %p386, %p387
      %p389 = scmp.ne.s32.totalorder %s381, %s384
      %p390 = scmp.eq.s32.totalorder %s35, 0
      %p391 = por %p389, %p390
      %p392 = scmp.ne.s32.totalorder %s381, %s384
      %p393 = scmp.eq.s32.totalorder %s40, 1
      %p394 = por %p392, %p393
      %p395 = scmp.ne.s32.totalorder %s384, %s385
      %p396 = scmp.eq.s32.totalorder %s40, 0
      %p397 = por %p395, %p396
      %p398 = scmp.ne.s32.totalorder %s384, %s385
      %p399 = scmp.eq.s32.totalorder %s41, 1
      %p400 = por %p398, %p399
      %p402 = scmp.ne.s32.totalorder %s385, %s401
      %p403 = scmp.eq.s32.totalorder %s41, 0
      %p404 = por %p402, %p403
      %p405 = scmp.le.s32.totalorder 1, %s35
      %p406 = scmp.lt.s32.totalorder %s35, 3
      %p407 = pnand %p405, %p406
      %p408 = pneg %p407
      // Predicated region
      $region9: #{tpu_custom_call.1} parent=5 // pred_check
        _
      $region10: #{tpu_custom_call.1} parent=5 // pred_check_branch
        %410 = sbr.rel (%p407) target = $region12
      $region11: #{tpu_custom_call.1} parent=5 // pred_region
        %s411 = ssub.s32 %s35, 1
        // Predicated region
        $region13: #{tpu_custom_call.1} parent=11 // pred_check
          %p412 = pneg %p159
        $region14: #{tpu_custom_call.1} parent=11 // pred_check_branch
          %414 = sbr.rel (%p412) target = $region16
        $region15: #{tpu_custom_call.1} parent=11 // pred_region
          %s416 = ssub.s32 256, 256
          %417 = vsyncadd [#allocation13], %s416
          %s418 = sshll.u32 [#allocation12], 4
          %s419 = int_to_ptr.vmem [resolvable:$true] %s418
          %424 = dma.hbm_to_vmem [thread:$0]  %s3, 256, %s419, [#allocation13], 64, 64, 4
        $region16: #{tpu_custom_call.1} parent=11 // pred_fallthru
          _
        // Predicated region
        $region17: #{tpu_custom_call.1} parent=11 // pred_check
          %p425 = pneg %p180
        $region18: #{tpu_custom_call.1} parent=11 // pred_check_branch
          %427 = sbr.rel (%p425) target = $region20
        $region19: #{tpu_custom_call.1} parent=11 // pred_region
          %s429 = ssub.s32 256, 256
          %430 = vsyncadd [#allocation13], %s429
          %s431 = sshll.u32 [#allocation14], 4
          %s432 = int_to_ptr.vmem [resolvable:$true] %s431
          %437 = dma.hbm_to_vmem [thread:$0]  %s4, 256, %s432, [#allocation13], 64, 64, 4
        $region20: #{tpu_custom_call.1} parent=11 // pred_fallthru
          _
        // Predicated region
        $region21: #{tpu_custom_call.1} parent=11 // pred_check
          %p438 = pneg %p201
        $region22: #{tpu_custom_call.1} parent=11 // pred_check_branch
          %440 = sbr.rel (%p438) target = $region24
        $region23: #{tpu_custom_call.1} parent=11 // pred_region
          %s442 = ssub.s32 16, 16
          %443 = vsyncadd [#allocation16], %s442
          %s445 = sshll.u32 [#allocation15], 4
          %s446 = int_to_ptr.vmem [resolvable:$true] %s445
          %448 = dma.hbm_to_vmem [thread:$0]  %s5, 16, %s446, [#allocation16]
        $region24: #{tpu_custom_call.1} parent=11 // pred_fallthru
          _
        // Predicated region
        $region25: #{tpu_custom_call.1} parent=11 // pred_check
          %p449 = pneg %p222
        $region26: #{tpu_custom_call.1} parent=11 // pred_check_branch
          %451 = sbr.rel (%p449) target = $region28
        $region27: #{tpu_custom_call.1} parent=11 // pred_region
          %s453 = ssub.s32 16, 16
          %454 = vsyncadd [#allocation16], %s453
          %s456 = sshll.u32 [#allocation17], 4
          %s457 = int_to_ptr.vmem [resolvable:$true] %s456
          %459 = dma.hbm_to_vmem [thread:$0]  %s6, 16, %s457, [#allocation16]
        $region28: #{tpu_custom_call.1} parent=11 // pred_fallthru
          _
        // Predicated region
        $region29: #{tpu_custom_call.1} parent=11 // pred_check
          %p460 = pneg %p243
        $region30: #{tpu_custom_call.1} parent=11 // pred_check_branch
          %462 = sbr.rel (%p460) target = $region32
        $region31: #{tpu_custom_call.1} parent=11 // pred_region
          %s464 = ssub.s32 16, 16
          %465 = vsyncadd [#allocation19], %s464
          %s467 = sshll.u32 [#allocation18], 4
          %s468 = int_to_ptr.vmem [resolvable:$true] %s467
          %470 = dma.hbm_to_vmem [thread:$0]  %s7, 16, %s468, [#allocation19]
        $region32: #{tpu_custom_call.1} parent=11 // pred_fallthru
          _
        // Predicated region
        $region33: #{tpu_custom_call.1} parent=11 // pred_check
          %p471 = pneg %p264
        $region34: #{tpu_custom_call.1} parent=11 // pred_check_branch
          %473 = sbr.rel (%p471) target = $region36
        $region35: #{tpu_custom_call.1} parent=11 // pred_region
          %s475 = ssub.s32 16, 16
          %476 = vsyncadd [#allocation19], %s475
          %s478 = sshll.u32 [#allocation20], 4
          %s479 = int_to_ptr.vmem [resolvable:$true] %s478
          %481 = dma.hbm_to_vmem [thread:$0]  %s8, 16, %s479, [#allocation19]
        $region36: #{tpu_custom_call.1} parent=11 // pred_fallthru
          _
        // Predicated region
        $region37: #{tpu_custom_call.1} parent=11 // pred_check
          %p482 = pneg %p285
        $region38: #{tpu_custom_call.1} parent=11 // pred_check_branch
          %484 = sbr.rel (%p482) target = $region40
        $region39: #{tpu_custom_call.1} parent=11 // pred_region
          %s486 = ssub.s32 16, 16
          %487 = vsyncadd [#allocation22], %s486
          %s489 = sshll.u32 [#allocation21], 4
          %s490 = int_to_ptr.vmem [resolvable:$true] %s489
          %492 = dma.hbm_to_vmem [thread:$0]  %s9, 16, %s490, [#allocation22]
        $region40: #{tpu_custom_call.1} parent=11 // pred_fallthru
          _
        // Predicated region
        $region41: #{tpu_custom_call.1} parent=11 // pred_check
          %p493 = pneg %p306
        $region42: #{tpu_custom_call.1} parent=11 // pred_check_branch
          %495 = sbr.rel (%p493) target = $region44
        $region43: #{tpu_custom_call.1} parent=11 // pred_region
          %s497 = ssub.s32 256, 256
          %498 = vsyncadd [#allocation22], %s497
          %s499 = sshll.u32 [#allocation23], 4
          %s500 = int_to_ptr.vmem [resolvable:$true] %s499
          %505 = dma.hbm_to_vmem [thread:$0]  %s10, 256, %s500, [#allocation22], 64, 64, 4
        $region44: #{tpu_custom_call.1} parent=11 // pred_fallthru
          _
        // Predicated region
        $region45: #{tpu_custom_call.1} parent=11 // pred_check
          %p506 = pneg %p327
        $region46: #{tpu_custom_call.1} parent=11 // pred_check_branch
          %508 = sbr.rel (%p506) target = $region48
        $region47: #{tpu_custom_call.1} parent=11 // pred_region
          %s510 = ssub.s32 16, 16
          %511 = vsyncadd [#allocation25], %s510
          %s513 = sshll.u32 [#allocation24], 4
          %s514 = int_to_ptr.vmem [resolvable:$true] %s513
          %516 = dma.hbm_to_vmem [thread:$0]  %s11, 16, %s514, [#allocation25]
        $region48: #{tpu_custom_call.1} parent=11 // pred_fallthru
          _
        // Predicated region
        $region49: #{tpu_custom_call.1} parent=11 // pred_check
          %p517 = pneg %p348
        $region50: #{tpu_custom_call.1} parent=11 // pred_check_branch
          %519 = sbr.rel (%p517) target = $region52
        $region51: #{tpu_custom_call.1} parent=11 // pred_region
          %s521 = ssub.s32 1024, 1024
          %522 = vsyncadd [#allocation25], %s521
          %s523 = sshll.u32 [#allocation26], 4
          %s524 = int_to_ptr.vmem [resolvable:$true] %s523
          %529 = dma.hbm_to_vmem [thread:$0]  %s12, 1024, %s524, [#allocation25], 64, 64, 4
        $region52: #{tpu_custom_call.1} parent=11 // pred_fallthru
          _
        // Predicated region
        $region53: #{tpu_custom_call.1} parent=11 // pred_check
          %p530 = pneg %p369
        $region54: #{tpu_custom_call.1} parent=11 // pred_check_branch
          %532 = sbr.rel (%p530) target = $region56
        $region55: #{tpu_custom_call.1} parent=11 // pred_region
          %s534 = ssub.s32 16, 16
          %535 = vsyncadd [#allocation28], %s534
          %s537 = sshll.u32 [#allocation27], 4
          %s538 = int_to_ptr.vmem [resolvable:$true] %s537
          %540 = dma.hbm_to_vmem [thread:$0]  %s13, 16, %s538, [#allocation28]
        $region56: #{tpu_custom_call.1} parent=11 // pred_fallthru
          _
      $region12: #{tpu_custom_call.1} parent=5 // pred_fallthru
        _
      %p541 = scmp.lt.s32.totalorder %s35, 2
      // Predicated region
      $region57: #{tpu_custom_call.1} parent=5 // pred_check
        %p542 = pneg %p541
      $region58: #{tpu_custom_call.1} parent=5 // pred_check_branch
        %544 = sbr.rel (%p542) target = $region60
      $region59: #{tpu_custom_call.1} parent=5 // pred_region
        // Predicated region
        $region61: #{tpu_custom_call.1} parent=59 // pred_check
          %p545 = pneg %p76
        $region62: #{tpu_custom_call.1} parent=59 // pred_check_branch
          %547 = sbr.rel (%p545) target = $region64
        $region63: #{tpu_custom_call.1} parent=59 // pred_region
          %s548 = sand.u32 %s66, 1
          %s549 = scalar_lea.sflag [#allocation7], %s548
          %s550 = sand.u32 %s66, 1
          %s551 = smul.addr %s550, 8
          %s552 = scalar_lea.vmem [#allocation6], %s551
          %s554 = ssub.s32 128, 128
          %555 = vsyncadd %s549, %s554
          %s556 = sadd.s32 %s43, %s42
          %s557 = smul.addr %s556, 128
          %s558 = scalar_lea.hbm %s0, %s557
          %s560 = sshll.u32 %s552, 4
          %s561 = int_to_ptr.vmem [resolvable:$true] %s560
          %563 = dma.hbm_to_vmem [thread:$0]  %s558, 128, %s561, %s549
        $region64: #{tpu_custom_call.1} parent=59 // pred_fallthru
          _
        // Predicated region
        $region65: #{tpu_custom_call.1} parent=59 // pred_check
          %p564 = pneg %p104
        $region66: #{tpu_custom_call.1} parent=59 // pred_check_branch
          %566 = sbr.rel (%p564) target = $region68
        $region67: #{tpu_custom_call.1} parent=59 // pred_region
          %s567 = sand.u32 %s35, 1
          %s568 = scalar_lea.sflag [#allocation10], %s567
          %s569 = sand.u32 %s94, 1
          %s570 = smul.addr %s569, 4
          %s571 = scalar_lea.vmem [#allocation9], %s570
          %s573 = ssub.s32 64, 64
          %574 = vsyncadd %s568, %s573
          %s575 = sadd.s32 %s44, %s42
          %s576 = smul.addr %s575, 64
          %s577 = scalar_lea.hbm %s1, %s576
          %s579 = sshll.u32 %s571, 4
          %s580 = int_to_ptr.vmem [resolvable:$true] %s579
          %582 = dma.hbm_to_vmem [thread:$0]  %s577, 64, %s580, %s568
        $region68: #{tpu_custom_call.1} parent=59 // pred_fallthru
          _
        // Predicated region
        $region69: #{tpu_custom_call.1} parent=59 // pred_check
          %p583 = pneg %p132
        $region70: #{tpu_custom_call.1} parent=59 // pred_check_branch
          %585 = sbr.rel (%p583) target = $region72
        $region71: #{tpu_custom_call.1} parent=59 // pred_region
          %s586 = sand.u32 %s35, 1
          %s587 = scalar_lea.sflag [#allocation10], %s586
          %s588 = sand.u32 %s122, 1
          %s589 = smul.addr %s588, 4
          %s590 = scalar_lea.vmem [#allocation11], %s589
          %s592 = ssub.s32 64, 64
          %593 = vsyncadd %s587, %s592
          %s594 = sadd.s32 %s44, %s42
          %s595 = smul.addr %s594, 64
          %s596 = scalar_lea.hbm %s2, %s595
          %s598 = sshll.u32 %s590, 4
          %s599 = int_to_ptr.vmem [resolvable:$true] %s598
          %601 = dma.hbm_to_vmem [thread:$0]  %s596, 64, %s599, %s587
        $region72: #{tpu_custom_call.1} parent=59 // pred_fallthru
          _
      $region60: #{tpu_custom_call.1} parent=5 // pred_fallthru
        _
      %p602 = scmp.le.s32.totalorder 1, %s35
      %p603 = scmp.lt.s32.totalorder %s35, 3
      %p604 = pnand %p602, %p603
      %p605 = pneg %p604
      // Predicated region
      $region73: #{tpu_custom_call.1} parent=5 // pred_check
        _
      $region74: #{tpu_custom_call.1} parent=5 // pred_check_branch
        %607 = sbr.rel (%p604) target = $region76
      $region75: #{tpu_custom_call.1} parent=5 // pred_region
        %s608 = ssub.s32 %s35, 1
        %s609 = sand.u32 %s69, 1
        %s610 = scalar_lea.sflag [#allocation7], %s609
        %s611 = sand.u32 %s69, 1
        %s612 = smul.addr %s611, 8
        %s613 = scalar_lea.vmem [#allocation6], %s612
        // Predicated region
        $region77: #{tpu_custom_call.1} parent=75 // pred_check
          %p614 = pneg %p82
        $region78: #{tpu_custom_call.1} parent=75 // pred_check_branch
          %616 = sbr.rel (%p614) target = $region80
        $region79: #{tpu_custom_call.1} parent=75 // pred_region
          %617 = dma.done %s610, 128
        $region80: #{tpu_custom_call.1} parent=75 // pred_fallthru
          _
        %s618 = sand.u32 %s40, 1
        %s619 = scalar_lea.sflag [#allocation10], %s618
        %s620 = sand.u32 %s97, 1
        %s621 = smul.addr %s620, 4
        %s622 = scalar_lea.vmem [#allocation9], %s621
        // Predicated region
        $region81: #{tpu_custom_call.1} parent=75 // pred_check
          %p623 = pneg %p110
        $region82: #{tpu_custom_call.1} parent=75 // pred_check_branch
          %625 = sbr.rel (%p623) target = $region84
        $region83: #{tpu_custom_call.1} parent=75 // pred_region
          %626 = dma.done %s619, 64
        $region84: #{tpu_custom_call.1} parent=75 // pred_fallthru
          _
        %s627 = sand.u32 %s40, 1
        %s628 = scalar_lea.sflag [#allocation10], %s627
        %s629 = sand.u32 %s125, 1
        %s630 = smul.addr %s629, 4
        %s631 = scalar_lea.vmem [#allocation11], %s630
        // Predicated region
        $region85: #{tpu_custom_call.1} parent=75 // pred_check
          %p632 = pneg %p138
        $region86: #{tpu_custom_call.1} parent=75 // pred_check_branch
          %634 = sbr.rel (%p632) target = $region88
        $region87: #{tpu_custom_call.1} parent=75 // pred_region
          %635 = dma.done %s628, 64
        $region88: #{tpu_custom_call.1} parent=75 // pred_fallthru
          _
        // Predicated region
        $region89: #{tpu_custom_call.1} parent=75 // pred_check
          %p636 = pneg %p159
        $region90: #{tpu_custom_call.1} parent=75 // pred_check_branch
          %638 = sbr.rel (%p636) target = $region92
        $region91: #{tpu_custom_call.1} parent=75 // pred_region
          %639 = dma.done [#allocation13], 256
        $region92: #{tpu_custom_call.1} parent=75 // pred_fallthru
          _
        // Predicated region
        $region93: #{tpu_custom_call.1} parent=75 // pred_check
          %p640 = pneg %p180
        $region94: #{tpu_custom_call.1} parent=75 // pred_check_branch
          %642 = sbr.rel (%p640) target = $region96
        $region95: #{tpu_custom_call.1} parent=75 // pred_region
          %643 = dma.done [#allocation13], 256
        $region96: #{tpu_custom_call.1} parent=75 // pred_fallthru
          _
        // Predicated region
        $region97: #{tpu_custom_call.1} parent=75 // pred_check
          %p644 = pneg %p201
        $region98: #{tpu_custom_call.1} parent=75 // pred_check_branch
          %646 = sbr.rel (%p644) target = $region100
        $region99: #{tpu_custom_call.1} parent=75 // pred_region
          %647 = dma.done [#allocation16], 16
        $region100: #{tpu_custom_call.1} parent=75 // pred_fallthru
          _
        // Predicated region
        $region101: #{tpu_custom_call.1} parent=75 // pred_check
          %p648 = pneg %p222
        $region102: #{tpu_custom_call.1} parent=75 // pred_check_branch
          %650 = sbr.rel (%p648) target = $region104
        $region103: #{tpu_custom_call.1} parent=75 // pred_region
          %651 = dma.done [#allocation16], 16
        $region104: #{tpu_custom_call.1} parent=75 // pred_fallthru
          _
        // Predicated region
        $region105: #{tpu_custom_call.1} parent=75 // pred_check
          %p652 = pneg %p243
        $region106: #{tpu_custom_call.1} parent=75 // pred_check_branch
          %654 = sbr.rel (%p652) target = $region108
        $region107: #{tpu_custom_call.1} parent=75 // pred_region
          %655 = dma.done [#allocation19], 16
        $region108: #{tpu_custom_call.1} parent=75 // pred_fallthru
          _
        // Predicated region
        $region109: #{tpu_custom_call.1} parent=75 // pred_check
          %p656 = pneg %p264
        $region110: #{tpu_custom_call.1} parent=75 // pred_check_branch
          %658 = sbr.rel (%p656) target = $region112
        $region111: #{tpu_custom_call.1} parent=75 // pred_region
          %659 = dma.done [#allocation19], 16
        $region112: #{tpu_custom_call.1} parent=75 // pred_fallthru
          _
        // Predicated region
        $region113: #{tpu_custom_call.1} parent=75 // pred_check
          %p660 = pneg %p285
        $region114: #{tpu_custom_call.1} parent=75 // pred_check_branch
          %662 = sbr.rel (%p660) target = $region116
        $region115: #{tpu_custom_call.1} parent=75 // pred_region
          %663 = dma.done [#allocation22], 16
        $region116: #{tpu_custom_call.1} parent=75 // pred_fallthru
          _
        // Predicated region
        $region117: #{tpu_custom_call.1} parent=75 // pred_check
          %p664 = pneg %p306
        $region118: #{tpu_custom_call.1} parent=75 // pred_check_branch
          %666 = sbr.rel (%p664) target = $region120
        $region119: #{tpu_custom_call.1} parent=75 // pred_region
          %667 = dma.done [#allocation22], 256
        $region120: #{tpu_custom_call.1} parent=75 // pred_fallthru
          _
        // Predicated region
        $region121: #{tpu_custom_call.1} parent=75 // pred_check
          %p668 = pneg %p327
        $region122: #{tpu_custom_call.1} parent=75 // pred_check_branch
          %670 = sbr.rel (%p668) target = $region124
        $region123: #{tpu_custom_call.1} parent=75 // pred_region
          %671 = dma.done [#allocation25], 16
        $region124: #{tpu_custom_call.1} parent=75 // pred_fallthru
          _
        // Predicated region
        $region125: #{tpu_custom_call.1} parent=75 // pred_check
          %p672 = pneg %p348
        $region126: #{tpu_custom_call.1} parent=75 // pred_check_branch
          %674 = sbr.rel (%p672) target = $region128
        $region127: #{tpu_custom_call.1} parent=75 // pred_region
          %675 = dma.done [#allocation25], 1024
        $region128: #{tpu_custom_call.1} parent=75 // pred_fallthru
          _
        // Predicated region
        $region129: #{tpu_custom_call.1} parent=75 // pred_check
          %p676 = pneg %p369
        $region130: #{tpu_custom_call.1} parent=75 // pred_check_branch
          %678 = sbr.rel (%p676) target = $region132
        $region131: #{tpu_custom_call.1} parent=75 // pred_region
          %679 = dma.done [#allocation28], 16
        $region132: #{tpu_custom_call.1} parent=75 // pred_fallthru
          _
        %s680 = sand.u32 %s69, 1
        %s681 = scalar_lea.sflag [#allocation7], %s680
        %s682 = sand.u32 %s69, 1
        %s683 = smul.addr %s682, 8
        %s684 = scalar_lea.vmem [#allocation6], %s683
        %p685 = pneg %p82
        %p686 = pneg %p79
        %s687 = sand.u32 %s40, 1
        %s688 = scalar_lea.sflag [#allocation10], %s687
        %s689 = sand.u32 %s97, 1
        %s690 = smul.addr %s689, 4
        %s691 = scalar_lea.vmem [#allocation9], %s690
        %p692 = pneg %p110
        %p693 = pneg %p107
        %s694 = sand.u32 %s40, 1
        %s695 = scalar_lea.sflag [#allocation10], %s694
        %s696 = sand.u32 %s125, 1
        %s697 = smul.addr %s696, 4
        %s698 = scalar_lea.vmem [#allocation11], %s697
        %p699 = pneg %p138
        %p700 = pneg %p135
        %p701 = pneg %p159
        %p702 = pneg %p156
        %p703 = pneg %p180
        %p704 = pneg %p177
        %p705 = pneg %p201
        %p706 = pneg %p198
        %p707 = pneg %p222
        %p708 = pneg %p219
        %p709 = pneg %p243
        %p710 = pneg %p240
        %p711 = pneg %p264
        %p712 = pneg %p261
        %p713 = pneg %p285
        %p714 = pneg %p282
        %p715 = pneg %p306
        %p716 = pneg %p303
        %p717 = pneg %p327
        %p718 = pneg %p324
        %p719 = pneg %p348
        %p720 = pneg %p345
        %p721 = pneg %p369
        %p722 = pneg %p366
        %p723 = pneg %p397
        %p724 = pneg %p394
        %s725 = sand.u32 %s384, 1
        %s726 = scalar_lea.sflag [#allocation8], %s725
        %s727 = sand.u32 %s384, 1
        %s728 = smul.addr %s727, 8
        %s729 = scalar_lea.vmem [#allocation29], %s728
        %p731 = scmp.eq.s32.totalorder %s47, 0
        // Predicated region
        $region133: #{tpu_custom_call.1} parent=75 // pred_check
          %p732 = pneg %p731
        $region134: #{tpu_custom_call.1} parent=75 // pred_check_branch
          %734 = sbr.rel (%p732) target = $region136
        $region135: #{tpu_custom_call.1} parent=75 // pred_region
          %vm735 = vcmask 7168
          %736 = vst.msk [vmem:[#allocation3] sm:$0xff] %vm735, -inf
          %737 = vst.msk [vmem:[#allocation3 + $0x8] sm:$0xff] %vm735, -inf
          %738 = vst.msk [vmem:[#allocation3 + $0x10] sm:$0xff] %vm735, -inf
          %739 = vst.msk [vmem:[#allocation3 + $0x18] sm:$0xff] %vm735, -inf
          %740 = vst.msk [vmem:[#allocation4] sm:$0xff] %vm735, 0.0
          %741 = vst.msk [vmem:[#allocation4 + $0x8] sm:$0xff] %vm735, 0.0
          %742 = vst.msk [vmem:[#allocation4 + $0x10] sm:$0xff] %vm735, 0.0
          %743 = vst.msk [vmem:[#allocation4 + $0x18] sm:$0xff] %vm735, 0.0
          %vm744 = vcmask 261120
          %745 = vst.msk [vmem:[#allocation5] sm:$0xff] %vm744, 0.0
          %v746 = vld [vmem:[%s613] sm:$0xff]
          %v747 = vpack.c.bf16 %v746, %v746
          %v748 = vld [vmem:[#allocation12] sm:$0xf]
          %v749 = vld [vmem:[#allocation12 + $0x4] sm:$0xf]
          %v750 = vld [vmem:[#allocation12 + $0x8] sm:$0xf]
          %v751 = vld [vmem:[#allocation12 + $0xc] sm:$0xf]
          %v756 = vunpack.c.l.b16 %v748
          %v757 = vunpack.c.l.b16 %v749
          %v758 = vunpack.c.l.b16 %v750
          %v759 = vunpack.c.l.b16 %v751
          %v760 = vpack.c.b16 %v757, %v756
          %v761 = vpack.c.b16 %v759, %v758
          %v765 = vsel %vm744, %v747, 0
          %767 = vmatprep.subr.bf16.mxu0 0
          %768 = vmatpush1.bf16.msra.mxu0 %v760
          %769 = vmatprep.subr.bf16.mxu0 0
          %770 = vmatpush1.bf16.msra.mxu0 %v761
          %771 = vmatprep.subr.bf16.mxu0 0
          %772 = vmatpush1.bf16.msra.mxu0 0
          %773 = vmatprep.subr.bf16.mxu0 0
          %774 = vmatpush1.bf16.msra.mxu0 0
          %775 = vmatprep.subr.bf16.mxu0 0
          %776 = vmatpush1.bf16.msra.mxu0 0
          %777 = vmatprep.subr.bf16.mxu0 0
          %778 = vmatpush1.bf16.msra.mxu0 0
          %779 = vmatprep.subr.bf16.mxu0 0
          %780 = vmatpush1.bf16.msra.mxu0 0
          %781 = vmatprep.subr.bf16.mxu0 0
          %782 = vmatpush1.bf16.msra.mxu0 0
          %783 = vmatprep.subr.bf16.mxu0 0
          %784 = vmatpush1.bf16.msra.mxu0 0
          %785 = vmatprep.subr.bf16.mxu0 0
          %786 = vmatpush1.bf16.msra.mxu0 0
          %787 = vmatprep.subr.bf16.mxu0 0
          %788 = vmatpush1.bf16.msra.mxu0 0
          %789 = vmatprep.subr.bf16.mxu0 0
          %790 = vmatpush1.bf16.msra.mxu0 0
          %791 = vmatprep.subr.bf16.mxu0 0
          %792 = vmatpush1.bf16.msra.mxu0 0
          %793 = vmatprep.subr.bf16.mxu0 0
          %794 = vmatpush1.bf16.msra.mxu0 0
          %795 = vmatprep.subr.bf16.mxu0 0
          %796 = vmatpush1.bf16.msra.mxu0 0
          %797 = vmatprep.subr.bf16.mxu0 0
          %798 = vmatpush1.bf16.msra.mxu0 0
          %799 = vmatprep.mubr.bf16.mxu0 0
          %800 = vmatmul.mubr.bf16.gmra.mrb[0].mxu0 %v765
          %v801 = vpop.f32.mrb[0].mxu0
          %v802 = vadd.f32 0.0, %v801
          %v803 = vpop.f32.mrb[0].mxu0
          %v804 = vpop.f32.mrb[0].mxu0
          %v805 = vpop.f32.mrb[0].mxu0
          %806 = vdwg.mxu0
          %v807 = vpack.c.bf16 %v802, %v802
          %vm808 = vcmask 257024
          %809 = vst.msk [vmem:[#allocation2] sm:$0xf] %vm808, %v807
        $region136: #{tpu_custom_call.1} parent=75 // pred_fallthru
          _
        %s810 = smul.u32 %s47, 8
        %s811 = smul.u32 %s46, 8
        %s812 = sadd.s32 %s811, 7
        %p813 = scmp.le.s32.totalorder %s810, %s812
        // Predicated region
        $region137: #{tpu_custom_call.1} parent=75 // pred_check
          %p814 = pneg %p813
        $region138: #{tpu_custom_call.1} parent=75 // pred_check_branch
          %816 = sbr.rel (%p814) target = $region140
        $region139: #{tpu_custom_call.1} parent=75 // pred_region
          %v817 = vld [vmem:[%s622] sm:$0xf]
          %v818 = vld [vmem:[%s631] sm:$0xf]
          %v819 = vld [vmem:[#allocation2] sm:$0xf]
          %v820 = vlaneseq
          %v821 = vshrl.u32 %v820, 7
          %v822 = vstv %s811
          %v823 = vadd.s32 %v822, %v821
          %v824 = vlaneseq
          %v825 = vand.u32 %v824, 127
          %v826 = vstv %s810
          %v827 = vadd.s32 %v826, %v825
          %vm828 = vcmp.gt.s32.totalorder %v827, %v823
          %v829 = vsel %vm828, -1e+20, 0.0
          %vm830 = vcmask 64512
          %v832 = vsel %vm830, %v819, 0
          %v835 = vsel %vm830, %v817, 0
          %837 = vmatprep.subr.bf16.mxu0 0
          %838 = vmatpush1.bf16.xpose.msra.mxu0 %v835
          %839 = vmatprep.subr.bf16.mxu0 0
          %840 = vmatpush1.bf16.xpose.msra.mxu0 0
          %841 = vmatprep.subr.bf16.mxu0 0
          %842 = vmatpush1.bf16.xpose.msra.mxu0 0
          %843 = vmatprep.subr.bf16.mxu0 0
          %844 = vmatpush1.bf16.xpose.msra.mxu0 0
          %845 = vmatprep.subr.bf16.mxu0 0
          %846 = vmatpush1.bf16.xpose.msra.mxu0 0
          %847 = vmatprep.subr.bf16.mxu0 0
          %848 = vmatpush1.bf16.xpose.msra.mxu0 0
          %849 = vmatprep.subr.bf16.mxu0 0
          %850 = vmatpush1.bf16.xpose.msra.mxu0 0
          %851 = vmatprep.subr.bf16.mxu0 0
          %852 = vmatpush1.bf16.xpose.msra.mxu0 0
          %853 = vmatprep.subr.bf16.mxu0 0
          %854 = vmatpush1.bf16.xpose.msra.mxu0 0
          %855 = vmatprep.subr.bf16.mxu0 0
          %856 = vmatpush1.bf16.xpose.msra.mxu0 0
          %857 = vmatprep.subr.bf16.mxu0 0
          %858 = vmatpush1.bf16.xpose.msra.mxu0 0
          %859 = vmatprep.subr.bf16.mxu0 0
          %860 = vmatpush1.bf16.xpose.msra.mxu0 0
          %861 = vmatprep.subr.bf16.mxu0 0
          %862 = vmatpush1.bf16.xpose.msra.mxu0 0
          %863 = vmatprep.subr.bf16.mxu0 0
          %864 = vmatpush1.bf16.xpose.msra.mxu0 0
          %865 = vmatprep.subr.bf16.mxu0 0
          %866 = vmatpush1.bf16.xpose.msra.mxu0 0
          %867 = vmatprep.subr.bf16.mxu0 0
          %868 = vmatpush1.bf16.xpose.msra.mxu0 0
          %869 = vmatprep.mubr.bf16.mxu0 0
          %870 = vmatmul.mubr.bf16.gmra.mrb[0].mxu0 %v832
          %v871 = vpop.f32.mrb[0].mxu0
          %v872 = vadd.f32 %v829, %v871
          %v873 = vpop.f32.mrb[0].mxu0
          %v874 = vpop.f32.mrb[0].mxu0
          %v875 = vpop.f32.mrb[0].mxu0
          %876 = vdwg.mxu0
          %v877 = vld [vmem:[#allocation3] sm:$0xff]
          %v878 = vsel %vm830, %v872, -inf
          %879 = vmax.xlane.f32.xlu0 %v878
          %v880 = vpop.xlane.xlu0 %879
          %v881 = vmax.f32 %v877, %v880
          %v882 = vsub.f32 %v877, %v881
          %v883 = vmul.f32 %v882, 1.442695
          %v884 = vpow.pop %v883
          %886 = vset.pattern.permute.xlu0 0
          %887 = vperm.xlu0 %886, %v881
          %v888 = vpop.permute.xlu0 %887
          %v890 = vsub.f32 %v872, %v888
          %v891 = vmul.f32 %v890, 1.442695
          %v892 = vpow.pop %v891
          %v893 = vld [vmem:[#allocation4] sm:$0xff]
          %v894 = vmul.f32 %v884, %v893
          %v895 = vsel %vm830, %v892, 0.0
          %896 = vadd.xlane.f32.xlu0 %v895
          %v897 = vpop.xlane.xlu0 %896
          %v898 = vadd.f32 %v894, %v897
          %vm899 = vcmask 7168
          %900 = vst.msk [vmem:[#allocation4] sm:$0xff] %vm899, %v898
          %v901 = vld [vmem:[#allocation5] sm:$0xff]
          %903 = vset.pattern.permute.xlu0 0
          %904 = vperm.xlu0 %903, %v884
          %v905 = vpop.permute.xlu0 %904
          %v907 = vmul.f32 %v905, %v901
          %v908 = vpack.c.bf16 %v892, %v892
          %v910 = vsel %vm830, %v908, 0
          %vm912 = vcmask 1043456
          %v914 = vsel %vm912, %v818, 0
          %916 = vmatprep.subr.bf16.mxu0 0
          %917 = vmatpush1.bf16.msra.mxu0 %v914
          %918 = vmatprep.subr.bf16.mxu0 0
          %919 = vmatpush1.bf16.msra.mxu0 0
          %920 = vmatprep.subr.bf16.mxu0 0
          %921 = vmatpush1.bf16.msra.mxu0 0
          %922 = vmatprep.subr.bf16.mxu0 0
          %923 = vmatpush1.bf16.msra.mxu0 0
          %924 = vmatprep.subr.bf16.mxu0 0
          %925 = vmatpush1.bf16.msra.mxu0 0
          %926 = vmatprep.subr.bf16.mxu0 0
          %927 = vmatpush1.bf16.msra.mxu0 0
          %928 = vmatprep.subr.bf16.mxu0 0
          %929 = vmatpush1.bf16.msra.mxu0 0
          %930 = vmatprep.subr.bf16.mxu0 0
          %931 = vmatpush1.bf16.msra.mxu0 0
          %932 = vmatprep.subr.bf16.mxu0 0
          %933 = vmatpush1.bf16.msra.mxu0 0
          %934 = vmatprep.subr.bf16.mxu0 0
          %935 = vmatpush1.bf16.msra.mxu0 0
          %936 = vmatprep.subr.bf16.mxu0 0
          %937 = vmatpush1.bf16.msra.mxu0 0
          %938 = vmatprep.subr.bf16.mxu0 0
          %939 = vmatpush1.bf16.msra.mxu0 0
          %940 = vmatprep.subr.bf16.mxu0 0
          %941 = vmatpush1.bf16.msra.mxu0 0
          %942 = vmatprep.subr.bf16.mxu0 0
          %943 = vmatpush1.bf16.msra.mxu0 0
          %944 = vmatprep.subr.bf16.mxu0 0
          %945 = vmatpush1.bf16.msra.mxu0 0
          %946 = vmatprep.subr.bf16.mxu0 0
          %947 = vmatpush1.bf16.msra.mxu0 0
          %948 = vmatprep.mubr.bf16.mxu0 0
          %949 = vmatmul.mubr.bf16.gmra.mrb[0].mxu0 %v910
          %v950 = vpop.f32.mrb[0].mxu0
          %v951 = vadd.f32 0.0, %v950
          %v952 = vpop.f32.mrb[0].mxu0
          %v953 = vpop.f32.mrb[0].mxu0
          %v954 = vpop.f32.mrb[0].mxu0
          %955 = vdwg.mxu0
          %v956 = vadd.f32 %v907, %v951
          %957 = vst.msk [vmem:[#allocation5] sm:$0xff] %vm830, %v956
          %958 = vst.msk [vmem:[#allocation3] sm:$0xff] %vm899, %v881
          %v960 = vunpack.c.l.b16 %v819
          %v961 = vpack.c.b16 %v960, %v960
          %962 = vrot.lane.b32.xlu0 %v961, 120
          %v963 = vpop.permute.xlu0 %962
          %v965 = vunpack.c.l.b16 %v817
          %v966 = vpack.c.b16 %v965, %v965
          %967 = vrot.lane.b32.xlu0 %v966, 120
          %v968 = vpop.permute.xlu0 %967
          %v970 = vsel %vm830, %v963, 0
          %v973 = vsel %vm830, %v968, 0
          %975 = vmatprep.subr.bf16.mxu0 0
          %976 = vmatpush1.bf16.xpose.msra.mxu0 %v973
          %977 = vmatprep.subr.bf16.mxu0 0
          %978 = vmatpush1.bf16.xpose.msra.mxu0 0
          %979 = vmatprep.subr.bf16.mxu0 0
          %980 = vmatpush1.bf16.xpose.msra.mxu0 0
          %981 = vmatprep.subr.bf16.mxu0 0
          %982 = vmatpush1.bf16.xpose.msra.mxu0 0
          %983 = vmatprep.subr.bf16.mxu0 0
          %984 = vmatpush1.bf16.xpose.msra.mxu0 0
          %985 = vmatprep.subr.bf16.mxu0 0
          %986 = vmatpush1.bf16.xpose.msra.mxu0 0
          %987 = vmatprep.subr.bf16.mxu0 0
          %988 = vmatpush1.bf16.xpose.msra.mxu0 0
          %989 = vmatprep.subr.bf16.mxu0 0
          %990 = vmatpush1.bf16.xpose.msra.mxu0 0
          %991 = vmatprep.subr.bf16.mxu0 0
          %992 = vmatpush1.bf16.xpose.msra.mxu0 0
          %993 = vmatprep.subr.bf16.mxu0 0
          %994 = vmatpush1.bf16.xpose.msra.mxu0 0
          %995 = vmatprep.subr.bf16.mxu0 0
          %996 = vmatpush1.bf16.xpose.msra.mxu0 0
          %997 = vmatprep.subr.bf16.mxu0 0
          %998 = vmatpush1.bf16.xpose.msra.mxu0 0
          %999 = vmatprep.subr.bf16.mxu0 0
          %1000 = vmatpush1.bf16.xpose.msra.mxu0 0
          %1001 = vmatprep.subr.bf16.mxu0 0
          %1002 = vmatpush1.bf16.xpose.msra.mxu0 0
          %1003 = vmatprep.subr.bf16.mxu0 0
          %1004 = vmatpush1.bf16.xpose.msra.mxu0 0
          %1005 = vmatprep.subr.bf16.mxu0 0
          %1006 = vmatpush1.bf16.xpose.msra.mxu0 0
          %1007 = vmatprep.mubr.bf16.mxu0 0
          %1008 = vmatmul.mubr.bf16.gmra.mrb[0].mxu0 %v970
          %v1009 = vpop.f32.mrb[0].mxu0
          %v1010 = vadd.f32 %v829, %v1009
          %v1011 = vpop.f32.mrb[0].mxu0
          %v1012 = vpop.f32.mrb[0].mxu0
          %v1013 = vpop.f32.mrb[0].mxu0
          %1014 = vdwg.mxu0
          %s1015 = scalar_lea.vmem [#allocation3], 8
          %v1016 = vld [vmem:[%s1015] sm:$0xff]
          %v1017 = vsel %vm830, %v1010, -inf
          %1018 = vmax.xlane.f32.xlu0 %v1017
          %v1019 = vpop.xlane.xlu0 %1018
          %v1020 = vmax.f32 %v1016, %v1019
          %v1021 = vsub.f32 %v1016, %v1020
          %v1022 = vmul.f32 %v1021, 1.442695
          %v1023 = vpow.pop %v1022
          %1025 = vset.pattern.permute.xlu0 0
          %1026 = vperm.xlu0 %1025, %v1020
          %v1027 = vpop.permute.xlu0 %1026
          %v1029 = vsub.f32 %v1010, %v1027
          %v1030 = vmul.f32 %v1029, 1.442695
          %v1031 = vpow.pop %v1030
          %s1032 = scalar_lea.vmem [#allocation4], 8
          %v1033 = vld [vmem:[%s1032] sm:$0xff]
          %v1034 = vmul.f32 %v1023, %v1033
          %v1035 = vsel %vm830, %v1031, 0.0
          %1036 = vadd.xlane.f32.xlu0 %v1035
          %v1037 = vpop.xlane.xlu0 %1036
          %v1038 = vadd.f32 %v1034, %v1037
          %1039 = vst.msk [vmem:[%s1032] sm:$0xff] %vm899, %v1038
          %v1040 = vld [vmem:[#allocation5] sm:$0xff]
          %1042 = vset.pattern.permute.xlu0 0
          %1043 = vperm.xlu0 %1042, %v1023
          %v1044 = vpop.permute.xlu0 %1043
          %v1046 = vmul.f32 %v1044, %v1040
          %v1047 = vpack.c.bf16 %v1031, %v1031
          %v1049 = vunpack.c.l.b16 %v818
          %v1050 = vpack.c.b16 %v1049, %v1049
          %1051 = vrot.lane.b32.xlu0 %v1050, 120
          %v1052 = vpop.permute.xlu0 %1051
          %v1054 = vsel %vm830, %v1047, 0
          %v1057 = vsel %vm912, %v1052, 0
          %1059 = vmatprep.subr.bf16.mxu0 0
          %1060 = vmatpush1.bf16.msra.mxu0 %v1057
          %1061 = vmatprep.subr.bf16.mxu0 0
          %1062 = vmatpush1.bf16.msra.mxu0 0
          %1063 = vmatprep.subr.bf16.mxu0 0
          %1064 = vmatpush1.bf16.msra.mxu0 0
          %1065 = vmatprep.subr.bf16.mxu0 0
          %1066 = vmatpush1.bf16.msra.mxu0 0
          %1067 = vmatprep.subr.bf16.mxu0 0
          %1068 = vmatpush1.bf16.msra.mxu0 0
          %1069 = vmatprep.subr.bf16.mxu0 0
          %1070 = vmatpush1.bf16.msra.mxu0 0
          %1071 = vmatprep.subr.bf16.mxu0 0
          %1072 = vmatpush1.bf16.msra.mxu0 0
          %1073 = vmatprep.subr.bf16.mxu0 0
          %1074 = vmatpush1.bf16.msra.mxu0 0
          %1075 = vmatprep.subr.bf16.mxu0 0
          %1076 = vmatpush1.bf16.msra.mxu0 0
          %1077 = vmatprep.subr.bf16.mxu0 0
          %1078 = vmatpush1.bf16.msra.mxu0 0
          %1079 = vmatprep.subr.bf16.mxu0 0
          %1080 = vmatpush1.bf16.msra.mxu0 0
          %1081 = vmatprep.subr.bf16.mxu0 0
          %1082 = vmatpush1.bf16.msra.mxu0 0
          %1083 = vmatprep.subr.bf16.mxu0 0
          %1084 = vmatpush1.bf16.msra.mxu0 0
          %1085 = vmatprep.subr.bf16.mxu0 0
          %1086 = vmatpush1.bf16.msra.mxu0 0
          %1087 = vmatprep.subr.bf16.mxu0 0
          %1088 = vmatpush1.bf16.msra.mxu0 0
          %1089 = vmatprep.subr.bf16.mxu0 0
          %1090 = vmatpush1.bf16.msra.mxu0 0
          %1091 = vmatprep.mubr.bf16.mxu0 0
          %1092 = vmatmul.mubr.bf16.gmra.mrb[0].mxu0 %v1054
          %v1093 = vpop.f32.mrb[0].mxu0
          %v1094 = vadd.f32 0.0, %v1093
          %v1095 = vpop.f32.mrb[0].mxu0
          %v1096 = vpop.f32.mrb[0].mxu0
          %v1097 = vpop.f32.mrb[0].mxu0
          %1098 = vdwg.mxu0
          %1100 = vrot.lane.b32.xlu0 %v1094, 8
          %v1101 = vpop.permute.xlu0 %1100
          %v1103 = vadd.f32 %v1046, %v1101
          %vm1104 = vcmask 130112
          %1105 = vst.msk [vmem:[#allocation5] sm:$0xff] %vm1104, %v1103
          %1106 = vst.msk [vmem:[%s1015] sm:$0xff] %vm899, %v1020
          %1107 = vrot.lane.b32.xlu0 %v961, 112
          %v1108 = vpop.permute.xlu0 %1107
          %1109 = vrot.lane.b32.xlu0 %v966, 112
          %v1110 = vpop.permute.xlu0 %1109
          %v1112 = vsel %vm830, %v1108, 0
          %v1115 = vsel %vm830, %v1110, 0
          %1117 = vmatprep.subr.bf16.mxu0 0
          %1118 = vmatpush1.bf16.xpose.msra.mxu0 %v1115
          %1119 = vmatprep.subr.bf16.mxu0 0
          %1120 = vmatpush1.bf16.xpose.msra.mxu0 0
          %1121 = vmatprep.subr.bf16.mxu0 0
          %1122 = vmatpush1.bf16.xpose.msra.mxu0 0
          %1123 = vmatprep.subr.bf16.mxu0 0
          %1124 = vmatpush1.bf16.xpose.msra.mxu0 0
          %1125 = vmatprep.subr.bf16.mxu0 0
          %1126 = vmatpush1.bf16.xpose.msra.mxu0 0
          %1127 = vmatprep.subr.bf16.mxu0 0
          %1128 = vmatpush1.bf16.xpose.msra.mxu0 0
          %1129 = vmatprep.subr.bf16.mxu0 0
          %1130 = vmatpush1.bf16.xpose.msra.mxu0 0
          %1131 = vmatprep.subr.bf16.mxu0 0
          %1132 = vmatpush1.bf16.xpose.msra.mxu0 0
          %1133 = vmatprep.subr.bf16.mxu0 0
          %1134 = vmatpush1.bf16.xpose.msra.mxu0 0
          %1135 = vmatprep.subr.bf16.mxu0 0
          %1136 = vmatpush1.bf16.xpose.msra.mxu0 0
          %1137 = vmatprep.subr.bf16.mxu0 0
          %1138 = vmatpush1.bf16.xpose.msra.mxu0 0
          %1139 = vmatprep.subr.bf16.mxu0 0
          %1140 = vmatpush1.bf16.xpose.msra.mxu0 0
          %1141 = vmatprep.subr.bf16.mxu0 0
          %1142 = vmatpush1.bf16.xpose.msra.mxu0 0
          %1143 = vmatprep.subr.bf16.mxu0 0
          %1144 = vmatpush1.bf16.xpose.msra.mxu0 0
          %1145 = vmatprep.subr.bf16.mxu0 0
          %1146 = vmatpush1.bf16.xpose.msra.mxu0 0
          %1147 = vmatprep.subr.bf16.mxu0 0
          %1148 = vmatpush1.bf16.xpose.msra.mxu0 0
          %1149 = vmatprep.mubr.bf16.mxu0 0
          %1150 = vmatmul.mubr.bf16.gmra.mrb[0].mxu0 %v1112
          %v1151 = vpop.f32.mrb[0].mxu0
          %v1152 = vadd.f32 %v829, %v1151
          %v1153 = vpop.f32.mrb[0].mxu0
          %v1154 = vpop.f32.mrb[0].mxu0
          %v1155 = vpop.f32.mrb[0].mxu0
          %1156 = vdwg.mxu0
          %s1157 = scalar_lea.vmem [#allocation3], 16
          %v1158 = vld [vmem:[%s1157] sm:$0xff]
          %v1159 = vsel %vm830, %v1152, -inf
          %1160 = vmax.xlane.f32.xlu0 %v1159
          %v1161 = vpop.xlane.xlu0 %1160
          %v1162 = vmax.f32 %v1158, %v1161
          %v1163 = vsub.f32 %v1158, %v1162
          %v1164 = vmul.f32 %v1163, 1.442695
          %v1165 = vpow.pop %v1164
          %1167 = vset.pattern.permute.xlu0 0
          %1168 = vperm.xlu0 %1167, %v1162
          %v1169 = vpop.permute.xlu0 %1168
          %v1171 = vsub.f32 %v1152, %v1169
          %v1172 = vmul.f32 %v1171, 1.442695
          %v1173 = vpow.pop %v1172
          %s1174 = scalar_lea.vmem [#allocation4], 16
          %v1175 = vld [vmem:[%s1174] sm:$0xff]
          %v1176 = vmul.f32 %v1165, %v1175
          %v1177 = vsel %vm830, %v1173, 0.0
          %1178 = vadd.xlane.f32.xlu0 %v1177
          %v1179 = vpop.xlane.xlu0 %1178
          %v1180 = vadd.f32 %v1176, %v1179
          %1181 = vst.msk [vmem:[%s1174] sm:$0xff] %vm899, %v1180
          %v1182 = vld [vmem:[#allocation5] sm:$0xff]
          %1184 = vset.pattern.permute.xlu0 0
          %1185 = vperm.xlu0 %1184, %v1165
          %v1186 = vpop.permute.xlu0 %1185
          %v1188 = vmul.f32 %v1186, %v1182
          %v1189 = vpack.c.bf16 %v1173, %v1173
          %1190 = vrot.lane.b32.xlu0 %v1050, 112
          %v1191 = vpop.permute.xlu0 %1190
          %v1193 = vsel %vm830, %v1189, 0
          %v1196 = vsel %vm912, %v1191, 0
          %1198 = vmatprep.subr.bf16.mxu0 0
          %1199 = vmatpush1.bf16.msra.mxu0 %v1196
          %1200 = vmatprep.subr.bf16.mxu0 0
          %1201 = vmatpush1.bf16.msra.mxu0 0
          %1202 = vmatprep.subr.bf16.mxu0 0
          %1203 = vmatpush1.bf16.msra.mxu0 0
          %1204 = vmatprep.subr.bf16.mxu0 0
          %1205 = vmatpush1.bf16.msra.mxu0 0
          %1206 = vmatprep.subr.bf16.mxu0 0
          %1207 = vmatpush1.bf16.msra.mxu0 0
          %1208 = vmatprep.subr.bf16.mxu0 0
          %1209 = vmatpush1.bf16.msra.mxu0 0
          %1210 = vmatprep.subr.bf16.mxu0 0
          %1211 = vmatpush1.bf16.msra.mxu0 0
          %1212 = vmatprep.subr.bf16.mxu0 0
          %1213 = vmatpush1.bf16.msra.mxu0 0
          %1214 = vmatprep.subr.bf16.mxu0 0
          %1215 = vmatpush1.bf16.msra.mxu0 0
          %1216 = vmatprep.subr.bf16.mxu0 0
          %1217 = vmatpush1.bf16.msra.mxu0 0
          %1218 = vmatprep.subr.bf16.mxu0 0
          %1219 = vmatpush1.bf16.msra.mxu0 0
          %1220 = vmatprep.subr.bf16.mxu0 0
          %1221 = vmatpush1.bf16.msra.mxu0 0
          %1222 = vmatprep.subr.bf16.mxu0 0
          %1223 = vmatpush1.bf16.msra.mxu0 0
          %1224 = vmatprep.subr.bf16.mxu0 0
          %1225 = vmatpush1.bf16.msra.mxu0 0
          %1226 = vmatprep.subr.bf16.mxu0 0
          %1227 = vmatpush1.bf16.msra.mxu0 0
          %1228 = vmatprep.subr.bf16.mxu0 0
          %1229 = vmatpush1.bf16.msra.mxu0 0
          %1230 = vmatprep.mubr.bf16.mxu0 0
          %1231 = vmatmul.mubr.bf16.gmra.mrb[0].mxu0 %v1193
          %v1232 = vpop.f32.mrb[0].mxu0
          %v1233 = vadd.f32 0.0, %v1232
          %v1234 = vpop.f32.mrb[0].mxu0
          %v1235 = vpop.f32.mrb[0].mxu0
          %v1236 = vpop.f32.mrb[0].mxu0
          %1237 = vdwg.mxu0
          %1239 = vrot.lane.b32.xlu0 %v1233, 16
          %v1240 = vpop.permute.xlu0 %1239
          %v1242 = vadd.f32 %v1188, %v1240
          %vm1243 = vcmask 195712
          %1244 = vst.msk [vmem:[#allocation5] sm:$0xff] %vm1243, %v1242
          %1245 = vst.msk [vmem:[%s1157] sm:$0xff] %vm899, %v1162
          %1246 = vrot.lane.b32.xlu0 %v961, 104
          %v1247 = vpop.permute.xlu0 %1246
          %1248 = vrot.lane.b32.xlu0 %v966, 104
          %v1249 = vpop.permute.xlu0 %1248
          %v1251 = vsel %vm830, %v1247, 0
          %v1254 = vsel %vm830, %v1249, 0
          %1256 = vmatprep.subr.bf16.mxu0 0
          %1257 = vmatpush1.bf16.xpose.msra.mxu0 %v1254
          %1258 = vmatprep.subr.bf16.mxu0 0
          %1259 = vmatpush1.bf16.xpose.msra.mxu0 0
          %1260 = vmatprep.subr.bf16.mxu0 0
          %1261 = vmatpush1.bf16.xpose.msra.mxu0 0
          %1262 = vmatprep.subr.bf16.mxu0 0
          %1263 = vmatpush1.bf16.xpose.msra.mxu0 0
          %1264 = vmatprep.subr.bf16.mxu0 0
          %1265 = vmatpush1.bf16.xpose.msra.mxu0 0
          %1266 = vmatprep.subr.bf16.mxu0 0
          %1267 = vmatpush1.bf16.xpose.msra.mxu0 0
          %1268 = vmatprep.subr.bf16.mxu0 0
          %1269 = vmatpush1.bf16.xpose.msra.mxu0 0
          %1270 = vmatprep.subr.bf16.mxu0 0
          %1271 = vmatpush1.bf16.xpose.msra.mxu0 0
          %1272 = vmatprep.subr.bf16.mxu0 0
          %1273 = vmatpush1.bf16.xpose.msra.mxu0 0
          %1274 = vmatprep.subr.bf16.mxu0 0
          %1275 = vmatpush1.bf16.xpose.msra.mxu0 0
          %1276 = vmatprep.subr.bf16.mxu0 0
          %1277 = vmatpush1.bf16.xpose.msra.mxu0 0
          %1278 = vmatprep.subr.bf16.mxu0 0
          %1279 = vmatpush1.bf16.xpose.msra.mxu0 0
          %1280 = vmatprep.subr.bf16.mxu0 0
          %1281 = vmatpush1.bf16.xpose.msra.mxu0 0
          %1282 = vmatprep.subr.bf16.mxu0 0
          %1283 = vmatpush1.bf16.xpose.msra.mxu0 0
          %1284 = vmatprep.subr.bf16.mxu0 0
          %1285 = vmatpush1.bf16.xpose.msra.mxu0 0
          %1286 = vmatprep.subr.bf16.mxu0 0
          %1287 = vmatpush1.bf16.xpose.msra.mxu0 0
          %1288 = vmatprep.mubr.bf16.mxu0 0
          %1289 = vmatmul.mubr.bf16.gmra.mrb[0].mxu0 %v1251
          %v1290 = vpop.f32.mrb[0].mxu0
          %v1291 = vadd.f32 %v829, %v1290
          %v1292 = vpop.f32.mrb[0].mxu0
          %v1293 = vpop.f32.mrb[0].mxu0
          %v1294 = vpop.f32.mrb[0].mxu0
          %1295 = vdwg.mxu0
          %s1296 = scalar_lea.vmem [#allocation3], 24
          %v1297 = vld [vmem:[%s1296] sm:$0xff]
          %v1298 = vsel %vm830, %v1291, -inf
          %1299 = vmax.xlane.f32.xlu0 %v1298
          %v1300 = vpop.xlane.xlu0 %1299
          %v1301 = vmax.f32 %v1297, %v1300
          %v1302 = vsub.f32 %v1297, %v1301
          %v1303 = vmul.f32 %v1302, 1.442695
          %v1304 = vpow.pop %v1303
          %1306 = vset.pattern.permute.xlu0 0
          %1307 = vperm.xlu0 %1306, %v1301
          %v1308 = vpop.permute.xlu0 %1307
          %v1310 = vsub.f32 %v1291, %v1308
          %v1311 = vmul.f32 %v1310, 1.442695
          %v1312 = vpow.pop %v1311
          %s1313 = scalar_lea.vmem [#allocation4], 24
          %v1314 = vld [vmem:[%s1313] sm:$0xff]
          %v1315 = vmul.f32 %v1304, %v1314
          %v1316 = vsel %vm830, %v1312, 0.0
          %1317 = vadd.xlane.f32.xlu0 %v1316
          %v1318 = vpop.xlane.xlu0 %1317
          %v1319 = vadd.f32 %v1315, %v1318
          %1320 = vst.msk [vmem:[%s1313] sm:$0xff] %vm899, %v1319
          %v1321 = vld [vmem:[#allocation5] sm:$0xff]
          %1323 = vset.pattern.permute.xlu0 0
          %1324 = vperm.xlu0 %1323, %v1304
          %v1325 = vpop.permute.xlu0 %1324
          %v1327 = vmul.f32 %v1325, %v1321
          %v1328 = vpack.c.bf16 %v1312, %v1312
          %1329 = vrot.lane.b32.xlu0 %v1050, 104
          %v1330 = vpop.permute.xlu0 %1329
          %v1332 = vsel %vm830, %v1328, 0
          %v1335 = vsel %vm912, %v1330, 0
          %1337 = vmatprep.subr.bf16.mxu0 0
          %1338 = vmatpush1.bf16.msra.mxu0 %v1335
          %1339 = vmatprep.subr.bf16.mxu0 0
          %1340 = vmatpush1.bf16.msra.mxu0 0
          %1341 = vmatprep.subr.bf16.mxu0 0
          %1342 = vmatpush1.bf16.msra.mxu0 0
          %1343 = vmatprep.subr.bf16.mxu0 0
          %1344 = vmatpush1.bf16.msra.mxu0 0
          %1345 = vmatprep.subr.bf16.mxu0 0
          %1346 = vmatpush1.bf16.msra.mxu0 0
          %1347 = vmatprep.subr.bf16.mxu0 0
          %1348 = vmatpush1.bf16.msra.mxu0 0
          %1349 = vmatprep.subr.bf16.mxu0 0
          %1350 = vmatpush1.bf16.msra.mxu0 0
          %1351 = vmatprep.subr.bf16.mxu0 0
          %1352 = vmatpush1.bf16.msra.mxu0 0
          %1353 = vmatprep.subr.bf16.mxu0 0
          %1354 = vmatpush1.bf16.msra.mxu0 0
          %1355 = vmatprep.subr.bf16.mxu0 0
          %1356 = vmatpush1.bf16.msra.mxu0 0
          %1357 = vmatprep.subr.bf16.mxu0 0
          %1358 = vmatpush1.bf16.msra.mxu0 0
          %1359 = vmatprep.subr.bf16.mxu0 0
          %1360 = vmatpush1.bf16.msra.mxu0 0
          %1361 = vmatprep.subr.bf16.mxu0 0
          %1362 = vmatpush1.bf16.msra.mxu0 0
          %1363 = vmatprep.subr.bf16.mxu0 0
          %1364 = vmatpush1.bf16.msra.mxu0 0
          %1365 = vmatprep.subr.bf16.mxu0 0
          %1366 = vmatpush1.bf16.msra.mxu0 0
          %1367 = vmatprep.subr.bf16.mxu0 0
          %1368 = vmatpush1.bf16.msra.mxu0 0
          %1369 = vmatprep.mubr.bf16.mxu0 0
          %1370 = vmatmul.mubr.bf16.gmra.mrb[0].mxu0 %v1332
          %v1371 = vpop.f32.mrb[0].mxu0
          %v1372 = vadd.f32 0.0, %v1371
          %v1373 = vpop.f32.mrb[0].mxu0
          %v1374 = vpop.f32.mrb[0].mxu0
          %v1375 = vpop.f32.mrb[0].mxu0
          %1376 = vdwg.mxu0
          %1378 = vrot.lane.b32.xlu0 %v1372, 24
          %v1379 = vpop.permute.xlu0 %1378
          %v1381 = vadd.f32 %v1327, %v1379
          %vm1382 = vcmask 261312
          %1383 = vst.msk [vmem:[#allocation5] sm:$0xff] %vm1382, %v1381
          %1384 = vst.msk [vmem:[%s1296] sm:$0xff] %vm899, %v1301
        $region140: #{tpu_custom_call.1} parent=75 // pred_fallthru
          _
        // Predicated region
        $region141: #{tpu_custom_call.1} parent=75 // pred_check
          %p1385 = pneg %p731
        $region142: #{tpu_custom_call.1} parent=75 // pred_check_branch
          %1387 = sbr.rel (%p1385) target = $region144
        $region143: #{tpu_custom_call.1} parent=75 // pred_region
          %v1388 = vld [vmem:[#allocation5] sm:$0xff]
          %v1389 = vld [vmem:[#allocation4] sm:$0xff]
          %v1390 = vrcp.pop %v1389
          %1392 = vset.pattern.permute.xlu0 0
          %1393 = vperm.xlu0 %1392, %v1390
          %v1394 = vpop.permute.xlu0 %1393
          %v1396 = vmul.f32 %v1388, %v1394
          %vm1397 = vcmask 64512
          %1398 = vst.msk [vmem:[#allocation5] sm:$0xff] %vm1397, %v1396
          %v1399 = vld [vmem:[#allocation5] sm:$0xff]
          %s1400 = scalar_lea.vmem [#allocation4], 8
          %v1401 = vld [vmem:[%s1400] sm:$0xff]
          %v1402 = vrcp.pop %v1401
          %1404 = vset.pattern.permute.xlu0 0
          %1405 = vperm.xlu0 %1404, %v1402
          %v1406 = vpop.permute.xlu0 %1405
          %v1408 = vmul.f32 %v1399, %v1406
          %vm1409 = vcmask 130112
          %1410 = vst.msk [vmem:[#allocation5] sm:$0xff] %vm1409, %v1408
          %v1411 = vld [vmem:[#allocation5] sm:$0xff]
          %s1412 = scalar_lea.vmem [#allocation4], 16
          %v1413 = vld [vmem:[%s1412] sm:$0xff]
          %v1414 = vrcp.pop %v1413
          %1416 = vset.pattern.permute.xlu0 0
          %1417 = vperm.xlu0 %1416, %v1414
          %v1418 = vpop.permute.xlu0 %1417
          %v1420 = vmul.f32 %v1411, %v1418
          %vm1421 = vcmask 195712
          %1422 = vst.msk [vmem:[#allocation5] sm:$0xff] %vm1421, %v1420
          %v1423 = vld [vmem:[#allocation5] sm:$0xff]
          %s1424 = scalar_lea.vmem [#allocation4], 24
          %v1425 = vld [vmem:[%s1424] sm:$0xff]
          %v1426 = vrcp.pop %v1425
          %1428 = vset.pattern.permute.xlu0 0
          %1429 = vperm.xlu0 %1428, %v1426
          %v1430 = vpop.permute.xlu0 %1429
          %v1432 = vmul.f32 %v1423, %v1430
          %vm1433 = vcmask 261312
          %1434 = vst.msk [vmem:[#allocation5] sm:$0xff] %vm1433, %v1432
          %v1435 = vld [vmem:[#allocation5] sm:$0xff]
          %v1436 = vpack.c.bf16 %v1435, %v1435
          %v1437 = vld [vmem:[#allocation14] sm:$0xf]
          %v1438 = vld [vmem:[#allocation14 + $0x4] sm:$0xf]
          %v1439 = vld [vmem:[#allocation14 + $0x8] sm:$0xf]
          %v1440 = vld [vmem:[#allocation14 + $0xc] sm:$0xf]
          %v1441 = vld [vmem:[#allocation15] sm:$0x1]
          %v1443 = vlaneseq
          %v1444 = vshrl.u32 %v1443, 7
          %v1445 = vsub.s32 0, %v1444
          %v1446 = vrot.slane %v1441, %v1445
          %v1452 = vunpack.c.l.b16 %v1437
          %v1453 = vunpack.c.l.b16 %v1438
          %v1454 = vunpack.c.l.b16 %v1439
          %v1455 = vunpack.c.l.b16 %v1440
          %v1456 = vpack.c.b16 %v1453, %v1452
          %v1457 = vpack.c.b16 %v1455, %v1454
          %vm1460 = vcmask 261120
          %v1462 = vsel %vm1460, %v1436, 0
          %1464 = vmatprep.subr.bf16.mxu0 0
          %1465 = vmatpush1.bf16.msra.mxu0 %v1456
          %1466 = vmatprep.subr.bf16.mxu0 0
          %1467 = vmatpush1.bf16.msra.mxu0 %v1457
          %1468 = vmatprep.subr.bf16.mxu0 0
          %1469 = vmatpush1.bf16.msra.mxu0 0
          %1470 = vmatprep.subr.bf16.mxu0 0
          %1471 = vmatpush1.bf16.msra.mxu0 0
          %1472 = vmatprep.subr.bf16.mxu0 0
          %1473 = vmatpush1.bf16.msra.mxu0 0
          %1474 = vmatprep.subr.bf16.mxu0 0
          %1475 = vmatpush1.bf16.msra.mxu0 0
          %1476 = vmatprep.subr.bf16.mxu0 0
          %1477 = vmatpush1.bf16.msra.mxu0 0
          %1478 = vmatprep.subr.bf16.mxu0 0
          %1479 = vmatpush1.bf16.msra.mxu0 0
          %1480 = vmatprep.subr.bf16.mxu0 0
          %1481 = vmatpush1.bf16.msra.mxu0 0
          %1482 = vmatprep.subr.bf16.mxu0 0
          %1483 = vmatpush1.bf16.msra.mxu0 0
          %1484 = vmatprep.subr.bf16.mxu0 0
          %1485 = vmatpush1.bf16.msra.mxu0 0
          %1486 = vmatprep.subr.bf16.mxu0 0
          %1487 = vmatpush1.bf16.msra.mxu0 0
          %1488 = vmatprep.subr.bf16.mxu0 0
          %1489 = vmatpush1.bf16.msra.mxu0 0
          %1490 = vmatprep.subr.bf16.mxu0 0
          %1491 = vmatpush1.bf16.msra.mxu0 0
          %1492 = vmatprep.subr.bf16.mxu0 0
          %1493 = vmatpush1.bf16.msra.mxu0 0
          %1494 = vmatprep.subr.bf16.mxu0 0
          %1495 = vmatpush1.bf16.msra.mxu0 0
          %1496 = vmatprep.mubr.bf16.mxu0 0
          %1497 = vmatmul.mubr.bf16.gmra.mrb[0].mxu0 %v1462
          %v1498 = vpop.f32.mrb[0].mxu0
          %v1499 = vadd.f32 %v1446, %v1498
          %v1500 = vpop.f32.mrb[0].mxu0
          %v1501 = vpop.f32.mrb[0].mxu0
          %v1502 = vpop.f32.mrb[0].mxu0
          %1503 = vdwg.mxu0
          %v1504 = vld [vmem:[%s613] sm:$0xff]
          %v1505 = vadd.f32 %v1499, %v1504
          %v1506 = vld [vmem:[#allocation17] sm:$0x1]
          %v1507 = vld [vmem:[#allocation18] sm:$0x1]
          %v1508 = vsel %vm1460, %v1505, 0.0
          %1509 = vadd.xlane.f32.xlu0 %v1508
          %v1510 = vpop.xlane.xlu0 %1509
          %v1511 = vrcp.pop 32.0
          %v1512 = vmul.f32 %v1510, %v1511
          %v1513 = vsub.f32 %v1505, %v1512
          %v1514 = vmul.f32 %v1513, %v1513
          %v1515 = vsel %vm1460, %v1514, 0.0
          %1516 = vadd.xlane.f32.xlu0 %v1515
          %v1517 = vpop.xlane.xlu0 %1516
          %v1518 = vmul.f32 %v1517, %v1511
          %v1519 = vadd.f32 %v1518, 1e-05
          %v1520 = vrsqrt.pop %v1519
          %v1521 = vmul.f32 %v1513, %v1520
          %v1523 = vlaneseq
          %v1524 = vshrl.u32 %v1523, 7
          %v1525 = vsub.s32 0, %v1524
          %v1526 = vrot.slane %v1506, %v1525
          %v1528 = vmul.f32 %v1521, %v1526
          %v1530 = vlaneseq
          %v1531 = vshrl.u32 %v1530, 7
          %v1532 = vsub.s32 0, %v1531
          %v1533 = vrot.slane %v1507, %v1532
          %v1535 = vadd.f32 %v1528, %v1533
          %v1536 = vpack.c.bf16 %v1535, %v1535
          %v1537 = vld [vmem:[#allocation23] sm:$0xf]
          %v1538 = vld [vmem:[#allocation23 + $0x4] sm:$0xf]
          %v1539 = vld [vmem:[#allocation23 + $0x8] sm:$0xf]
          %v1540 = vld [vmem:[#allocation23 + $0xc] sm:$0xf]
          %v1541 = vld [vmem:[#allocation24] sm:$0x1]
          %v1543 = vlaneseq
          %v1544 = vshrl.u32 %v1543, 7
          %v1545 = vsub.s32 0, %v1544
          %v1546 = vrot.slane %v1541, %v1545
          %v1552 = vunpack.c.l.b16 %v1537
          %v1553 = vunpack.c.l.b16 %v1538
          %v1554 = vunpack.c.l.b16 %v1539
          %v1555 = vunpack.c.l.b16 %v1540
          %v1556 = vpack.c.b16 %v1553, %v1552
          %v1557 = vpack.c.b16 %v1555, %v1554
          %v1561 = vsel %vm1460, %v1536, 0
          %1563 = vmatprep.subr.bf16.mxu0 0
          %1564 = vmatpush1.bf16.msra.mxu0 %v1556
          %1565 = vmatprep.subr.bf16.mxu0 0
          %1566 = vmatpush1.bf16.msra.mxu0 %v1557
          %1567 = vmatprep.subr.bf16.mxu0 0
          %1568 = vmatpush1.bf16.msra.mxu0 0
          %1569 = vmatprep.subr.bf16.mxu0 0
          %1570 = vmatpush1.bf16.msra.mxu0 0
          %1571 = vmatprep.subr.bf16.mxu0 0
          %1572 = vmatpush1.bf16.msra.mxu0 0
          %1573 = vmatprep.subr.bf16.mxu0 0
          %1574 = vmatpush1.bf16.msra.mxu0 0
          %1575 = vmatprep.subr.bf16.mxu0 0
          %1576 = vmatpush1.bf16.msra.mxu0 0
          %1577 = vmatprep.subr.bf16.mxu0 0
          %1578 = vmatpush1.bf16.msra.mxu0 0
          %1579 = vmatprep.subr.bf16.mxu0 0
          %1580 = vmatpush1.bf16.msra.mxu0 0
          %1581 = vmatprep.subr.bf16.mxu0 0
          %1582 = vmatpush1.bf16.msra.mxu0 0
          %1583 = vmatprep.subr.bf16.mxu0 0
          %1584 = vmatpush1.bf16.msra.mxu0 0
          %1585 = vmatprep.subr.bf16.mxu0 0
          %1586 = vmatpush1.bf16.msra.mxu0 0
          %1587 = vmatprep.subr.bf16.mxu0 0
          %1588 = vmatpush1.bf16.msra.mxu0 0
          %1589 = vmatprep.subr.bf16.mxu0 0
          %1590 = vmatpush1.bf16.msra.mxu0 0
          %1591 = vmatprep.subr.bf16.mxu0 0
          %1592 = vmatpush1.bf16.msra.mxu0 0
          %1593 = vmatprep.subr.bf16.mxu0 0
          %1594 = vmatpush1.bf16.msra.mxu0 0
          %1595 = vmatprep.mubr.bf16.mxu0 0
          %1596 = vmatmul.mubr.bf16.gmra.mrb[0].mxu0 %v1561
          %v1597 = vpop.f32.mrb[0].mxu0
          %v1598 = vadd.f32 %v1546, %v1597
          %v1599 = vpop.f32.mrb[0].mxu0
          %v1600 = vpop.f32.mrb[0].mxu0
          %v1601 = vpop.f32.mrb[0].mxu0
          %1602 = vdwg.mxu0
          %v1603 = vmax.f32 %v1598, 0.0
          %v1604 = vpack.c.bf16 %v1603, %v1603
          %v1605 = vld [vmem:[#allocation26] sm:$0xf]
          %v1606 = vld [vmem:[#allocation26 + $0x4] sm:$0xf]
          %v1607 = vld [vmem:[#allocation26 + $0x8] sm:$0xf]
          %v1608 = vld [vmem:[#allocation26 + $0xc] sm:$0xf]
          %v1609 = vld [vmem:[#allocation26 + $0x10] sm:$0xf]
          %v1610 = vld [vmem:[#allocation26 + $0x14] sm:$0xf]
          %v1611 = vld [vmem:[#allocation26 + $0x18] sm:$0xf]
          %v1612 = vld [vmem:[#allocation26 + $0x1c] sm:$0xf]
          %v1613 = vld [vmem:[#allocation26 + $0x20] sm:$0xf]
          %v1614 = vld [vmem:[#allocation26 + $0x24] sm:$0xf]
          %v1615 = vld [vmem:[#allocation26 + $0x28] sm:$0xf]
          %v1616 = vld [vmem:[#allocation26 + $0x2c] sm:$0xf]
          %v1617 = vld [vmem:[#allocation26 + $0x30] sm:$0xf]
          %v1618 = vld [vmem:[#allocation26 + $0x34] sm:$0xf]
          %v1619 = vld [vmem:[#allocation26 + $0x38] sm:$0xf]
          %v1620 = vld [vmem:[#allocation26 + $0x3c] sm:$0xf]
          %v1621 = vld [vmem:[#allocation27] sm:$0x1]
          %v1623 = vlaneseq
          %v1624 = vshrl.u32 %v1623, 7
          %v1625 = vsub.s32 0, %v1624
          %v1626 = vrot.slane %v1621, %v1625
          %v1644 = vunpack.c.l.b16 %v1605
          %v1645 = vunpack.c.l.b16 %v1606
          %v1646 = vunpack.c.l.b16 %v1607
          %v1647 = vunpack.c.l.b16 %v1608
          %v1648 = vunpack.c.l.b16 %v1609
          %v1649 = vunpack.c.l.b16 %v1610
          %v1650 = vunpack.c.l.b16 %v1611
          %v1651 = vunpack.c.l.b16 %v1612
          %v1652 = vunpack.c.l.b16 %v1613
          %v1653 = vunpack.c.l.b16 %v1614
          %v1654 = vunpack.c.l.b16 %v1615
          %v1655 = vunpack.c.l.b16 %v1616
          %v1656 = vunpack.c.l.b16 %v1617
          %v1657 = vunpack.c.l.b16 %v1618
          %v1658 = vunpack.c.l.b16 %v1619
          %v1659 = vunpack.c.l.b16 %v1620
          %v1660 = vpack.c.b16 %v1645, %v1644
          %v1661 = vpack.c.b16 %v1647, %v1646
          %v1662 = vpack.c.b16 %v1649, %v1648
          %v1663 = vpack.c.b16 %v1651, %v1650
          %v1664 = vpack.c.b16 %v1653, %v1652
          %v1665 = vpack.c.b16 %v1655, %v1654
          %v1666 = vpack.c.b16 %v1657, %v1656
          %v1667 = vpack.c.b16 %v1659, %v1658
          %1676 = vmatprep.subr.bf16.mxu0 0
          %1677 = vmatpush1.bf16.msra.mxu0 %v1660
          %1678 = vmatprep.subr.bf16.mxu0 0
          %1679 = vmatpush1.bf16.msra.mxu0 %v1661
          %1680 = vmatprep.subr.bf16.mxu0 0
          %1681 = vmatpush1.bf16.msra.mxu0 %v1662
          %1682 = vmatprep.subr.bf16.mxu0 0
          %1683 = vmatpush1.bf16.msra.mxu0 %v1663
          %1684 = vmatprep.subr.bf16.mxu0 0
          %1685 = vmatpush1.bf16.msra.mxu0 %v1664
          %1686 = vmatprep.subr.bf16.mxu0 0
          %1687 = vmatpush1.bf16.msra.mxu0 %v1665
          %1688 = vmatprep.subr.bf16.mxu0 0
          %1689 = vmatpush1.bf16.msra.mxu0 %v1666
          %1690 = vmatprep.subr.bf16.mxu0 0
          %1691 = vmatpush1.bf16.msra.mxu0 %v1667
          %1692 = vmatprep.subr.bf16.mxu0 0
          %1693 = vmatpush1.bf16.msra.mxu0 0
          %1694 = vmatprep.subr.bf16.mxu0 0
          %1695 = vmatpush1.bf16.msra.mxu0 0
          %1696 = vmatprep.subr.bf16.mxu0 0
          %1697 = vmatpush1.bf16.msra.mxu0 0
          %1698 = vmatprep.subr.bf16.mxu0 0
          %1699 = vmatpush1.bf16.msra.mxu0 0
          %1700 = vmatprep.subr.bf16.mxu0 0
          %1701 = vmatpush1.bf16.msra.mxu0 0
          %1702 = vmatprep.subr.bf16.mxu0 0
          %1703 = vmatpush1.bf16.msra.mxu0 0
          %1704 = vmatprep.subr.bf16.mxu0 0
          %1705 = vmatpush1.bf16.msra.mxu0 0
          %1706 = vmatprep.subr.bf16.mxu0 0
          %1707 = vmatpush1.bf16.msra.mxu0 0
          %1708 = vmatprep.mubr.bf16.mxu0 0
          %1709 = vmatmul.mubr.bf16.gmra.mrb[0].mxu0 %v1604
          %v1710 = vpop.f32.mrb[0].mxu0
          %v1711 = vadd.f32 %v1626, %v1710
          %v1712 = vpop.f32.mrb[0].mxu0
          %v1713 = vpop.f32.mrb[0].mxu0
          %v1714 = vpop.f32.mrb[0].mxu0
          %1715 = vdwg.mxu0
          %v1716 = vadd.f32 %v1711, %v1535
          %v1717 = vld [vmem:[#allocation20] sm:$0x1]
          %v1718 = vld [vmem:[#allocation21] sm:$0x1]
          %v1719 = vsel %vm1460, %v1716, 0.0
          %1720 = vadd.xlane.f32.xlu0 %v1719
          %v1721 = vpop.xlane.xlu0 %1720
          %v1722 = vmul.f32 %v1721, %v1511
          %v1723 = vsub.f32 %v1716, %v1722
          %v1724 = vmul.f32 %v1723, %v1723
          %v1725 = vsel %vm1460, %v1724, 0.0
          %1726 = vadd.xlane.f32.xlu0 %v1725
          %v1727 = vpop.xlane.xlu0 %1726
          %v1728 = vmul.f32 %v1727, %v1511
          %v1729 = vadd.f32 %v1728, 1e-05
          %v1730 = vrsqrt.pop %v1729
          %v1731 = vmul.f32 %v1723, %v1730
          %v1733 = vlaneseq
          %v1734 = vshrl.u32 %v1733, 7
          %v1735 = vsub.s32 0, %v1734
          %v1736 = vrot.slane %v1717, %v1735
          %v1738 = vmul.f32 %v1731, %v1736
          %v1740 = vlaneseq
          %v1741 = vshrl.u32 %v1740, 7
          %v1742 = vsub.s32 0, %v1741
          %v1743 = vrot.slane %v1718, %v1742
          %v1745 = vadd.f32 %v1738, %v1743
          %1746 = vst.msk [vmem:[%s729] sm:$0xff] %vm1460, %v1745
        $region144: #{tpu_custom_call.1} parent=75 // pred_fallthru
          _
        %s1747 = sand.u32 %s384, 1
        %s1748 = scalar_lea.sflag [#allocation8], %s1747
        %s1749 = sand.u32 %s384, 1
        %s1750 = smul.addr %s1749, 8
        %s1751 = scalar_lea.vmem [#allocation29], %s1750
        // Predicated region
        $region145: #{tpu_custom_call.1} parent=75 // pred_check
          %p1752 = pneg %p394
        $region146: #{tpu_custom_call.1} parent=75 // pred_check_branch
          %1754 = sbr.rel (%p1752) target = $region148
        $region147: #{tpu_custom_call.1} parent=75 // pred_region
          %s1756 = ssub.s32 128, 128
          %1757 = vsyncadd %s1748, %s1756
          %s1758 = sadd.s32 %s46, %s45
          %s1759 = smul.addr %s1758, 128
          %s1760 = scalar_lea.hbm %s14, %s1759
          %s1762 = sshll.u32 %s1751, 4
          %s1763 = int_to_ptr.vmem [resolvable:$true] %s1762
          %1765 = dma.vmem_to_hbm [thread:$0]  %s1763, 128, %s1760, %s1748
        $region148: #{tpu_custom_call.1} parent=75 // pred_fallthru
          _
      $region76: #{tpu_custom_call.1} parent=5 // pred_fallthru
        _
      %p1766 = scmp.le.s32.totalorder 2, %s35
      // Predicated region
      $region149: #{tpu_custom_call.1} parent=5 // pred_check
        %p1767 = pneg %p1766
      $region150: #{tpu_custom_call.1} parent=5 // pred_check_branch
        %1769 = sbr.rel (%p1767) target = $region152
      $region151: #{tpu_custom_call.1} parent=5 // pred_region
        %s1770 = ssub.s32 %s35, 2
        // Predicated region
        $region153: #{tpu_custom_call.1} parent=151 // pred_check
          %p1771 = pneg %p400
        $region154: #{tpu_custom_call.1} parent=151 // pred_check_branch
          %1773 = sbr.rel (%p1771) target = $region156
        $region155: #{tpu_custom_call.1} parent=151 // pred_region
          %s1774 = sand.u32 %s385, 1
          %s1775 = scalar_lea.sflag [#allocation8], %s1774
          %s1776 = sand.u32 %s385, 1
          %s1777 = smul.addr %s1776, 8
          %s1778 = scalar_lea.vmem [#allocation29], %s1777
          %1779 = dma.done %s1775, 128
        $region156: #{tpu_custom_call.1} parent=151 // pred_fallthru
          _
      $region152: #{tpu_custom_call.1} parent=5 // pred_fallthru
        _
    $region6: #{tpu_custom_call.1} parent=1 // loop_footer
      %s39 = sadd.s32 1, %s35
    $region7: #{tpu_custom_call.1} parent=1 // loop_footer_branch
      %34 = sbr.rel target = $region3
    $region8: #{tpu_custom_call.1} parent=1 // loop_exit
      _
    %1780 = vsyncpa [#allocation7], 1
    %s1781 = scalar_lea.sflag [#allocation7], 1
    %1782 = vsyncpa %s1781, 1
    %1783 = vsyncpa [#allocation10], 1
    %s1784 = scalar_lea.sflag [#allocation10], 1
    %1785 = vsyncpa %s1784, 1
    %1786 = vsyncpa [#allocation13], 1
    %1787 = vsyncpa [#allocation16], 1
    %1788 = vsyncpa [#allocation19], 1
    %1789 = vsyncpa [#allocation22], 1
    %1790 = vsyncpa [#allocation25], 1
    %1791 = vsyncpa [#allocation28], 1
    %1792 = vsyncpa [#allocation8], 1
    %s1793 = scalar_lea.sflag [#allocation8], 1
    %1794 = vsyncpa %s1793, 1

</llo_original>
